<compile_context>
chip_gen: v7x
topology: tpu7x:2x2x1
jax: 0.10.0
libtpu: 0.0.40
codegen_flags: <defaults>
</compile_context>

<pallas_src>
import jax
import jax.numpy as jnp
from jax.experimental import pallas as pl
from jax.experimental.pallas import tpu as pltpu

HIDDEN = 1024
LN_EPS = 1e-5


def _round_up(n, m):
    return ((n + m - 1) // m) * m


def _fused_ln_linear_relu_kernel(x_ref, gamma_ref, beta_ref, w_ref, b_ref, o_ref):
    # x_ref:     (TM, HIDDEN)            current row tile (input dtype)
    # gamma_ref: (1, HIDDEN)    f32      LayerNorm weight
    # beta_ref:  (1, HIDDEN)    f32      LayerNorm bias
    # w_ref:     (HIDDEN, HIDDEN) bf16   Linear weight in PyTorch (out, in) layout
    # b_ref:     (1, HIDDEN)    f32      Linear bias
    # o_ref:     (TM, HIDDEN)            output tile
    x = x_ref[...].astype(jnp.float32)

    # LayerNorm over last dim, all in f32 (biased variance, eps inside rsqrt),
    # matching torch.nn.LayerNorm.
    mean = jnp.mean(x, axis=-1, keepdims=True)
    centered = x - mean
    var = jnp.mean(centered * centered, axis=-1, keepdims=True)
    xn = centered * jax.lax.rsqrt(var + LN_EPS)
    y = xn * gamma_ref[...] + beta_ref[...]

    # Linear + ReLU on the MXU: bf16 inputs, f32 accumulation. Weight keeps its
    # native (out, in) layout; contracting dim 1 of both operands avoids any
    # transpose (in HBM or on-chip).
    z = jax.lax.dot_general(
        y.astype(jnp.bfloat16),
        w_ref[...],
        dimension_numbers=(((1,), (1,)), ((), ())),
        preferred_element_type=jnp.float32,
    ) + b_ref[...]
    o_ref[...] = jnp.maximum(z, 0.0).astype(o_ref.dtype)


def fused_ln_linear_relu(x, ln_gamma, ln_beta, lin_weight, lin_bias, *, tm=256):
    """x: (B, 1024); lin_weight: (out, in) as stored by torch.nn.Linear."""
    B, D = x.shape
    assert D == HIDDEN
    assert tm % 8 == 0

    # Row tile: as large as useful, but never larger than the (8-rounded) batch.
    tm_eff = min(tm, _round_up(B, 8))
    Bp = _round_up(B, tm_eff)
    xp = x if Bp == B else jnp.pad(x, ((0, Bp - B), (0, 0)))

    # Small params as (1, D) f32 rows; weight stored bf16 (halves its HBM->VMEM
    # DMA and doubles MXU throughput); accumulation stays f32 inside the kernel.
    gamma2 = jnp.asarray(ln_gamma, dtype=jnp.float32).reshape(1, D)
    beta2 = jnp.asarray(ln_beta, dtype=jnp.float32).reshape(1, D)
    bias2 = jnp.asarray(lin_bias, dtype=jnp.float32).reshape(1, D)
    w_bf16 = jnp.asarray(lin_weight).astype(jnp.bfloat16)  # (out, in), no transpose

    grid = (Bp // tm_eff,)
    out = pl.pallas_call(
        _fused_ln_linear_relu_kernel,
        out_shape=jax.ShapeDtypeStruct((Bp, D), x.dtype),
        grid_spec=pltpu.PrefetchScalarGridSpec(
            num_scalar_prefetch=0,
            grid=grid,
            in_specs=[
                pl.BlockSpec((tm_eff, D), lambda i: (i, 0)),   # x row tile (streamed)
                pl.BlockSpec((1, D), lambda i: (0, 0)),        # ln gamma (resident)
                pl.BlockSpec((1, D), lambda i: (0, 0)),        # ln beta  (resident)
                pl.BlockSpec((D, D), lambda i: (0, 0)),        # weight   (resident, 2 MiB bf16)
                pl.BlockSpec((1, D), lambda i: (0, 0)),        # bias     (resident)
            ],
            out_specs=pl.BlockSpec((tm_eff, D), lambda i: (i, 0)),
        ),
        compiler_params=pltpu.CompilerParams(
            # Batch axis is embarrassingly parallel -> lets v7x shard the grid
            # across its two TensorCores; no-op on v5e/v6e single-TC chips.
            dimension_semantics=("parallel",),
            # 2 MiB weight + double-buffered x/out tiles (~8 MiB at tm=512 f32)
            # << 32 MiB; leaves headroom even on v7x's 64 MiB VMEM.
            vmem_limit_bytes=32 << 20,
        ),
    )(xp, gamma2, beta2, w_bf16, bias2)
    return out[:B] if Bp != B else out


def reference_bf16_dot(x, ln_gamma, ln_beta, lin_weight, lin_bias):
    # Mirrors the kernel's numerics exactly: f32 LayerNorm, bf16 matmul inputs,
    # f32 accumulation.
    xf = x.astype(jnp.float32)
    mean = jnp.mean(xf, axis=-1, keepdims=True)
    var = jnp.mean((xf - mean) ** 2, axis=-1, keepdims=True)
    xn = (xf - mean) / jnp.sqrt(var + LN_EPS)
    y = xn * ln_gamma + ln_beta
    z = jax.lax.dot_general(
        y.astype(jnp.bfloat16),
        lin_weight.astype(jnp.bfloat16),
        dimension_numbers=(((1,), (1,)), ((), ())),
        preferred_element_type=jnp.float32,
    ) + lin_bias
    return jnp.maximum(z, 0.0).astype(x.dtype)


def _run_and_check(B, key, tm=256):
    k_x, k_g, k_b, k_w, k_bias = jax.random.split(key, 5)
    x = jax.random.normal(k_x, (B, HIDDEN), dtype=jnp.float32)

    ln_gamma = 1.0 + 0.02 * jax.random.normal(k_g, (HIDDEN,), dtype=jnp.float32)
    ln_beta = 0.02 * jax.random.normal(k_b, (HIDDEN,), dtype=jnp.float32)
    bound = 1.0 / (HIDDEN ** 0.5)
    lin_weight = jax.random.uniform(
        k_w, (HIDDEN, HIDDEN), minval=-bound, maxval=bound, dtype=jnp.float32
    )  # (out, in), torch.nn.Linear layout
    lin_bias = jax.random.uniform(
        k_bias, (HIDDEN,), minval=-bound, maxval=bound, dtype=jnp.float32
    )

    out = fused_ln_linear_relu(x, ln_gamma, ln_beta, lin_weight, lin_bias, tm=tm)
    out = jax.block_until_ready(out)
    assert out.shape == (B, HIDDEN)

    ref = reference_bf16_dot(x, ln_gamma, ln_beta, lin_weight, lin_bias)
    err = float(jnp.max(jnp.abs(out - ref)))
    assert err < 2e-3, f"B={B}: max abs err {err}"
    return err


if __name__ == "__main__":
    key = jax.random.PRNGKey(0)
    k1, k2 = jax.random.split(key)

    # Small batches (hidden=1024 is fixed by the module definition).
    _run_and_check(B=16, key=k1)   # tm_eff clamps to 16, single grid step
    _run_and_check(B=20, key=k2)   # exercises the zero-padding path (20 -> 24 rows)

    print("KERNEL_OK")
</pallas_src>

<mosaic_0001>
module attributes {stable_mosaic.version = 11 : i64} {
  func.func @_fused_ln_linear_relu_kernel(%arg0: i32, %arg1: memref<16x1024xf32, #tpu.memory_space<vmem>>, %arg2: memref<1x1024xf32, #tpu.memory_space<vmem>>, %arg3: memref<1x1024xf32, #tpu.memory_space<vmem>>, %arg4: memref<1024x1024xbf16, #tpu.memory_space<vmem>>, %arg5: memref<1x1024xf32, #tpu.memory_space<vmem>>, %arg6: memref<16x1024xf32, #tpu.memory_space<vmem>>) attributes {dimension_semantics = [#tpu.dimension_semantics<parallel>], iteration_bounds = array<i64: 1>, scalar_prefetch = 0 : i64, scratch_operands = 0 : i64, tpu.core_type = #tpu.core_type<tc>, window_params = [{transform_indices = @transform_0, window_bounds = array<i64: 16, 1024>}, {pipeline_mode = #tpu.pipeline_mode<synchronous>, transform_indices = @transform_1, window_bounds = array<i64: 1, 1024>}, {pipeline_mode = #tpu.pipeline_mode<synchronous>, transform_indices = @transform_2, window_bounds = array<i64: 1, 1024>}, {pipeline_mode = #tpu.pipeline_mode<synchronous>, transform_indices = @transform_3, window_bounds = array<i64: 1024, 1024>}, {pipeline_mode = #tpu.pipeline_mode<synchronous>, transform_indices = @transform_4, window_bounds = array<i64: 1, 1024>}, {transform_indices = @transform_5, window_bounds = array<i64: 16, 1024>}]} {
    %c0 = arith.constant 0 : index
    %c0_0 = arith.constant 0 : index
    %0 = vector.load %arg1[%c0, %c0_0] : memref<16x1024xf32, #tpu.memory_space<vmem>>, vector<16x1024xf32>
    %cst = arith.constant dense<0.000000e+00> : vector<16xf32>
    %1 = vector.multi_reduction <add>, %0, %cst [1] : vector<16x1024xf32> to vector<16xf32>
    %2 = vector.shape_cast %1 : vector<16xf32> to vector<16x1xf32>
    %cst_1 = arith.constant 1.024000e+03 : f32
    %3 = vector.broadcast %cst_1 : f32 to vector<16x1xf32>
    %4 = arith.divf %2, %3 : vector<16x1xf32>
    %5 = vector.broadcast %4 : vector<16x1xf32> to vector<16x1024xf32>
    %6 = arith.subf %0, %5 : vector<16x1024xf32>
    %7 = arith.mulf %6, %6 : vector<16x1024xf32>
    %cst_2 = arith.constant dense<0.000000e+00> : vector<16xf32>
    %8 = vector.multi_reduction <add>, %7, %cst_2 [1] : vector<16x1024xf32> to vector<16xf32>
    %9 = vector.shape_cast %8 : vector<16xf32> to vector<16x1xf32>
    %cst_3 = arith.constant 1.024000e+03 : f32
    %10 = vector.broadcast %cst_3 : f32 to vector<16x1xf32>
    %11 = arith.divf %9, %10 : vector<16x1xf32>
    %cst_4 = arith.constant 9.99999974E-6 : f32
    %12 = vector.broadcast %cst_4 : f32 to vector<16x1xf32>
    %13 = arith.addf %11, %12 : vector<16x1xf32>
    %14 = math.rsqrt %13 : vector<16x1xf32>
    %15 = vector.broadcast %14 : vector<16x1xf32> to vector<16x1024xf32>
    %16 = arith.mulf %6, %15 : vector<16x1024xf32>
    %c0_5 = arith.constant 0 : index
    %c0_6 = arith.constant 0 : index
    %17 = vector.load %arg2[%c0_5, %c0_6] : memref<1x1024xf32, #tpu.memory_space<vmem>>, vector<1x1024xf32>
    %18 = vector.broadcast %17 : vector<1x1024xf32> to vector<16x1024xf32>
    %19 = arith.mulf %16, %18 : vector<16x1024xf32>
    %c0_7 = arith.constant 0 : index
    %c0_8 = arith.constant 0 : index
    %20 = vector.load %arg3[%c0_7, %c0_8] : memref<1x1024xf32, #tpu.memory_space<vmem>>, vector<1x1024xf32>
    %21 = vector.broadcast %20 : vector<1x1024xf32> to vector<16x1024xf32>
    %22 = arith.addf %19, %21 : vector<16x1024xf32>
    %23 = arith.truncf %22 : vector<16x1024xf32> to vector<16x1024xbf16>
    %c0_9 = arith.constant 0 : index
    %c0_10 = arith.constant 0 : index
    %24 = vector.load %arg4[%c0_9, %c0_10] : memref<1024x1024xbf16, #tpu.memory_space<vmem>>, vector<1024x1024xbf16>
    %cst_11 = arith.constant dense<0.000000e+00> : vector<16x1024xf32>
    %25 = tpu.matmul %23, %24, %cst_11 {dimension_numbers = #tpu.dot_dimension_numbers<[1], [1], [0], [0], [0, 0, 1, 0], [], []>} : vector<16x1024xbf16>, vector<1024x1024xbf16>, vector<16x1024xf32> -> vector<16x1024xf32>
    %c0_12 = arith.constant 0 : index
    %c0_13 = arith.constant 0 : index
    %26 = vector.load %arg5[%c0_12, %c0_13] : memref<1x1024xf32, #tpu.memory_space<vmem>>, vector<1x1024xf32>
    %27 = vector.broadcast %26 : vector<1x1024xf32> to vector<16x1024xf32>
    %28 = arith.addf %25, %27 : vector<16x1024xf32>
    %cst_14 = arith.constant 0.000000e+00 : f32
    %29 = vector.broadcast %cst_14 : f32 to vector<16x1024xf32>
    %30 = arith.maximumf %28, %29 : vector<16x1024xf32>
    %c0_15 = arith.constant 0 : index
    %c0_16 = arith.constant 0 : index
    %31 = vector.load %arg6[%c0_15, %c0_16] : memref<16x1024xf32, #tpu.memory_space<vmem>>, vector<16x1024xf32>
    tpu.vector_store %arg6[%c0_15, %c0_16], %30 {strides = array<i32>} : memref<16x1024xf32, #tpu.memory_space<vmem>>, vector<16x1024xf32>,
    return
  }
  func.func @transform_0(%arg0: i32) -> (i32, i32) {
    %c0_i32 = arith.constant 0 : i32
    %c0_i32_0 = arith.constant 0 : i32
    return %arg0, %c0_i32 : i32, i32
  }
  func.func @transform_1(%arg0: i32) -> (i32, i32) {
    %c0_i32 = arith.constant 0 : i32
    %c0_i32_0 = arith.constant 0 : i32
    %c0_i32_1 = arith.constant 0 : i32
    return %c0_i32, %c0_i32_0 : i32, i32
  }
  func.func @transform_2(%arg0: i32) -> (i32, i32) {
    %c0_i32 = arith.constant 0 : i32
    %c0_i32_0 = arith.constant 0 : i32
    %c0_i32_1 = arith.constant 0 : i32
    return %c0_i32, %c0_i32_0 : i32, i32
  }
  func.func @transform_3(%arg0: i32) -> (i32, i32) {
    %c0_i32 = arith.constant 0 : i32
    %c0_i32_0 = arith.constant 0 : i32
    %c0_i32_1 = arith.constant 0 : i32
    return %c0_i32, %c0_i32_0 : i32, i32
  }
  func.func @transform_4(%arg0: i32) -> (i32, i32) {
    %c0_i32 = arith.constant 0 : i32
    %c0_i32_0 = arith.constant 0 : i32
    %c0_i32_1 = arith.constant 0 : i32
    return %c0_i32, %c0_i32_0 : i32, i32
  }
  func.func @transform_5(%arg0: i32) -> (i32, i32) {
    %c0_i32 = arith.constant 0 : i32
    %c0_i32_0 = arith.constant 0 : i32
    return %arg0, %c0_i32 : i32, i32
  }
}

</mosaic_0001>

<llo_original>
// kernel: tpu_custom_call.1
$region0: #{tpu_custom_call.1}
  #allocation0 [shape = 'u32[]', space=smem, size = 0x4, offset = 0x4, fixed_abs, tag = 'smem constant byte address 0x4 - core index']
  #allocation1 [shape = 'u32[144,128]{1,0:T(1,128)}', space=vmem, size = 0x12000, scoped, tag = 'internal scratch']
  %s0 = inlined_call_operand.hbm [shape: f32[16,1024], index: 0, kind: input, shape index: {}]
  %s1 = inlined_call_operand.hbm [shape: f32[1,1024], index: 1, kind: input, shape index: {}]
  %s2 = inlined_call_operand.hbm [shape: f32[1,1024], index: 2, kind: input, shape index: {}]
  %s3 = inlined_call_operand.hbm [shape: bf16[1024,1024], index: 3, kind: input, shape index: {}]
  %s4 = inlined_call_operand.hbm [shape: f32[1,1024], index: 4, kind: input, shape index: {}]
  %s5 = inlined_call_operand.hbm [shape: f32[16,1024], index: 5, kind: output, shape index: {}]
  %s6 = sld [smem:[#allocation0]]
  $region50: #{tpu_custom_call.1} parent=0
    _
  %s8 = ssub.s32 1, %s6
  %s9 = scalar_select 0, %s8, %s6
  $region1: #{tpu_custom_call.1} parent=0
    #allocation2 [shape = 'u8[65536]{0}', space=vmem, size = 0x10000, scoped, tag = 'input window, operand 0, single buffered']
    #allocation3 [shape = 's32[1]{0}', space=sflag, size = 0x4, scoped, tag = 'scoped memory for tpu_custom_call.1']
    #allocation4 [shape = 's32[1]{0}', space=sflag, size = 0x4, scoped, tag = 'scoped memory for tpu_custom_call.1']
    #allocation5 [shape = 'u8[4096]{0}', space=vmem, size = 0x1000, scoped, tag = 'input window, operand 1, single buffered']
    #allocation6 [shape = 's32[1]{0}', space=sflag, size = 0x4, scoped, tag = 'scoped memory for tpu_custom_call.1']
    #allocation7 [shape = 'u8[4096]{0}', space=vmem, size = 0x1000, scoped, tag = 'input window, operand 2, single buffered']
    #allocation8 [shape = 'u8[2097152]{0}', space=vmem, size = 0x200000, scoped, tag = 'input window, operand 3, single buffered']
    #allocation9 [shape = 's32[1]{0}', space=sflag, size = 0x4, scoped, tag = 'scoped memory for tpu_custom_call.1']
    #allocation10 [shape = 'u8[4096]{0}', space=vmem, size = 0x1000, scoped, tag = 'input window, operand 4, single buffered']
    #allocation11 [shape = 'u8[65536]{0}', space=vmem, size = 0x10000, scoped, tag = 'output window, operand 0, single buffered']
    %10 = vsyncpa [#allocation3], 0
    %11 = vsyncpa [#allocation6], 0
    %12 = vsyncpa [#allocation9], 0
    %13 = vsyncpa [#allocation4], 0
    // Predicated region
    $region2: #{tpu_custom_call.1} parent=1 // pred_check
      _
    $region3: #{tpu_custom_call.1} parent=1 // pred_check_branch
      %15 = sbr.rel (0) target = $region5
    $region4: #{tpu_custom_call.1} parent=1 // pred_region
      %s17 = ssub.s32 2048, 2048
      %18 = vsyncadd [#allocation3], %s17
      %s19 = sshll.u32 [#allocation2], 4
      %s20 = int_to_ptr.vmem [resolvable:$true] %s19
      %25 = dma.hbm_to_vmem [thread:$0]  %s0, 2048, %s20, [#allocation3], 1024, 1024, 64
    $region5: #{tpu_custom_call.1} parent=1 // pred_fallthru
      _
    // Predicated region
    $region6: #{tpu_custom_call.1} parent=1 // pred_check
      _
    $region7: #{tpu_custom_call.1} parent=1 // pred_check_branch
      %27 = sbr.rel (0) target = $region9
    $region8: #{tpu_custom_call.1} parent=1 // pred_region
      %s29 = ssub.s32 128, 128
      %30 = vsyncadd [#allocation6], %s29
      %s32 = sshll.u32 [#allocation5], 4
      %s33 = int_to_ptr.vmem [resolvable:$true] %s32
      %35 = dma.hbm_to_vmem [thread:$0]  %s1, 128, %s33, [#allocation6]
    $region9: #{tpu_custom_call.1} parent=1 // pred_fallthru
      _
    // Predicated region
    $region10: #{tpu_custom_call.1} parent=1 // pred_check
      _
    $region11: #{tpu_custom_call.1} parent=1 // pred_check_branch
      %37 = sbr.rel (0) target = $region13
    $region12: #{tpu_custom_call.1} parent=1 // pred_region
      %s39 = ssub.s32 128, 128
      %40 = vsyncadd [#allocation6], %s39
      %s42 = sshll.u32 [#allocation7], 4
      %s43 = int_to_ptr.vmem [resolvable:$true] %s42
      %45 = dma.hbm_to_vmem [thread:$0]  %s2, 128, %s43, [#allocation6]
    $region13: #{tpu_custom_call.1} parent=1 // pred_fallthru
      _
    // Predicated region
    $region14: #{tpu_custom_call.1} parent=1 // pred_check
      _
    $region15: #{tpu_custom_call.1} parent=1 // pred_check_branch
      %47 = sbr.rel (0) target = $region17
    $region16: #{tpu_custom_call.1} parent=1 // pred_region
      %s49 = ssub.s32 65536, 65536
      %50 = vsyncadd [#allocation9], %s49
      %s51 = sshll.u32 [#allocation8], 4
      %s52 = int_to_ptr.vmem [resolvable:$true] %s51
      %57 = dma.hbm_to_vmem [thread:$0]  %s3, 65536, %s52, [#allocation9], 512, 512, 32
    $region17: #{tpu_custom_call.1} parent=1 // pred_fallthru
      _
    // Predicated region
    $region18: #{tpu_custom_call.1} parent=1 // pred_check
      _
    $region19: #{tpu_custom_call.1} parent=1 // pred_check_branch
      %59 = sbr.rel (0) target = $region21
    $region20: #{tpu_custom_call.1} parent=1 // pred_region
      %s61 = ssub.s32 128, 128
      %62 = vsyncadd [#allocation9], %s61
      %s64 = sshll.u32 [#allocation10], 4
      %s65 = int_to_ptr.vmem [resolvable:$true] %s64
      %67 = dma.hbm_to_vmem [thread:$0]  %s4, 128, %s65, [#allocation9]
    $region21: #{tpu_custom_call.1} parent=1 // pred_fallthru
      _
    // Predicated region
    $region22: #{tpu_custom_call.1} parent=1 // pred_check
      _
    $region23: #{tpu_custom_call.1} parent=1 // pred_check_branch
      %69 = sbr.rel (0) target = $region25
    $region24: #{tpu_custom_call.1} parent=1 // pred_region
      %70 = dma.done [#allocation3], 2048
    $region25: #{tpu_custom_call.1} parent=1 // pred_fallthru
      _
    // Predicated region
    $region26: #{tpu_custom_call.1} parent=1 // pred_check
      _
    $region27: #{tpu_custom_call.1} parent=1 // pred_check_branch
      %72 = sbr.rel (0) target = $region29
    $region28: #{tpu_custom_call.1} parent=1 // pred_region
      %73 = dma.done [#allocation6], 128
    $region29: #{tpu_custom_call.1} parent=1 // pred_fallthru
      _
    // Predicated region
    $region30: #{tpu_custom_call.1} parent=1 // pred_check
      _
    $region31: #{tpu_custom_call.1} parent=1 // pred_check_branch
      %75 = sbr.rel (0) target = $region33
    $region32: #{tpu_custom_call.1} parent=1 // pred_region
      %76 = dma.done [#allocation6], 128
    $region33: #{tpu_custom_call.1} parent=1 // pred_fallthru
      _
    // Predicated region
    $region34: #{tpu_custom_call.1} parent=1 // pred_check
      _
    $region35: #{tpu_custom_call.1} parent=1 // pred_check_branch
      %78 = sbr.rel (0) target = $region37
    $region36: #{tpu_custom_call.1} parent=1 // pred_region
      %79 = dma.done [#allocation9], 65536
    $region37: #{tpu_custom_call.1} parent=1 // pred_fallthru
      _
    // Predicated region
    $region38: #{tpu_custom_call.1} parent=1 // pred_check
      _
    $region39: #{tpu_custom_call.1} parent=1 // pred_check_branch
      %81 = sbr.rel (0) target = $region41
    $region40: #{tpu_custom_call.1} parent=1 // pred_region
      %82 = dma.done [#allocation9], 128
    $region41: #{tpu_custom_call.1} parent=1 // pred_fallthru
      _
    %v83 = vld [vmem:[#allocation2] sm:$0xff]
    %v84 = vld [vmem:[#allocation2 + $0x8] sm:$0xff]
    %v85 = vld [vmem:[#allocation2 + $0x10] sm:$0xff]
    %v86 = vld [vmem:[#allocation2 + $0x18] sm:$0xff]
    %v87 = vld [vmem:[#allocation2 + $0x20] sm:$0xff]
    %v88 = vld [vmem:[#allocation2 + $0x28] sm:$0xff]
    %v89 = vld [vmem:[#allocation2 + $0x30] sm:$0xff]
    %v90 = vld [vmem:[#allocation2 + $0x38] sm:$0xff]
    %v91 = vld [vmem:[#allocation2 + $0x40] sm:$0xff]
    %v92 = vld [vmem:[#allocation2 + $0x48] sm:$0xff]
    %v93 = vld [vmem:[#allocation2 + $0x50] sm:$0xff]
    %v94 = vld [vmem:[#allocation2 + $0x58] sm:$0xff]
    %v95 = vld [vmem:[#allocation2 + $0x60] sm:$0xff]
    %v96 = vld [vmem:[#allocation2 + $0x68] sm:$0xff]
    %v97 = vld [vmem:[#allocation2 + $0x70] sm:$0xff]
    %v98 = vld [vmem:[#allocation2 + $0x78] sm:$0xff]
    %v99 = vadd.f32 %v83, %v84
    %v100 = vadd.f32 %v99, %v85
    %v101 = vadd.f32 %v100, %v86
    %v102 = vadd.f32 %v101, %v87
    %v103 = vadd.f32 %v102, %v88
    %v104 = vadd.f32 %v103, %v89
    %v105 = vadd.f32 %v104, %v90
    %106 = vadd.xlane.f32.xlu0 %v105
    %v107 = vpop.xlane.xlu0 %106
    %v108 = vadd.f32 %v91, %v92
    %v109 = vadd.f32 %v108, %v93
    %v110 = vadd.f32 %v109, %v94
    %v111 = vadd.f32 %v110, %v95
    %v112 = vadd.f32 %v111, %v96
    %v113 = vadd.f32 %v112, %v97
    %v114 = vadd.f32 %v113, %v98
    %115 = vadd.xlane.f32.xlu0 %v114
    %v116 = vpop.xlane.xlu0 %115
    %v117 = vrcp.pop 1024.0
    %v118 = vmul.f32 %v107, %v117
    %v119 = vmul.f32 %v116, %v117
    %v120 = vsub.f32 %v83, %v118
    %v121 = vsub.f32 %v84, %v118
    %v122 = vsub.f32 %v85, %v118
    %v123 = vsub.f32 %v86, %v118
    %v124 = vsub.f32 %v87, %v118
    %v125 = vsub.f32 %v88, %v118
    %v126 = vsub.f32 %v89, %v118
    %v127 = vsub.f32 %v90, %v118
    %v128 = vsub.f32 %v91, %v119
    %v129 = vsub.f32 %v92, %v119
    %v130 = vsub.f32 %v93, %v119
    %v131 = vsub.f32 %v94, %v119
    %v132 = vsub.f32 %v95, %v119
    %v133 = vsub.f32 %v96, %v119
    %v134 = vsub.f32 %v97, %v119
    %v135 = vsub.f32 %v98, %v119
    %v136 = vmul.f32 %v120, %v120
    %v137 = vmul.f32 %v121, %v121
    %v138 = vmul.f32 %v122, %v122
    %v139 = vmul.f32 %v123, %v123
    %v140 = vmul.f32 %v124, %v124
    %v141 = vmul.f32 %v125, %v125
    %v142 = vmul.f32 %v126, %v126
    %v143 = vmul.f32 %v127, %v127
    %v144 = vmul.f32 %v128, %v128
    %v145 = vmul.f32 %v129, %v129
    %v146 = vmul.f32 %v130, %v130
    %v147 = vmul.f32 %v131, %v131
    %v148 = vmul.f32 %v132, %v132
    %v149 = vmul.f32 %v133, %v133
    %v150 = vmul.f32 %v134, %v134
    %v151 = vmul.f32 %v135, %v135
    %v152 = vadd.f32 %v136, %v137
    %v153 = vadd.f32 %v152, %v138
    %v154 = vadd.f32 %v153, %v139
    %v155 = vadd.f32 %v154, %v140
    %v156 = vadd.f32 %v155, %v141
    %v157 = vadd.f32 %v156, %v142
    %v158 = vadd.f32 %v157, %v143
    %159 = vadd.xlane.f32.xlu0 %v158
    %v160 = vpop.xlane.xlu0 %159
    %v161 = vadd.f32 %v144, %v145
    %v162 = vadd.f32 %v161, %v146
    %v163 = vadd.f32 %v162, %v147
    %v164 = vadd.f32 %v163, %v148
    %v165 = vadd.f32 %v164, %v149
    %v166 = vadd.f32 %v165, %v150
    %v167 = vadd.f32 %v166, %v151
    %168 = vadd.xlane.f32.xlu0 %v167
    %v169 = vpop.xlane.xlu0 %168
    %v170 = vmul.f32 %v160, %v117
    %v171 = vmul.f32 %v169, %v117
    %v172 = vadd.f32 %v170, 1e-05
    %v173 = vadd.f32 %v171, 1e-05
    %v174 = vrsqrt.pop %v172
    %v175 = vrsqrt.pop %v173
    %v176 = vmul.f32 %v120, %v174
    %v177 = vmul.f32 %v121, %v174
    %v178 = vmul.f32 %v122, %v174
    %v179 = vmul.f32 %v123, %v174
    %v180 = vmul.f32 %v124, %v174
    %v181 = vmul.f32 %v125, %v174
    %v182 = vmul.f32 %v126, %v174
    %v183 = vmul.f32 %v127, %v174
    %v184 = vmul.f32 %v128, %v175
    %v185 = vmul.f32 %v129, %v175
    %v186 = vmul.f32 %v130, %v175
    %v187 = vmul.f32 %v131, %v175
    %v188 = vmul.f32 %v132, %v175
    %v189 = vmul.f32 %v133, %v175
    %v190 = vmul.f32 %v134, %v175
    %v191 = vmul.f32 %v135, %v175
    %v192 = vld [vmem:[#allocation5] sm:$0xff]
    %v194 = vlaneseq
    %v195 = vshrl.u32 %v194, 7
    %v196 = vsub.s32 0, %v195
    %v197 = vrot.slane %v192, %v196
    %v198 = vlaneseq
    %v199 = vshrl.u32 %v198, 7
    %v200 = vsub.s32 1, %v199
    %v201 = vrot.slane %v192, %v200
    %v202 = vlaneseq
    %v203 = vshrl.u32 %v202, 7
    %v204 = vsub.s32 2, %v203
    %v205 = vrot.slane %v192, %v204
    %v206 = vlaneseq
    %v207 = vshrl.u32 %v206, 7
    %v208 = vsub.s32 3, %v207
    %v209 = vrot.slane %v192, %v208
    %v210 = vlaneseq
    %v211 = vshrl.u32 %v210, 7
    %v212 = vsub.s32 4, %v211
    %v213 = vrot.slane %v192, %v212
    %v214 = vlaneseq
    %v215 = vshrl.u32 %v214, 7
    %v216 = vsub.s32 5, %v215
    %v217 = vrot.slane %v192, %v216
    %v218 = vlaneseq
    %v219 = vshrl.u32 %v218, 7
    %v220 = vsub.s32 6, %v219
    %v221 = vrot.slane %v192, %v220
    %v222 = vlaneseq
    %v223 = vshrl.u32 %v222, 7
    %v224 = vsub.s32 7, %v223
    %v225 = vrot.slane %v192, %v224
    %v234 = vmul.f32 %v176, %v197
    %v235 = vmul.f32 %v177, %v201
    %v236 = vmul.f32 %v178, %v205
    %v237 = vmul.f32 %v179, %v209
    %v238 = vmul.f32 %v180, %v213
    %v239 = vmul.f32 %v181, %v217
    %v240 = vmul.f32 %v182, %v221
    %v241 = vmul.f32 %v183, %v225
    %v242 = vmul.f32 %v184, %v197
    %v243 = vmul.f32 %v185, %v201
    %v244 = vmul.f32 %v186, %v205
    %v245 = vmul.f32 %v187, %v209
    %v246 = vmul.f32 %v188, %v213
    %v247 = vmul.f32 %v189, %v217
    %v248 = vmul.f32 %v190, %v221
    %v249 = vmul.f32 %v191, %v225
    %v250 = vld [vmem:[#allocation7] sm:$0xff]
    %v252 = vlaneseq
    %v253 = vshrl.u32 %v252, 7
    %v254 = vsub.s32 0, %v253
    %v255 = vrot.slane %v250, %v254
    %v256 = vlaneseq
    %v257 = vshrl.u32 %v256, 7
    %v258 = vsub.s32 1, %v257
    %v259 = vrot.slane %v250, %v258
    %v260 = vlaneseq
    %v261 = vshrl.u32 %v260, 7
    %v262 = vsub.s32 2, %v261
    %v263 = vrot.slane %v250, %v262
    %v264 = vlaneseq
    %v265 = vshrl.u32 %v264, 7
    %v266 = vsub.s32 3, %v265
    %v267 = vrot.slane %v250, %v266
    %v268 = vlaneseq
    %v269 = vshrl.u32 %v268, 7
    %v270 = vsub.s32 4, %v269
    %v271 = vrot.slane %v250, %v270
    %v272 = vlaneseq
    %v273 = vshrl.u32 %v272, 7
    %v274 = vsub.s32 5, %v273
    %v275 = vrot.slane %v250, %v274
    %v276 = vlaneseq
    %v277 = vshrl.u32 %v276, 7
    %v278 = vsub.s32 6, %v277
    %v279 = vrot.slane %v250, %v278
    %v280 = vlaneseq
    %v281 = vshrl.u32 %v280, 7
    %v282 = vsub.s32 7, %v281
    %v283 = vrot.slane %v250, %v282
    %v292 = vadd.f32 %v234, %v255
    %v293 = vadd.f32 %v235, %v259
    %v294 = vadd.f32 %v236, %v263
    %v295 = vadd.f32 %v237, %v267
    %v296 = vadd.f32 %v238, %v271
    %v297 = vadd.f32 %v239, %v275
    %v298 = vadd.f32 %v240, %v279
    %v299 = vadd.f32 %v241, %v283
    %v300 = vadd.f32 %v242, %v255
    %v301 = vadd.f32 %v243, %v259
    %v302 = vadd.f32 %v244, %v263
    %v303 = vadd.f32 %v245, %v267
    %v304 = vadd.f32 %v246, %v271
    %v305 = vadd.f32 %v247, %v275
    %v306 = vadd.f32 %v248, %v279
    %v307 = vadd.f32 %v249, %v283
    %v308 = vpack.c.bf16 %v300, %v292
    %v309 = vpack.c.bf16 %v301, %v293
    %v310 = vpack.c.bf16 %v302, %v294
    %v311 = vpack.c.bf16 %v303, %v295
    %v312 = vpack.c.bf16 %v304, %v296
    %v313 = vpack.c.bf16 %v305, %v297
    %v314 = vpack.c.bf16 %v306, %v298
    %v315 = vpack.c.bf16 %v307, %v299
    %v316 = vld [vmem:[#allocation8] sm:$0xff]
    %v317 = vld [vmem:[#allocation8 + $0x8] sm:$0xff]
    %v318 = vld [vmem:[#allocation8 + $0x10] sm:$0xff]
    %v319 = vld [vmem:[#allocation8 + $0x18] sm:$0xff]
    %v320 = vld [vmem:[#allocation8 + $0x20] sm:$0xff]
    %v321 = vld [vmem:[#allocation8 + $0x28] sm:$0xff]
    %v322 = vld [vmem:[#allocation8 + $0x30] sm:$0xff]
    %v323 = vld [vmem:[#allocation8 + $0x38] sm:$0xff]
    %v324 = vld [vmem:[#allocation8 + $0x40] sm:$0xff]
    %v325 = vld [vmem:[#allocation8 + $0x48] sm:$0xff]
    %v326 = vld [vmem:[#allocation8 + $0x50] sm:$0xff]
    %v327 = vld [vmem:[#allocation8 + $0x58] sm:$0xff]
    %v328 = vld [vmem:[#allocation8 + $0x60] sm:$0xff]
    %v329 = vld [vmem:[#allocation8 + $0x68] sm:$0xff]
    %v330 = vld [vmem:[#allocation8 + $0x70] sm:$0xff]
    %v331 = vld [vmem:[#allocation8 + $0x78] sm:$0xff]
    %v332 = vld [vmem:[#allocation8 + $0x80] sm:$0xff]
    %v333 = vld [vmem:[#allocation8 + $0x88] sm:$0xff]
    %v334 = vld [vmem:[#allocation8 + $0x90] sm:$0xff]
    %v335 = vld [vmem:[#allocation8 + $0x98] sm:$0xff]
    %v336 = vld [vmem:[#allocation8 + $0xa0] sm:$0xff]
    %v337 = vld [vmem:[#allocation8 + $0xa8] sm:$0xff]
    %v338 = vld [vmem:[#allocation8 + $0xb0] sm:$0xff]
    %v339 = vld [vmem:[#allocation8 + $0xb8] sm:$0xff]
    %v340 = vld [vmem:[#allocation8 + $0xc0] sm:$0xff]
    %v341 = vld [vmem:[#allocation8 + $0xc8] sm:$0xff]
    %v342 = vld [vmem:[#allocation8 + $0xd0] sm:$0xff]
    %v343 = vld [vmem:[#allocation8 + $0xd8] sm:$0xff]
    %v344 = vld [vmem:[#allocation8 + $0xe0] sm:$0xff]
    %v345 = vld [vmem:[#allocation8 + $0xe8] sm:$0xff]
    %v346 = vld [vmem:[#allocation8 + $0xf0] sm:$0xff]
    %v347 = vld [vmem:[#allocation8 + $0xf8] sm:$0xff]
    %v348 = vld [vmem:[#allocation8 + $0x100] sm:$0xff]
    %v349 = vld [vmem:[#allocation8 + $0x108] sm:$0xff]
    %v350 = vld [vmem:[#allocation8 + $0x110] sm:$0xff]
    %v351 = vld [vmem:[#allocation8 + $0x118] sm:$0xff]
    %v352 = vld [vmem:[#allocation8 + $0x120] sm:$0xff]
    %v353 = vld [vmem:[#allocation8 + $0x128] sm:$0xff]
    %v354 = vld [vmem:[#allocation8 + $0x130] sm:$0xff]
    %v355 = vld [vmem:[#allocation8 + $0x138] sm:$0xff]
    %v356 = vld [vmem:[#allocation8 + $0x140] sm:$0xff]
    %v357 = vld [vmem:[#allocation8 + $0x148] sm:$0xff]
    %v358 = vld [vmem:[#allocation8 + $0x150] sm:$0xff]
    %v359 = vld [vmem:[#allocation8 + $0x158] sm:$0xff]
    %v360 = vld [vmem:[#allocation8 + $0x160] sm:$0xff]
    %v361 = vld [vmem:[#allocation8 + $0x168] sm:$0xff]
    %v362 = vld [vmem:[#allocation8 + $0x170] sm:$0xff]
    %v363 = vld [vmem:[#allocation8 + $0x178] sm:$0xff]
    %v364 = vld [vmem:[#allocation8 + $0x180] sm:$0xff]
    %v365 = vld [vmem:[#allocation8 + $0x188] sm:$0xff]
    %v366 = vld [vmem:[#allocation8 + $0x190] sm:$0xff]
    %v367 = vld [vmem:[#allocation8 + $0x198] sm:$0xff]
    %v368 = vld [vmem:[#allocation8 + $0x1a0] sm:$0xff]
    %v369 = vld [vmem:[#allocation8 + $0x1a8] sm:$0xff]
    %v370 = vld [vmem:[#allocation8 + $0x1b0] sm:$0xff]
    %v371 = vld [vmem:[#allocation8 + $0x1b8] sm:$0xff]
    %v372 = vld [vmem:[#allocation8 + $0x1c0] sm:$0xff]
    %v373 = vld [vmem:[#allocation8 + $0x1c8] sm:$0xff]
    %v374 = vld [vmem:[#allocation8 + $0x1d0] sm:$0xff]
    %v375 = vld [vmem:[#allocation8 + $0x1d8] sm:$0xff]
    %v376 = vld [vmem:[#allocation8 + $0x1e0] sm:$0xff]
    %v377 = vld [vmem:[#allocation8 + $0x1e8] sm:$0xff]
    %v378 = vld [vmem:[#allocation8 + $0x1f0] sm:$0xff]
    %v379 = vld [vmem:[#allocation8 + $0x1f8] sm:$0xff]
    %v380 = vld [vmem:[#allocation8 + $0x200] sm:$0xff]
    %v381 = vld [vmem:[#allocation8 + $0x208] sm:$0xff]
    %v382 = vld [vmem:[#allocation8 + $0x210] sm:$0xff]
    %v383 = vld [vmem:[#allocation8 + $0x218] sm:$0xff]
    %v384 = vld [vmem:[#allocation8 + $0x220] sm:$0xff]
    %v385 = vld [vmem:[#allocation8 + $0x228] sm:$0xff]
    %v386 = vld [vmem:[#allocation8 + $0x230] sm:$0xff]
    %v387 = vld [vmem:[#allocation8 + $0x238] sm:$0xff]
    %v388 = vld [vmem:[#allocation8 + $0x240] sm:$0xff]
    %v389 = vld [vmem:[#allocation8 + $0x248] sm:$0xff]
    %v390 = vld [vmem:[#allocation8 + $0x250] sm:$0xff]
    %v391 = vld [vmem:[#allocation8 + $0x258] sm:$0xff]
    %v392 = vld [vmem:[#allocation8 + $0x260] sm:$0xff]
    %v393 = vld [vmem:[#allocation8 + $0x268] sm:$0xff]
    %v394 = vld [vmem:[#allocation8 + $0x270] sm:$0xff]
    %v395 = vld [vmem:[#allocation8 + $0x278] sm:$0xff]
    %v396 = vld [vmem:[#allocation8 + $0x280] sm:$0xff]
    %v397 = vld [vmem:[#allocation8 + $0x288] sm:$0xff]
    %v398 = vld [vmem:[#allocation8 + $0x290] sm:$0xff]
    %v399 = vld [vmem:[#allocation8 + $0x298] sm:$0xff]
    %v400 = vld [vmem:[#allocation8 + $0x2a0] sm:$0xff]
    %v401 = vld [vmem:[#allocation8 + $0x2a8] sm:$0xff]
    %v402 = vld [vmem:[#allocation8 + $0x2b0] sm:$0xff]
    %v403 = vld [vmem:[#allocation8 + $0x2b8] sm:$0xff]
    %v404 = vld [vmem:[#allocation8 + $0x2c0] sm:$0xff]
    %v405 = vld [vmem:[#allocation8 + $0x2c8] sm:$0xff]
    %v406 = vld [vmem:[#allocation8 + $0x2d0] sm:$0xff]
    %v407 = vld [vmem:[#allocation8 + $0x2d8] sm:$0xff]
    %v408 = vld [vmem:[#allocation8 + $0x2e0] sm:$0xff]
    %v409 = vld [vmem:[#allocation8 + $0x2e8] sm:$0xff]
    %v410 = vld [vmem:[#allocation8 + $0x2f0] sm:$0xff]
    %v411 = vld [vmem:[#allocation8 + $0x2f8] sm:$0xff]
    %v412 = vld [vmem:[#allocation8 + $0x300] sm:$0xff]
    %v413 = vld [vmem:[#allocation8 + $0x308] sm:$0xff]
    %v414 = vld [vmem:[#allocation8 + $0x310] sm:$0xff]
    %v415 = vld [vmem:[#allocation8 + $0x318] sm:$0xff]
    %v416 = vld [vmem:[#allocation8 + $0x320] sm:$0xff]
    %v417 = vld [vmem:[#allocation8 + $0x328] sm:$0xff]
    %v418 = vld [vmem:[#allocation8 + $0x330] sm:$0xff]
    %v419 = vld [vmem:[#allocation8 + $0x338] sm:$0xff]
    %v420 = vld [vmem:[#allocation8 + $0x340] sm:$0xff]
    %v421 = vld [vmem:[#allocation8 + $0x348] sm:$0xff]
    %v422 = vld [vmem:[#allocation8 + $0x350] sm:$0xff]
    %v423 = vld [vmem:[#allocation8 + $0x358] sm:$0xff]
    %v424 = vld [vmem:[#allocation8 + $0x360] sm:$0xff]
    %v425 = vld [vmem:[#allocation8 + $0x368] sm:$0xff]
    %v426 = vld [vmem:[#allocation8 + $0x370] sm:$0xff]
    %v427 = vld [vmem:[#allocation8 + $0x378] sm:$0xff]
    %v428 = vld [vmem:[#allocation8 + $0x380] sm:$0xff]
    %v429 = vld [vmem:[#allocation8 + $0x388] sm:$0xff]
    %v430 = vld [vmem:[#allocation8 + $0x390] sm:$0xff]
    %v431 = vld [vmem:[#allocation8 + $0x398] sm:$0xff]
    %v432 = vld [vmem:[#allocation8 + $0x3a0] sm:$0xff]
    %v433 = vld [vmem:[#allocation8 + $0x3a8] sm:$0xff]
    %v434 = vld [vmem:[#allocation8 + $0x3b0] sm:$0xff]
    %v435 = vld [vmem:[#allocation8 + $0x3b8] sm:$0xff]
    %v436 = vld [vmem:[#allocation8 + $0x3c0] sm:$0xff]
    %v437 = vld [vmem:[#allocation8 + $0x3c8] sm:$0xff]
    %v438 = vld [vmem:[#allocation8 + $0x3d0] sm:$0xff]
    %v439 = vld [vmem:[#allocation8 + $0x3d8] sm:$0xff]
    %v440 = vld [vmem:[#allocation8 + $0x3e0] sm:$0xff]
    %v441 = vld [vmem:[#allocation8 + $0x3e8] sm:$0xff]
    %v442 = vld [vmem:[#allocation8 + $0x3f0] sm:$0xff]
    %v443 = vld [vmem:[#allocation8 + $0x3f8] sm:$0xff]
    %v444 = vld [vmem:[#allocation8 + $0x400] sm:$0xff]
    %v445 = vld [vmem:[#allocation8 + $0x408] sm:$0xff]
    %v446 = vld [vmem:[#allocation8 + $0x410] sm:$0xff]
    %v447 = vld [vmem:[#allocation8 + $0x418] sm:$0xff]
    %v448 = vld [vmem:[#allocation8 + $0x420] sm:$0xff]
    %v449 = vld [vmem:[#allocation8 + $0x428] sm:$0xff]
    %v450 = vld [vmem:[#allocation8 + $0x430] sm:$0xff]
    %v451 = vld [vmem:[#allocation8 + $0x438] sm:$0xff]
    %v452 = vld [vmem:[#allocation8 + $0x440] sm:$0xff]
    %v453 = vld [vmem:[#allocation8 + $0x448] sm:$0xff]
    %v454 = vld [vmem:[#allocation8 + $0x450] sm:$0xff]
    %v455 = vld [vmem:[#allocation8 + $0x458] sm:$0xff]
    %v456 = vld [vmem:[#allocation8 + $0x460] sm:$0xff]
    %v457 = vld [vmem:[#allocation8 + $0x468] sm:$0xff]
    %v458 = vld [vmem:[#allocation8 + $0x470] sm:$0xff]
    %v459 = vld [vmem:[#allocation8 + $0x478] sm:$0xff]
    %v460 = vld [vmem:[#allocation8 + $0x480] sm:$0xff]
    %v461 = vld [vmem:[#allocation8 + $0x488] sm:$0xff]
    %v462 = vld [vmem:[#allocation8 + $0x490] sm:$0xff]
    %v463 = vld [vmem:[#allocation8 + $0x498] sm:$0xff]
    %v464 = vld [vmem:[#allocation8 + $0x4a0] sm:$0xff]
    %v465 = vld [vmem:[#allocation8 + $0x4a8] sm:$0xff]
    %v466 = vld [vmem:[#allocation8 + $0x4b0] sm:$0xff]
    %v467 = vld [vmem:[#allocation8 + $0x4b8] sm:$0xff]
    %v468 = vld [vmem:[#allocation8 + $0x4c0] sm:$0xff]
    %v469 = vld [vmem:[#allocation8 + $0x4c8] sm:$0xff]
    %v470 = vld [vmem:[#allocation8 + $0x4d0] sm:$0xff]
    %v471 = vld [vmem:[#allocation8 + $0x4d8] sm:$0xff]
    %v472 = vld [vmem:[#allocation8 + $0x4e0] sm:$0xff]
    %v473 = vld [vmem:[#allocation8 + $0x4e8] sm:$0xff]
    %v474 = vld [vmem:[#allocation8 + $0x4f0] sm:$0xff]
    %v475 = vld [vmem:[#allocation8 + $0x4f8] sm:$0xff]
    %v476 = vld [vmem:[#allocation8 + $0x500] sm:$0xff]
    %v477 = vld [vmem:[#allocation8 + $0x508] sm:$0xff]
    %v478 = vld [vmem:[#allocation8 + $0x510] sm:$0xff]
    %v479 = vld [vmem:[#allocation8 + $0x518] sm:$0xff]
    %v480 = vld [vmem:[#allocation8 + $0x520] sm:$0xff]
    %v481 = vld [vmem:[#allocation8 + $0x528] sm:$0xff]
    %v482 = vld [vmem:[#allocation8 + $0x530] sm:$0xff]
    %v483 = vld [vmem:[#allocation8 + $0x538] sm:$0xff]
    %v484 = vld [vmem:[#allocation8 + $0x540] sm:$0xff]
    %v485 = vld [vmem:[#allocation8 + $0x548] sm:$0xff]
    %v486 = vld [vmem:[#allocation8 + $0x550] sm:$0xff]
    %v487 = vld [vmem:[#allocation8 + $0x558] sm:$0xff]
    %v488 = vld [vmem:[#allocation8 + $0x560] sm:$0xff]
    %v489 = vld [vmem:[#allocation8 + $0x568] sm:$0xff]
    %v490 = vld [vmem:[#allocation8 + $0x570] sm:$0xff]
    %v491 = vld [vmem:[#allocation8 + $0x578] sm:$0xff]
    %v492 = vld [vmem:[#allocation8 + $0x580] sm:$0xff]
    %v493 = vld [vmem:[#allocation8 + $0x588] sm:$0xff]
    %v494 = vld [vmem:[#allocation8 + $0x590] sm:$0xff]
    %v495 = vld [vmem:[#allocation8 + $0x598] sm:$0xff]
    %v496 = vld [vmem:[#allocation8 + $0x5a0] sm:$0xff]
    %v497 = vld [vmem:[#allocation8 + $0x5a8] sm:$0xff]
    %v498 = vld [vmem:[#allocation8 + $0x5b0] sm:$0xff]
    %v499 = vld [vmem:[#allocation8 + $0x5b8] sm:$0xff]
    %v500 = vld [vmem:[#allocation8 + $0x5c0] sm:$0xff]
    %v501 = vld [vmem:[#allocation8 + $0x5c8] sm:$0xff]
    %v502 = vld [vmem:[#allocation8 + $0x5d0] sm:$0xff]
    %v503 = vld [vmem:[#allocation8 + $0x5d8] sm:$0xff]
    %v504 = vld [vmem:[#allocation8 + $0x5e0] sm:$0xff]
    %v505 = vld [vmem:[#allocation8 + $0x5e8] sm:$0xff]
    %v506 = vld [vmem:[#allocation8 + $0x5f0] sm:$0xff]
    %v507 = vld [vmem:[#allocation8 + $0x5f8] sm:$0xff]
    %v508 = vld [vmem:[#allocation8 + $0x600] sm:$0xff]
    %v509 = vld [vmem:[#allocation8 + $0x608] sm:$0xff]
    %v510 = vld [vmem:[#allocation8 + $0x610] sm:$0xff]
    %v511 = vld [vmem:[#allocation8 + $0x618] sm:$0xff]
    %v512 = vld [vmem:[#allocation8 + $0x620] sm:$0xff]
    %v513 = vld [vmem:[#allocation8 + $0x628] sm:$0xff]
    %v514 = vld [vmem:[#allocation8 + $0x630] sm:$0xff]
    %v515 = vld [vmem:[#allocation8 + $0x638] sm:$0xff]
    %v516 = vld [vmem:[#allocation8 + $0x640] sm:$0xff]
    %v517 = vld [vmem:[#allocation8 + $0x648] sm:$0xff]
    %v518 = vld [vmem:[#allocation8 + $0x650] sm:$0xff]
    %v519 = vld [vmem:[#allocation8 + $0x658] sm:$0xff]
    %v520 = vld [vmem:[#allocation8 + $0x660] sm:$0xff]
    %v521 = vld [vmem:[#allocation8 + $0x668] sm:$0xff]
    %v522 = vld [vmem:[#allocation8 + $0x670] sm:$0xff]
    %v523 = vld [vmem:[#allocation8 + $0x678] sm:$0xff]
    %v524 = vld [vmem:[#allocation8 + $0x680] sm:$0xff]
    %v525 = vld [vmem:[#allocation8 + $0x688] sm:$0xff]
    %v526 = vld [vmem:[#allocation8 + $0x690] sm:$0xff]
    %v527 = vld [vmem:[#allocation8 + $0x698] sm:$0xff]
    %v528 = vld [vmem:[#allocation8 + $0x6a0] sm:$0xff]
    %v529 = vld [vmem:[#allocation8 + $0x6a8] sm:$0xff]
    %v530 = vld [vmem:[#allocation8 + $0x6b0] sm:$0xff]
    %v531 = vld [vmem:[#allocation8 + $0x6b8] sm:$0xff]
    %v532 = vld [vmem:[#allocation8 + $0x6c0] sm:$0xff]
    %v533 = vld [vmem:[#allocation8 + $0x6c8] sm:$0xff]
    %v534 = vld [vmem:[#allocation8 + $0x6d0] sm:$0xff]
    %v535 = vld [vmem:[#allocation8 + $0x6d8] sm:$0xff]
    %v536 = vld [vmem:[#allocation8 + $0x6e0] sm:$0xff]
    %v537 = vld [vmem:[#allocation8 + $0x6e8] sm:$0xff]
    %v538 = vld [vmem:[#allocation8 + $0x6f0] sm:$0xff]
    %v539 = vld [vmem:[#allocation8 + $0x6f8] sm:$0xff]
    %v540 = vld [vmem:[#allocation8 + $0x700] sm:$0xff]
    %v541 = vld [vmem:[#allocation8 + $0x708] sm:$0xff]
    %v542 = vld [vmem:[#allocation8 + $0x710] sm:$0xff]
    %v543 = vld [vmem:[#allocation8 + $0x718] sm:$0xff]
    %v544 = vld [vmem:[#allocation8 + $0x720] sm:$0xff]
    %v545 = vld [vmem:[#allocation8 + $0x728] sm:$0xff]
    %v546 = vld [vmem:[#allocation8 + $0x730] sm:$0xff]
    %v547 = vld [vmem:[#allocation8 + $0x738] sm:$0xff]
    %v548 = vld [vmem:[#allocation8 + $0x740] sm:$0xff]
    %v549 = vld [vmem:[#allocation8 + $0x748] sm:$0xff]
    %v550 = vld [vmem:[#allocation8 + $0x750] sm:$0xff]
    %v551 = vld [vmem:[#allocation8 + $0x758] sm:$0xff]
    %v552 = vld [vmem:[#allocation8 + $0x760] sm:$0xff]
    %v553 = vld [vmem:[#allocation8 + $0x768] sm:$0xff]
    %v554 = vld [vmem:[#allocation8 + $0x770] sm:$0xff]
    %v555 = vld [vmem:[#allocation8 + $0x778] sm:$0xff]
    %v556 = vld [vmem:[#allocation8 + $0x780] sm:$0xff]
    %v557 = vld [vmem:[#allocation8 + $0x788] sm:$0xff]
    %v558 = vld [vmem:[#allocation8 + $0x790] sm:$0xff]
    %v559 = vld [vmem:[#allocation8 + $0x798] sm:$0xff]
    %v560 = vld [vmem:[#allocation8 + $0x7a0] sm:$0xff]
    %v561 = vld [vmem:[#allocation8 + $0x7a8] sm:$0xff]
    %v562 = vld [vmem:[#allocation8 + $0x7b0] sm:$0xff]
    %v563 = vld [vmem:[#allocation8 + $0x7b8] sm:$0xff]
    %v564 = vld [vmem:[#allocation8 + $0x7c0] sm:$0xff]
    %v565 = vld [vmem:[#allocation8 + $0x7c8] sm:$0xff]
    %v566 = vld [vmem:[#allocation8 + $0x7d0] sm:$0xff]
    %v567 = vld [vmem:[#allocation8 + $0x7d8] sm:$0xff]
    %v568 = vld [vmem:[#allocation8 + $0x7e0] sm:$0xff]
    %v569 = vld [vmem:[#allocation8 + $0x7e8] sm:$0xff]
    %v570 = vld [vmem:[#allocation8 + $0x7f0] sm:$0xff]
    %v571 = vld [vmem:[#allocation8 + $0x7f8] sm:$0xff]
    %v572 = vld [vmem:[#allocation8 + $0x800] sm:$0xff]
    %v573 = vld [vmem:[#allocation8 + $0x808] sm:$0xff]
    %v574 = vld [vmem:[#allocation8 + $0x810] sm:$0xff]
    %v575 = vld [vmem:[#allocation8 + $0x818] sm:$0xff]
    %v576 = vld [vmem:[#allocation8 + $0x820] sm:$0xff]
    %v577 = vld [vmem:[#allocation8 + $0x828] sm:$0xff]
    %v578 = vld [vmem:[#allocation8 + $0x830] sm:$0xff]
    %v579 = vld [vmem:[#allocation8 + $0x838] sm:$0xff]
    %v580 = vld [vmem:[#allocation8 + $0x840] sm:$0xff]
    %v581 = vld [vmem:[#allocation8 + $0x848] sm:$0xff]
    %v582 = vld [vmem:[#allocation8 + $0x850] sm:$0xff]
    %v583 = vld [vmem:[#allocation8 + $0x858] sm:$0xff]
    %v584 = vld [vmem:[#allocation8 + $0x860] sm:$0xff]
    %v585 = vld [vmem:[#allocation8 + $0x868] sm:$0xff]
    %v586 = vld [vmem:[#allocation8 + $0x870] sm:$0xff]
    %v587 = vld [vmem:[#allocation8 + $0x878] sm:$0xff]
    %v588 = vld [vmem:[#allocation8 + $0x880] sm:$0xff]
    %v589 = vld [vmem:[#allocation8 + $0x888] sm:$0xff]
    %v590 = vld [vmem:[#allocation8 + $0x890] sm:$0xff]
    %v591 = vld [vmem:[#allocation8 + $0x898] sm:$0xff]
    %v592 = vld [vmem:[#allocation8 + $0x8a0] sm:$0xff]
    %v593 = vld [vmem:[#allocation8 + $0x8a8] sm:$0xff]
    %v594 = vld [vmem:[#allocation8 + $0x8b0] sm:$0xff]
    %v595 = vld [vmem:[#allocation8 + $0x8b8] sm:$0xff]
    %v596 = vld [vmem:[#allocation8 + $0x8c0] sm:$0xff]
    %v597 = vld [vmem:[#allocation8 + $0x8c8] sm:$0xff]
    %v598 = vld [vmem:[#allocation8 + $0x8d0] sm:$0xff]
    %v599 = vld [vmem:[#allocation8 + $0x8d8] sm:$0xff]
    %v600 = vld [vmem:[#allocation8 + $0x8e0] sm:$0xff]
    %v601 = vld [vmem:[#allocation8 + $0x8e8] sm:$0xff]
    %v602 = vld [vmem:[#allocation8 + $0x8f0] sm:$0xff]
    %v603 = vld [vmem:[#allocation8 + $0x8f8] sm:$0xff]
    %v604 = vld [vmem:[#allocation8 + $0x900] sm:$0xff]
    %v605 = vld [vmem:[#allocation8 + $0x908] sm:$0xff]
    %v606 = vld [vmem:[#allocation8 + $0x910] sm:$0xff]
    %v607 = vld [vmem:[#allocation8 + $0x918] sm:$0xff]
    %v608 = vld [vmem:[#allocation8 + $0x920] sm:$0xff]
    %v609 = vld [vmem:[#allocation8 + $0x928] sm:$0xff]
    %v610 = vld [vmem:[#allocation8 + $0x930] sm:$0xff]
    %v611 = vld [vmem:[#allocation8 + $0x938] sm:$0xff]
    %v612 = vld [vmem:[#allocation8 + $0x940] sm:$0xff]
    %v613 = vld [vmem:[#allocation8 + $0x948] sm:$0xff]
    %v614 = vld [vmem:[#allocation8 + $0x950] sm:$0xff]
    %v615 = vld [vmem:[#allocation8 + $0x958] sm:$0xff]
    %v616 = vld [vmem:[#allocation8 + $0x960] sm:$0xff]
    %v617 = vld [vmem:[#allocation8 + $0x968] sm:$0xff]
    %v618 = vld [vmem:[#allocation8 + $0x970] sm:$0xff]
    %v619 = vld [vmem:[#allocation8 + $0x978] sm:$0xff]
    %v620 = vld [vmem:[#allocation8 + $0x980] sm:$0xff]
    %v621 = vld [vmem:[#allocation8 + $0x988] sm:$0xff]
    %v622 = vld [vmem:[#allocation8 + $0x990] sm:$0xff]
    %v623 = vld [vmem:[#allocation8 + $0x998] sm:$0xff]
    %v624 = vld [vmem:[#allocation8 + $0x9a0] sm:$0xff]
    %v625 = vld [vmem:[#allocation8 + $0x9a8] sm:$0xff]
    %v626 = vld [vmem:[#allocation8 + $0x9b0] sm:$0xff]
    %v627 = vld [vmem:[#allocation8 + $0x9b8] sm:$0xff]
    %v628 = vld [vmem:[#allocation8 + $0x9c0] sm:$0xff]
    %v629 = vld [vmem:[#allocation8 + $0x9c8] sm:$0xff]
    %v630 = vld [vmem:[#allocation8 + $0x9d0] sm:$0xff]
    %v631 = vld [vmem:[#allocation8 + $0x9d8] sm:$0xff]
    %v632 = vld [vmem:[#allocation8 + $0x9e0] sm:$0xff]
    %v633 = vld [vmem:[#allocation8 + $0x9e8] sm:$0xff]
    %v634 = vld [vmem:[#allocation8 + $0x9f0] sm:$0xff]
    %v635 = vld [vmem:[#allocation8 + $0x9f8] sm:$0xff]
    %v636 = vld [vmem:[#allocation8 + $0xa00] sm:$0xff]
    %v637 = vld [vmem:[#allocation8 + $0xa08] sm:$0xff]
    %v638 = vld [vmem:[#allocation8 + $0xa10] sm:$0xff]
    %v639 = vld [vmem:[#allocation8 + $0xa18] sm:$0xff]
    %v640 = vld [vmem:[#allocation8 + $0xa20] sm:$0xff]
    %v641 = vld [vmem:[#allocation8 + $0xa28] sm:$0xff]
    %v642 = vld [vmem:[#allocation8 + $0xa30] sm:$0xff]
    %v643 = vld [vmem:[#allocation8 + $0xa38] sm:$0xff]
    %v644 = vld [vmem:[#allocation8 + $0xa40] sm:$0xff]
    %v645 = vld [vmem:[#allocation8 + $0xa48] sm:$0xff]
    %v646 = vld [vmem:[#allocation8 + $0xa50] sm:$0xff]
    %v647 = vld [vmem:[#allocation8 + $0xa58] sm:$0xff]
    %v648 = vld [vmem:[#allocation8 + $0xa60] sm:$0xff]
    %v649 = vld [vmem:[#allocation8 + $0xa68] sm:$0xff]
    %v650 = vld [vmem:[#allocation8 + $0xa70] sm:$0xff]
    %v651 = vld [vmem:[#allocation8 + $0xa78] sm:$0xff]
    %v652 = vld [vmem:[#allocation8 + $0xa80] sm:$0xff]
    %v653 = vld [vmem:[#allocation8 + $0xa88] sm:$0xff]
    %v654 = vld [vmem:[#allocation8 + $0xa90] sm:$0xff]
    %v655 = vld [vmem:[#allocation8 + $0xa98] sm:$0xff]
    %v656 = vld [vmem:[#allocation8 + $0xaa0] sm:$0xff]
    %v657 = vld [vmem:[#allocation8 + $0xaa8] sm:$0xff]
    %v658 = vld [vmem:[#allocation8 + $0xab0] sm:$0xff]
    %v659 = vld [vmem:[#allocation8 + $0xab8] sm:$0xff]
    %v660 = vld [vmem:[#allocation8 + $0xac0] sm:$0xff]
    %v661 = vld [vmem:[#allocation8 + $0xac8] sm:$0xff]
    %v662 = vld [vmem:[#allocation8 + $0xad0] sm:$0xff]
    %v663 = vld [vmem:[#allocation8 + $0xad8] sm:$0xff]
    %v664 = vld [vmem:[#allocation8 + $0xae0] sm:$0xff]
    %v665 = vld [vmem:[#allocation8 + $0xae8] sm:$0xff]
    %v666 = vld [vmem:[#allocation8 + $0xaf0] sm:$0xff]
    %v667 = vld [vmem:[#allocation8 + $0xaf8] sm:$0xff]
    %v668 = vld [vmem:[#allocation8 + $0xb00] sm:$0xff]
    %v669 = vld [vmem:[#allocation8 + $0xb08] sm:$0xff]
    %v670 = vld [vmem:[#allocation8 + $0xb10] sm:$0xff]
    %v671 = vld [vmem:[#allocation8 + $0xb18] sm:$0xff]
    %v672 = vld [vmem:[#allocation8 + $0xb20] sm:$0xff]
    %v673 = vld [vmem:[#allocation8 + $0xb28] sm:$0xff]
    %v674 = vld [vmem:[#allocation8 + $0xb30] sm:$0xff]
    %v675 = vld [vmem:[#allocation8 + $0xb38] sm:$0xff]
    %v676 = vld [vmem:[#allocation8 + $0xb40] sm:$0xff]
    %v677 = vld [vmem:[#allocation8 + $0xb48] sm:$0xff]
    %v678 = vld [vmem:[#allocation8 + $0xb50] sm:$0xff]
    %v679 = vld [vmem:[#allocation8 + $0xb58] sm:$0xff]
    %v680 = vld [vmem:[#allocation8 + $0xb60] sm:$0xff]
    %v681 = vld [vmem:[#allocation8 + $0xb68] sm:$0xff]
    %v682 = vld [vmem:[#allocation8 + $0xb70] sm:$0xff]
    %v683 = vld [vmem:[#allocation8 + $0xb78] sm:$0xff]
    %v684 = vld [vmem:[#allocation8 + $0xb80] sm:$0xff]
    %v685 = vld [vmem:[#allocation8 + $0xb88] sm:$0xff]
    %v686 = vld [vmem:[#allocation8 + $0xb90] sm:$0xff]
    %v687 = vld [vmem:[#allocation8 + $0xb98] sm:$0xff]
    %v688 = vld [vmem:[#allocation8 + $0xba0] sm:$0xff]
    %v689 = vld [vmem:[#allocation8 + $0xba8] sm:$0xff]
    %v690 = vld [vmem:[#allocation8 + $0xbb0] sm:$0xff]
    %v691 = vld [vmem:[#allocation8 + $0xbb8] sm:$0xff]
    %v692 = vld [vmem:[#allocation8 + $0xbc0] sm:$0xff]
    %v693 = vld [vmem:[#allocation8 + $0xbc8] sm:$0xff]
    %v694 = vld [vmem:[#allocation8 + $0xbd0] sm:$0xff]
    %v695 = vld [vmem:[#allocation8 + $0xbd8] sm:$0xff]
    %v696 = vld [vmem:[#allocation8 + $0xbe0] sm:$0xff]
    %v697 = vld [vmem:[#allocation8 + $0xbe8] sm:$0xff]
    %v698 = vld [vmem:[#allocation8 + $0xbf0] sm:$0xff]
    %v699 = vld [vmem:[#allocation8 + $0xbf8] sm:$0xff]
    %v700 = vld [vmem:[#allocation8 + $0xc00] sm:$0xff]
    %v701 = vld [vmem:[#allocation8 + $0xc08] sm:$0xff]
    %v702 = vld [vmem:[#allocation8 + $0xc10] sm:$0xff]
    %v703 = vld [vmem:[#allocation8 + $0xc18] sm:$0xff]
    %v704 = vld [vmem:[#allocation8 + $0xc20] sm:$0xff]
    %v705 = vld [vmem:[#allocation8 + $0xc28] sm:$0xff]
    %v706 = vld [vmem:[#allocation8 + $0xc30] sm:$0xff]
    %v707 = vld [vmem:[#allocation8 + $0xc38] sm:$0xff]
    %v708 = vld [vmem:[#allocation8 + $0xc40] sm:$0xff]
    %v709 = vld [vmem:[#allocation8 + $0xc48] sm:$0xff]
    %v710 = vld [vmem:[#allocation8 + $0xc50] sm:$0xff]
    %v711 = vld [vmem:[#allocation8 + $0xc58] sm:$0xff]
    %v712 = vld [vmem:[#allocation8 + $0xc60] sm:$0xff]
    %v713 = vld [vmem:[#allocation8 + $0xc68] sm:$0xff]
    %v714 = vld [vmem:[#allocation8 + $0xc70] sm:$0xff]
    %v715 = vld [vmem:[#allocation8 + $0xc78] sm:$0xff]
    %v716 = vld [vmem:[#allocation8 + $0xc80] sm:$0xff]
    %v717 = vld [vmem:[#allocation8 + $0xc88] sm:$0xff]
    %v718 = vld [vmem:[#allocation8 + $0xc90] sm:$0xff]
    %v719 = vld [vmem:[#allocation8 + $0xc98] sm:$0xff]
    %v720 = vld [vmem:[#allocation8 + $0xca0] sm:$0xff]
    %v721 = vld [vmem:[#allocation8 + $0xca8] sm:$0xff]
    %v722 = vld [vmem:[#allocation8 + $0xcb0] sm:$0xff]
    %v723 = vld [vmem:[#allocation8 + $0xcb8] sm:$0xff]
    %v724 = vld [vmem:[#allocation8 + $0xcc0] sm:$0xff]
    %v725 = vld [vmem:[#allocation8 + $0xcc8] sm:$0xff]
    %v726 = vld [vmem:[#allocation8 + $0xcd0] sm:$0xff]
    %v727 = vld [vmem:[#allocation8 + $0xcd8] sm:$0xff]
    %v728 = vld [vmem:[#allocation8 + $0xce0] sm:$0xff]
    %v729 = vld [vmem:[#allocation8 + $0xce8] sm:$0xff]
    %v730 = vld [vmem:[#allocation8 + $0xcf0] sm:$0xff]
    %v731 = vld [vmem:[#allocation8 + $0xcf8] sm:$0xff]
    %v732 = vld [vmem:[#allocation8 + $0xd00] sm:$0xff]
    %v733 = vld [vmem:[#allocation8 + $0xd08] sm:$0xff]
    %v734 = vld [vmem:[#allocation8 + $0xd10] sm:$0xff]
    %v735 = vld [vmem:[#allocation8 + $0xd18] sm:$0xff]
    %v736 = vld [vmem:[#allocation8 + $0xd20] sm:$0xff]
    %v737 = vld [vmem:[#allocation8 + $0xd28] sm:$0xff]
    %v738 = vld [vmem:[#allocation8 + $0xd30] sm:$0xff]
    %v739 = vld [vmem:[#allocation8 + $0xd38] sm:$0xff]
    %v740 = vld [vmem:[#allocation8 + $0xd40] sm:$0xff]
    %v741 = vld [vmem:[#allocation8 + $0xd48] sm:$0xff]
    %v742 = vld [vmem:[#allocation8 + $0xd50] sm:$0xff]
    %v743 = vld [vmem:[#allocation8 + $0xd58] sm:$0xff]
    %v744 = vld [vmem:[#allocation8 + $0xd60] sm:$0xff]
    %v745 = vld [vmem:[#allocation8 + $0xd68] sm:$0xff]
    %v746 = vld [vmem:[#allocation8 + $0xd70] sm:$0xff]
    %v747 = vld [vmem:[#allocation8 + $0xd78] sm:$0xff]
    %v748 = vld [vmem:[#allocation8 + $0xd80] sm:$0xff]
    %v749 = vld [vmem:[#allocation8 + $0xd88] sm:$0xff]
    %v750 = vld [vmem:[#allocation8 + $0xd90] sm:$0xff]
    %v751 = vld [vmem:[#allocation8 + $0xd98] sm:$0xff]
    %v752 = vld [vmem:[#allocation8 + $0xda0] sm:$0xff]
    %v753 = vld [vmem:[#allocation8 + $0xda8] sm:$0xff]
    %v754 = vld [vmem:[#allocation8 + $0xdb0] sm:$0xff]
    %v755 = vld [vmem:[#allocation8 + $0xdb8] sm:$0xff]
    %v756 = vld [vmem:[#allocation8 + $0xdc0] sm:$0xff]
    %v757 = vld [vmem:[#allocation8 + $0xdc8] sm:$0xff]
    %v758 = vld [vmem:[#allocation8 + $0xdd0] sm:$0xff]
    %v759 = vld [vmem:[#allocation8 + $0xdd8] sm:$0xff]
    %v760 = vld [vmem:[#allocation8 + $0xde0] sm:$0xff]
    %v761 = vld [vmem:[#allocation8 + $0xde8] sm:$0xff]
    %v762 = vld [vmem:[#allocation8 + $0xdf0] sm:$0xff]
    %v763 = vld [vmem:[#allocation8 + $0xdf8] sm:$0xff]
    %v764 = vld [vmem:[#allocation8 + $0xe00] sm:$0xff]
    %v765 = vld [vmem:[#allocation8 + $0xe08] sm:$0xff]
    %v766 = vld [vmem:[#allocation8 + $0xe10] sm:$0xff]
    %v767 = vld [vmem:[#allocation8 + $0xe18] sm:$0xff]
    %v768 = vld [vmem:[#allocation8 + $0xe20] sm:$0xff]
    %v769 = vld [vmem:[#allocation8 + $0xe28] sm:$0xff]
    %v770 = vld [vmem:[#allocation8 + $0xe30] sm:$0xff]
    %v771 = vld [vmem:[#allocation8 + $0xe38] sm:$0xff]
    %v772 = vld [vmem:[#allocation8 + $0xe40] sm:$0xff]
    %v773 = vld [vmem:[#allocation8 + $0xe48] sm:$0xff]
    %v774 = vld [vmem:[#allocation8 + $0xe50] sm:$0xff]
    %v775 = vld [vmem:[#allocation8 + $0xe58] sm:$0xff]
    %v776 = vld [vmem:[#allocation8 + $0xe60] sm:$0xff]
    %v777 = vld [vmem:[#allocation8 + $0xe68] sm:$0xff]
    %v778 = vld [vmem:[#allocation8 + $0xe70] sm:$0xff]
    %v779 = vld [vmem:[#allocation8 + $0xe78] sm:$0xff]
    %v780 = vld [vmem:[#allocation8 + $0xe80] sm:$0xff]
    %v781 = vld [vmem:[#allocation8 + $0xe88] sm:$0xff]
    %v782 = vld [vmem:[#allocation8 + $0xe90] sm:$0xff]
    %v783 = vld [vmem:[#allocation8 + $0xe98] sm:$0xff]
    %v784 = vld [vmem:[#allocation8 + $0xea0] sm:$0xff]
    %v785 = vld [vmem:[#allocation8 + $0xea8] sm:$0xff]
    %v786 = vld [vmem:[#allocation8 + $0xeb0] sm:$0xff]
    %v787 = vld [vmem:[#allocation8 + $0xeb8] sm:$0xff]
    %v788 = vld [vmem:[#allocation8 + $0xec0] sm:$0xff]
    %v789 = vld [vmem:[#allocation8 + $0xec8] sm:$0xff]
    %v790 = vld [vmem:[#allocation8 + $0xed0] sm:$0xff]
    %v791 = vld [vmem:[#allocation8 + $0xed8] sm:$0xff]
    %v792 = vld [vmem:[#allocation8 + $0xee0] sm:$0xff]
    %v793 = vld [vmem:[#allocation8 + $0xee8] sm:$0xff]
    %v794 = vld [vmem:[#allocation8 + $0xef0] sm:$0xff]
    %v795 = vld [vmem:[#allocation8 + $0xef8] sm:$0xff]
    %v796 = vld [vmem:[#allocation8 + $0xf00] sm:$0xff]
    %v797 = vld [vmem:[#allocation8 + $0xf08] sm:$0xff]
    %v798 = vld [vmem:[#allocation8 + $0xf10] sm:$0xff]
    %v799 = vld [vmem:[#allocation8 + $0xf18] sm:$0xff]
    %v800 = vld [vmem:[#allocation8 + $0xf20] sm:$0xff]
    %v801 = vld [vmem:[#allocation8 + $0xf28] sm:$0xff]
    %v802 = vld [vmem:[#allocation8 + $0xf30] sm:$0xff]
    %v803 = vld [vmem:[#allocation8 + $0xf38] sm:$0xff]
    %v804 = vld [vmem:[#allocation8 + $0xf40] sm:$0xff]
    %v805 = vld [vmem:[#allocation8 + $0xf48] sm:$0xff]
    %v806 = vld [vmem:[#allocation8 + $0xf50] sm:$0xff]
    %v807 = vld [vmem:[#allocation8 + $0xf58] sm:$0xff]
    %v808 = vld [vmem:[#allocation8 + $0xf60] sm:$0xff]
    %v809 = vld [vmem:[#allocation8 + $0xf68] sm:$0xff]
    %v810 = vld [vmem:[#allocation8 + $0xf70] sm:$0xff]
    %v811 = vld [vmem:[#allocation8 + $0xf78] sm:$0xff]
    %v812 = vld [vmem:[#allocation8 + $0xf80] sm:$0xff]
    %v813 = vld [vmem:[#allocation8 + $0xf88] sm:$0xff]
    %v814 = vld [vmem:[#allocation8 + $0xf90] sm:$0xff]
    %v815 = vld [vmem:[#allocation8 + $0xf98] sm:$0xff]
    %v816 = vld [vmem:[#allocation8 + $0xfa0] sm:$0xff]
    %v817 = vld [vmem:[#allocation8 + $0xfa8] sm:$0xff]
    %v818 = vld [vmem:[#allocation8 + $0xfb0] sm:$0xff]
    %v819 = vld [vmem:[#allocation8 + $0xfb8] sm:$0xff]
    %v820 = vld [vmem:[#allocation8 + $0xfc0] sm:$0xff]
    %v821 = vld [vmem:[#allocation8 + $0xfc8] sm:$0xff]
    %v822 = vld [vmem:[#allocation8 + $0xfd0] sm:$0xff]
    %v823 = vld [vmem:[#allocation8 + $0xfd8] sm:$0xff]
    %v824 = vld [vmem:[#allocation8 + $0xfe0] sm:$0xff]
    %v825 = vld [vmem:[#allocation8 + $0xfe8] sm:$0xff]
    %v826 = vld [vmem:[#allocation8 + $0xff0] sm:$0xff]
    %v827 = vld [vmem:[#allocation8 + $0xff8] sm:$0xff]
    %v828 = vld [vmem:[#allocation10] sm:$0xff]
    %v830 = vlaneseq
    %v831 = vshrl.u32 %v830, 7
    %v832 = vsub.s32 0, %v831
    %v833 = vrot.slane %v828, %v832
    %v834 = vlaneseq
    %v835 = vshrl.u32 %v834, 7
    %v836 = vsub.s32 1, %v835
    %v837 = vrot.slane %v828, %v836
    %v838 = vlaneseq
    %v839 = vshrl.u32 %v838, 7
    %v840 = vsub.s32 2, %v839
    %v841 = vrot.slane %v828, %v840
    %v842 = vlaneseq
    %v843 = vshrl.u32 %v842, 7
    %v844 = vsub.s32 3, %v843
    %v845 = vrot.slane %v828, %v844
    %v846 = vlaneseq
    %v847 = vshrl.u32 %v846, 7
    %v848 = vsub.s32 4, %v847
    %v849 = vrot.slane %v828, %v848
    %v850 = vlaneseq
    %v851 = vshrl.u32 %v850, 7
    %v852 = vsub.s32 5, %v851
    %v853 = vrot.slane %v828, %v852
    %v854 = vlaneseq
    %v855 = vshrl.u32 %v854, 7
    %v856 = vsub.s32 6, %v855
    %v857 = vrot.slane %v828, %v856
    %v858 = vlaneseq
    %v859 = vshrl.u32 %v858, 7
    %v860 = vsub.s32 7, %v859
    %v861 = vrot.slane %v828, %v860
    %v1382 = vunpack.c.l.b16 %v316
    %v1383 = vunpack.c.h.b16 %v316
    %v1384 = vunpack.c.l.b16 %v317
    %v1385 = vunpack.c.h.b16 %v317
    %v1386 = vunpack.c.l.b16 %v318
    %v1387 = vunpack.c.h.b16 %v318
    %v1388 = vunpack.c.l.b16 %v319
    %v1389 = vunpack.c.h.b16 %v319
    %v1390 = vunpack.c.l.b16 %v320
    %v1391 = vunpack.c.h.b16 %v320
    %v1392 = vunpack.c.l.b16 %v321
    %v1393 = vunpack.c.h.b16 %v321
    %v1394 = vunpack.c.l.b16 %v322
    %v1395 = vunpack.c.h.b16 %v322
    %v1396 = vunpack.c.l.b16 %v323
    %v1397 = vunpack.c.h.b16 %v323
    %v1398 = vunpack.c.l.b16 %v324
    %v1399 = vunpack.c.h.b16 %v324
    %v1400 = vunpack.c.l.b16 %v325
    %v1401 = vunpack.c.h.b16 %v325
    %v1402 = vunpack.c.l.b16 %v326
    %v1403 = vunpack.c.h.b16 %v326
    %v1404 = vunpack.c.l.b16 %v327
    %v1405 = vunpack.c.h.b16 %v327
    %v1406 = vunpack.c.l.b16 %v328
    %v1407 = vunpack.c.h.b16 %v328
    %v1408 = vunpack.c.l.b16 %v329
    %v1409 = vunpack.c.h.b16 %v329
    %v1410 = vunpack.c.l.b16 %v330
    %v1411 = vunpack.c.h.b16 %v330
    %v1412 = vunpack.c.l.b16 %v331
    %v1413 = vunpack.c.h.b16 %v331
    %v1414 = vunpack.c.l.b16 %v332
    %v1415 = vunpack.c.h.b16 %v332
    %v1416 = vunpack.c.l.b16 %v333
    %v1417 = vunpack.c.h.b16 %v333
    %v1418 = vunpack.c.l.b16 %v334
    %v1419 = vunpack.c.h.b16 %v334
    %v1420 = vunpack.c.l.b16 %v335
    %v1421 = vunpack.c.h.b16 %v335
    %v1422 = vunpack.c.l.b16 %v336
    %v1423 = vunpack.c.h.b16 %v336
    %v1424 = vunpack.c.l.b16 %v337
    %v1425 = vunpack.c.h.b16 %v337
    %v1426 = vunpack.c.l.b16 %v338
    %v1427 = vunpack.c.h.b16 %v338
    %v1428 = vunpack.c.l.b16 %v339
    %v1429 = vunpack.c.h.b16 %v339
    %v1430 = vunpack.c.l.b16 %v340
    %v1431 = vunpack.c.h.b16 %v340
    %v1432 = vunpack.c.l.b16 %v341
    %v1433 = vunpack.c.h.b16 %v341
    %v1434 = vunpack.c.l.b16 %v342
    %v1435 = vunpack.c.h.b16 %v342
    %v1436 = vunpack.c.l.b16 %v343
    %v1437 = vunpack.c.h.b16 %v343
    %v1438 = vunpack.c.l.b16 %v344
    %v1439 = vunpack.c.h.b16 %v344
    %v1440 = vunpack.c.l.b16 %v345
    %v1441 = vunpack.c.h.b16 %v345
    %v1442 = vunpack.c.l.b16 %v346
    %v1443 = vunpack.c.h.b16 %v346
    %v1444 = vunpack.c.l.b16 %v347
    %v1445 = vunpack.c.h.b16 %v347
    %v1446 = vunpack.c.l.b16 %v348
    %v1447 = vunpack.c.h.b16 %v348
    %v1448 = vunpack.c.l.b16 %v349
    %v1449 = vunpack.c.h.b16 %v349
    %v1450 = vunpack.c.l.b16 %v350
    %v1451 = vunpack.c.h.b16 %v350
    %v1452 = vunpack.c.l.b16 %v351
    %v1453 = vunpack.c.h.b16 %v351
    %v1454 = vunpack.c.l.b16 %v352
    %v1455 = vunpack.c.h.b16 %v352
    %v1456 = vunpack.c.l.b16 %v353
    %v1457 = vunpack.c.h.b16 %v353
    %v1458 = vunpack.c.l.b16 %v354
    %v1459 = vunpack.c.h.b16 %v354
    %v1460 = vunpack.c.l.b16 %v355
    %v1461 = vunpack.c.h.b16 %v355
    %v1462 = vunpack.c.l.b16 %v356
    %v1463 = vunpack.c.h.b16 %v356
    %v1464 = vunpack.c.l.b16 %v357
    %v1465 = vunpack.c.h.b16 %v357
    %v1466 = vunpack.c.l.b16 %v358
    %v1467 = vunpack.c.h.b16 %v358
    %v1468 = vunpack.c.l.b16 %v359
    %v1469 = vunpack.c.h.b16 %v359
    %v1470 = vunpack.c.l.b16 %v360
    %v1471 = vunpack.c.h.b16 %v360
    %v1472 = vunpack.c.l.b16 %v361
    %v1473 = vunpack.c.h.b16 %v361
    %v1474 = vunpack.c.l.b16 %v362
    %v1475 = vunpack.c.h.b16 %v362
    %v1476 = vunpack.c.l.b16 %v363
    %v1477 = vunpack.c.h.b16 %v363
    %v1478 = vunpack.c.l.b16 %v364
    %v1479 = vunpack.c.h.b16 %v364
    %v1480 = vunpack.c.l.b16 %v365
    %v1481 = vunpack.c.h.b16 %v365
    %v1482 = vunpack.c.l.b16 %v366
    %v1483 = vunpack.c.h.b16 %v366
    %v1484 = vunpack.c.l.b16 %v367
    %v1485 = vunpack.c.h.b16 %v367
    %v1486 = vunpack.c.l.b16 %v368
    %v1487 = vunpack.c.h.b16 %v368
    %v1488 = vunpack.c.l.b16 %v369
    %v1489 = vunpack.c.h.b16 %v369
    %v1490 = vunpack.c.l.b16 %v370
    %v1491 = vunpack.c.h.b16 %v370
    %v1492 = vunpack.c.l.b16 %v371
    %v1493 = vunpack.c.h.b16 %v371
    %v1494 = vunpack.c.l.b16 %v372
    %v1495 = vunpack.c.h.b16 %v372
    %v1496 = vunpack.c.l.b16 %v373
    %v1497 = vunpack.c.h.b16 %v373
    %v1498 = vunpack.c.l.b16 %v374
    %v1499 = vunpack.c.h.b16 %v374
    %v1500 = vunpack.c.l.b16 %v375
    %v1501 = vunpack.c.h.b16 %v375
    %v1502 = vunpack.c.l.b16 %v376
    %v1503 = vunpack.c.h.b16 %v376
    %v1504 = vunpack.c.l.b16 %v377
    %v1505 = vunpack.c.h.b16 %v377
    %v1506 = vunpack.c.l.b16 %v378
    %v1507 = vunpack.c.h.b16 %v378
    %v1508 = vunpack.c.l.b16 %v379
    %v1509 = vunpack.c.h.b16 %v379
    %v1510 = vunpack.c.l.b16 %v380
    %v1511 = vunpack.c.h.b16 %v380
    %v1512 = vunpack.c.l.b16 %v381
    %v1513 = vunpack.c.h.b16 %v381
    %v1514 = vunpack.c.l.b16 %v382
    %v1515 = vunpack.c.h.b16 %v382
    %v1516 = vunpack.c.l.b16 %v383
    %v1517 = vunpack.c.h.b16 %v383
    %v1518 = vunpack.c.l.b16 %v384
    %v1519 = vunpack.c.h.b16 %v384
    %v1520 = vunpack.c.l.b16 %v385
    %v1521 = vunpack.c.h.b16 %v385
    %v1522 = vunpack.c.l.b16 %v386
    %v1523 = vunpack.c.h.b16 %v386
    %v1524 = vunpack.c.l.b16 %v387
    %v1525 = vunpack.c.h.b16 %v387
    %v1526 = vunpack.c.l.b16 %v388
    %v1527 = vunpack.c.h.b16 %v388
    %v1528 = vunpack.c.l.b16 %v389
    %v1529 = vunpack.c.h.b16 %v389
    %v1530 = vunpack.c.l.b16 %v390
    %v1531 = vunpack.c.h.b16 %v390
    %v1532 = vunpack.c.l.b16 %v391
    %v1533 = vunpack.c.h.b16 %v391
    %v1534 = vunpack.c.l.b16 %v392
    %v1535 = vunpack.c.h.b16 %v392
    %v1536 = vunpack.c.l.b16 %v393
    %v1537 = vunpack.c.h.b16 %v393
    %v1538 = vunpack.c.l.b16 %v394
    %v1539 = vunpack.c.h.b16 %v394
    %v1540 = vunpack.c.l.b16 %v395
    %v1541 = vunpack.c.h.b16 %v395
    %v1542 = vunpack.c.l.b16 %v396
    %v1543 = vunpack.c.h.b16 %v396
    %v1544 = vunpack.c.l.b16 %v397
    %v1545 = vunpack.c.h.b16 %v397
    %v1546 = vunpack.c.l.b16 %v398
    %v1547 = vunpack.c.h.b16 %v398
    %v1548 = vunpack.c.l.b16 %v399
    %v1549 = vunpack.c.h.b16 %v399
    %v1550 = vunpack.c.l.b16 %v400
    %v1551 = vunpack.c.h.b16 %v400
    %v1552 = vunpack.c.l.b16 %v401
    %v1553 = vunpack.c.h.b16 %v401
    %v1554 = vunpack.c.l.b16 %v402
    %v1555 = vunpack.c.h.b16 %v402
    %v1556 = vunpack.c.l.b16 %v403
    %v1557 = vunpack.c.h.b16 %v403
    %v1558 = vunpack.c.l.b16 %v404
    %v1559 = vunpack.c.h.b16 %v404
    %v1560 = vunpack.c.l.b16 %v405
    %v1561 = vunpack.c.h.b16 %v405
    %v1562 = vunpack.c.l.b16 %v406
    %v1563 = vunpack.c.h.b16 %v406
    %v1564 = vunpack.c.l.b16 %v407
    %v1565 = vunpack.c.h.b16 %v407
    %v1566 = vunpack.c.l.b16 %v408
    %v1567 = vunpack.c.h.b16 %v408
    %v1568 = vunpack.c.l.b16 %v409
    %v1569 = vunpack.c.h.b16 %v409
    %v1570 = vunpack.c.l.b16 %v410
    %v1571 = vunpack.c.h.b16 %v410
    %v1572 = vunpack.c.l.b16 %v411
    %v1573 = vunpack.c.h.b16 %v411
    %v1574 = vunpack.c.l.b16 %v412
    %v1575 = vunpack.c.h.b16 %v412
    %v1576 = vunpack.c.l.b16 %v413
    %v1577 = vunpack.c.h.b16 %v413
    %v1578 = vunpack.c.l.b16 %v414
    %v1579 = vunpack.c.h.b16 %v414
    %v1580 = vunpack.c.l.b16 %v415
    %v1581 = vunpack.c.h.b16 %v415
    %v1582 = vunpack.c.l.b16 %v416
    %v1583 = vunpack.c.h.b16 %v416
    %v1584 = vunpack.c.l.b16 %v417
    %v1585 = vunpack.c.h.b16 %v417
    %v1586 = vunpack.c.l.b16 %v418
    %v1587 = vunpack.c.h.b16 %v418
    %v1588 = vunpack.c.l.b16 %v419
    %v1589 = vunpack.c.h.b16 %v419
    %v1590 = vunpack.c.l.b16 %v420
    %v1591 = vunpack.c.h.b16 %v420
    %v1592 = vunpack.c.l.b16 %v421
    %v1593 = vunpack.c.h.b16 %v421
    %v1594 = vunpack.c.l.b16 %v422
    %v1595 = vunpack.c.h.b16 %v422
    %v1596 = vunpack.c.l.b16 %v423
    %v1597 = vunpack.c.h.b16 %v423
    %v1598 = vunpack.c.l.b16 %v424
    %v1599 = vunpack.c.h.b16 %v424
    %v1600 = vunpack.c.l.b16 %v425
    %v1601 = vunpack.c.h.b16 %v425
    %v1602 = vunpack.c.l.b16 %v426
    %v1603 = vunpack.c.h.b16 %v426
    %v1604 = vunpack.c.l.b16 %v427
    %v1605 = vunpack.c.h.b16 %v427
    %v1606 = vunpack.c.l.b16 %v428
    %v1607 = vunpack.c.h.b16 %v428
    %v1608 = vunpack.c.l.b16 %v429
    %v1609 = vunpack.c.h.b16 %v429
    %v1610 = vunpack.c.l.b16 %v430
    %v1611 = vunpack.c.h.b16 %v430
    %v1612 = vunpack.c.l.b16 %v431
    %v1613 = vunpack.c.h.b16 %v431
    %v1614 = vunpack.c.l.b16 %v432
    %v1615 = vunpack.c.h.b16 %v432
    %v1616 = vunpack.c.l.b16 %v433
    %v1617 = vunpack.c.h.b16 %v433
    %v1618 = vunpack.c.l.b16 %v434
    %v1619 = vunpack.c.h.b16 %v434
    %v1620 = vunpack.c.l.b16 %v435
    %v1621 = vunpack.c.h.b16 %v435
    %v1622 = vunpack.c.l.b16 %v436
    %v1623 = vunpack.c.h.b16 %v436
    %v1624 = vunpack.c.l.b16 %v437
    %v1625 = vunpack.c.h.b16 %v437
    %v1626 = vunpack.c.l.b16 %v438
    %v1627 = vunpack.c.h.b16 %v438
    %v1628 = vunpack.c.l.b16 %v439
    %v1629 = vunpack.c.h.b16 %v439
    %v1630 = vunpack.c.l.b16 %v440
    %v1631 = vunpack.c.h.b16 %v440
    %v1632 = vunpack.c.l.b16 %v441
    %v1633 = vunpack.c.h.b16 %v441
    %v1634 = vunpack.c.l.b16 %v442
    %v1635 = vunpack.c.h.b16 %v442
    %v1636 = vunpack.c.l.b16 %v443
    %v1637 = vunpack.c.h.b16 %v443
    %v1638 = vunpack.c.l.b16 %v444
    %v1639 = vunpack.c.h.b16 %v444
    %v1640 = vunpack.c.l.b16 %v445
    %v1641 = vunpack.c.h.b16 %v445
    %v1642 = vunpack.c.l.b16 %v446
    %v1643 = vunpack.c.h.b16 %v446
    %v1644 = vunpack.c.l.b16 %v447
    %v1645 = vunpack.c.h.b16 %v447
    %v1646 = vunpack.c.l.b16 %v448
    %v1647 = vunpack.c.h.b16 %v448
    %v1648 = vunpack.c.l.b16 %v449
    %v1649 = vunpack.c.h.b16 %v449
    %v1650 = vunpack.c.l.b16 %v450
    %v1651 = vunpack.c.h.b16 %v450
    %v1652 = vunpack.c.l.b16 %v451
    %v1653 = vunpack.c.h.b16 %v451
    %v1654 = vunpack.c.l.b16 %v452
    %v1655 = vunpack.c.h.b16 %v452
    %v1656 = vunpack.c.l.b16 %v453
    %v1657 = vunpack.c.h.b16 %v453
    %v1658 = vunpack.c.l.b16 %v454
    %v1659 = vunpack.c.h.b16 %v454
    %v1660 = vunpack.c.l.b16 %v455
    %v1661 = vunpack.c.h.b16 %v455
    %v1662 = vunpack.c.l.b16 %v456
    %v1663 = vunpack.c.h.b16 %v456
    %v1664 = vunpack.c.l.b16 %v457
    %v1665 = vunpack.c.h.b16 %v457
    %v1666 = vunpack.c.l.b16 %v458
    %v1667 = vunpack.c.h.b16 %v458
    %v1668 = vunpack.c.l.b16 %v459
    %v1669 = vunpack.c.h.b16 %v459
    %v1670 = vunpack.c.l.b16 %v460
    %v1671 = vunpack.c.h.b16 %v460
    %v1672 = vunpack.c.l.b16 %v461
    %v1673 = vunpack.c.h.b16 %v461
    %v1674 = vunpack.c.l.b16 %v462
    %v1675 = vunpack.c.h.b16 %v462
    %v1676 = vunpack.c.l.b16 %v463
    %v1677 = vunpack.c.h.b16 %v463
    %v1678 = vunpack.c.l.b16 %v464
    %v1679 = vunpack.c.h.b16 %v464
    %v1680 = vunpack.c.l.b16 %v465
    %v1681 = vunpack.c.h.b16 %v465
    %v1682 = vunpack.c.l.b16 %v466
    %v1683 = vunpack.c.h.b16 %v466
    %v1684 = vunpack.c.l.b16 %v467
    %v1685 = vunpack.c.h.b16 %v467
    %v1686 = vunpack.c.l.b16 %v468
    %v1687 = vunpack.c.h.b16 %v468
    %v1688 = vunpack.c.l.b16 %v469
    %v1689 = vunpack.c.h.b16 %v469
    %v1690 = vunpack.c.l.b16 %v470
    %v1691 = vunpack.c.h.b16 %v470
    %v1692 = vunpack.c.l.b16 %v471
    %v1693 = vunpack.c.h.b16 %v471
    %v1694 = vunpack.c.l.b16 %v472
    %v1695 = vunpack.c.h.b16 %v472
    %v1696 = vunpack.c.l.b16 %v473
    %v1697 = vunpack.c.h.b16 %v473
    %v1698 = vunpack.c.l.b16 %v474
    %v1699 = vunpack.c.h.b16 %v474
    %v1700 = vunpack.c.l.b16 %v475
    %v1701 = vunpack.c.h.b16 %v475
    %v1702 = vunpack.c.l.b16 %v476
    %v1703 = vunpack.c.h.b16 %v476
    %v1704 = vunpack.c.l.b16 %v477
    %v1705 = vunpack.c.h.b16 %v477
    %v1706 = vunpack.c.l.b16 %v478
    %v1707 = vunpack.c.h.b16 %v478
    %v1708 = vunpack.c.l.b16 %v479
    %v1709 = vunpack.c.h.b16 %v479
    %v1710 = vunpack.c.l.b16 %v480
    %v1711 = vunpack.c.h.b16 %v480
    %v1712 = vunpack.c.l.b16 %v481
    %v1713 = vunpack.c.h.b16 %v481
    %v1714 = vunpack.c.l.b16 %v482
    %v1715 = vunpack.c.h.b16 %v482
    %v1716 = vunpack.c.l.b16 %v483
    %v1717 = vunpack.c.h.b16 %v483
    %v1718 = vunpack.c.l.b16 %v484
    %v1719 = vunpack.c.h.b16 %v484
    %v1720 = vunpack.c.l.b16 %v485
    %v1721 = vunpack.c.h.b16 %v485
    %v1722 = vunpack.c.l.b16 %v486
    %v1723 = vunpack.c.h.b16 %v486
    %v1724 = vunpack.c.l.b16 %v487
    %v1725 = vunpack.c.h.b16 %v487
    %v1726 = vunpack.c.l.b16 %v488
    %v1727 = vunpack.c.h.b16 %v488
    %v1728 = vunpack.c.l.b16 %v489
    %v1729 = vunpack.c.h.b16 %v489
    %v1730 = vunpack.c.l.b16 %v490
    %v1731 = vunpack.c.h.b16 %v490
    %v1732 = vunpack.c.l.b16 %v491
    %v1733 = vunpack.c.h.b16 %v491
    %v1734 = vunpack.c.l.b16 %v492
    %v1735 = vunpack.c.h.b16 %v492
    %v1736 = vunpack.c.l.b16 %v493
    %v1737 = vunpack.c.h.b16 %v493
    %v1738 = vunpack.c.l.b16 %v494
    %v1739 = vunpack.c.h.b16 %v494
    %v1740 = vunpack.c.l.b16 %v495
    %v1741 = vunpack.c.h.b16 %v495
    %v1742 = vunpack.c.l.b16 %v496
    %v1743 = vunpack.c.h.b16 %v496
    %v1744 = vunpack.c.l.b16 %v497
    %v1745 = vunpack.c.h.b16 %v497
    %v1746 = vunpack.c.l.b16 %v498
    %v1747 = vunpack.c.h.b16 %v498
    %v1748 = vunpack.c.l.b16 %v499
    %v1749 = vunpack.c.h.b16 %v499
    %v1750 = vunpack.c.l.b16 %v500
    %v1751 = vunpack.c.h.b16 %v500
    %v1752 = vunpack.c.l.b16 %v501
    %v1753 = vunpack.c.h.b16 %v501
    %v1754 = vunpack.c.l.b16 %v502
    %v1755 = vunpack.c.h.b16 %v502
    %v1756 = vunpack.c.l.b16 %v503
    %v1757 = vunpack.c.h.b16 %v503
    %v1758 = vunpack.c.l.b16 %v504
    %v1759 = vunpack.c.h.b16 %v504
    %v1760 = vunpack.c.l.b16 %v505
    %v1761 = vunpack.c.h.b16 %v505
    %v1762 = vunpack.c.l.b16 %v506
    %v1763 = vunpack.c.h.b16 %v506
    %v1764 = vunpack.c.l.b16 %v507
    %v1765 = vunpack.c.h.b16 %v507
    %v1766 = vunpack.c.l.b16 %v508
    %v1767 = vunpack.c.h.b16 %v508
    %v1768 = vunpack.c.l.b16 %v509
    %v1769 = vunpack.c.h.b16 %v509
    %v1770 = vunpack.c.l.b16 %v510
    %v1771 = vunpack.c.h.b16 %v510
    %v1772 = vunpack.c.l.b16 %v511
    %v1773 = vunpack.c.h.b16 %v511
    %v1774 = vunpack.c.l.b16 %v512
    %v1775 = vunpack.c.h.b16 %v512
    %v1776 = vunpack.c.l.b16 %v513
    %v1777 = vunpack.c.h.b16 %v513
    %v1778 = vunpack.c.l.b16 %v514
    %v1779 = vunpack.c.h.b16 %v514
    %v1780 = vunpack.c.l.b16 %v515
    %v1781 = vunpack.c.h.b16 %v515
    %v1782 = vunpack.c.l.b16 %v516
    %v1783 = vunpack.c.h.b16 %v516
    %v1784 = vunpack.c.l.b16 %v517
    %v1785 = vunpack.c.h.b16 %v517
    %v1786 = vunpack.c.l.b16 %v518
    %v1787 = vunpack.c.h.b16 %v518
    %v1788 = vunpack.c.l.b16 %v519
    %v1789 = vunpack.c.h.b16 %v519
    %v1790 = vunpack.c.l.b16 %v520
    %v1791 = vunpack.c.h.b16 %v520
    %v1792 = vunpack.c.l.b16 %v521
    %v1793 = vunpack.c.h.b16 %v521
    %v1794 = vunpack.c.l.b16 %v522
    %v1795 = vunpack.c.h.b16 %v522
    %v1796 = vunpack.c.l.b16 %v523
    %v1797 = vunpack.c.h.b16 %v523
    %v1798 = vunpack.c.l.b16 %v524
    %v1799 = vunpack.c.h.b16 %v524
    %v1800 = vunpack.c.l.b16 %v525
    %v1801 = vunpack.c.h.b16 %v525
    %v1802 = vunpack.c.l.b16 %v526
    %v1803 = vunpack.c.h.b16 %v526
    %v1804 = vunpack.c.l.b16 %v527
    %v1805 = vunpack.c.h.b16 %v527
    %v1806 = vunpack.c.l.b16 %v528
    %v1807 = vunpack.c.h.b16 %v528
    %v1808 = vunpack.c.l.b16 %v529
    %v1809 = vunpack.c.h.b16 %v529
    %v1810 = vunpack.c.l.b16 %v530
    %v1811 = vunpack.c.h.b16 %v530
    %v1812 = vunpack.c.l.b16 %v531
    %v1813 = vunpack.c.h.b16 %v531
    %v1814 = vunpack.c.l.b16 %v532
    %v1815 = vunpack.c.h.b16 %v532
    %v1816 = vunpack.c.l.b16 %v533
    %v1817 = vunpack.c.h.b16 %v533
    %v1818 = vunpack.c.l.b16 %v534
    %v1819 = vunpack.c.h.b16 %v534
    %v1820 = vunpack.c.l.b16 %v535
    %v1821 = vunpack.c.h.b16 %v535
    %v1822 = vunpack.c.l.b16 %v536
    %v1823 = vunpack.c.h.b16 %v536
    %v1824 = vunpack.c.l.b16 %v537
    %v1825 = vunpack.c.h.b16 %v537
    %v1826 = vunpack.c.l.b16 %v538
    %v1827 = vunpack.c.h.b16 %v538
    %v1828 = vunpack.c.l.b16 %v539
    %v1829 = vunpack.c.h.b16 %v539
    %v1830 = vunpack.c.l.b16 %v540
    %v1831 = vunpack.c.h.b16 %v540
    %v1832 = vunpack.c.l.b16 %v541
    %v1833 = vunpack.c.h.b16 %v541
    %v1834 = vunpack.c.l.b16 %v542
    %v1835 = vunpack.c.h.b16 %v542
    %v1836 = vunpack.c.l.b16 %v543
    %v1837 = vunpack.c.h.b16 %v543
    %v1838 = vunpack.c.l.b16 %v544
    %v1839 = vunpack.c.h.b16 %v544
    %v1840 = vunpack.c.l.b16 %v545
    %v1841 = vunpack.c.h.b16 %v545
    %v1842 = vunpack.c.l.b16 %v546
    %v1843 = vunpack.c.h.b16 %v546
    %v1844 = vunpack.c.l.b16 %v547
    %v1845 = vunpack.c.h.b16 %v547
    %v1846 = vunpack.c.l.b16 %v548
    %v1847 = vunpack.c.h.b16 %v548
    %v1848 = vunpack.c.l.b16 %v549
    %v1849 = vunpack.c.h.b16 %v549
    %v1850 = vunpack.c.l.b16 %v550
    %v1851 = vunpack.c.h.b16 %v550
    %v1852 = vunpack.c.l.b16 %v551
    %v1853 = vunpack.c.h.b16 %v551
    %v1854 = vunpack.c.l.b16 %v552
    %v1855 = vunpack.c.h.b16 %v552
    %v1856 = vunpack.c.l.b16 %v553
    %v1857 = vunpack.c.h.b16 %v553
    %v1858 = vunpack.c.l.b16 %v554
    %v1859 = vunpack.c.h.b16 %v554
    %v1860 = vunpack.c.l.b16 %v555
    %v1861 = vunpack.c.h.b16 %v555
    %v1862 = vunpack.c.l.b16 %v556
    %v1863 = vunpack.c.h.b16 %v556
    %v1864 = vunpack.c.l.b16 %v557
    %v1865 = vunpack.c.h.b16 %v557
    %v1866 = vunpack.c.l.b16 %v558
    %v1867 = vunpack.c.h.b16 %v558
    %v1868 = vunpack.c.l.b16 %v559
    %v1869 = vunpack.c.h.b16 %v559
    %v1870 = vunpack.c.l.b16 %v560
    %v1871 = vunpack.c.h.b16 %v560
    %v1872 = vunpack.c.l.b16 %v561
    %v1873 = vunpack.c.h.b16 %v561
    %v1874 = vunpack.c.l.b16 %v562
    %v1875 = vunpack.c.h.b16 %v562
    %v1876 = vunpack.c.l.b16 %v563
    %v1877 = vunpack.c.h.b16 %v563
    %v1878 = vunpack.c.l.b16 %v564
    %v1879 = vunpack.c.h.b16 %v564
    %v1880 = vunpack.c.l.b16 %v565
    %v1881 = vunpack.c.h.b16 %v565
    %v1882 = vunpack.c.l.b16 %v566
    %v1883 = vunpack.c.h.b16 %v566
    %v1884 = vunpack.c.l.b16 %v567
    %v1885 = vunpack.c.h.b16 %v567
    %v1886 = vunpack.c.l.b16 %v568
    %v1887 = vunpack.c.h.b16 %v568
    %v1888 = vunpack.c.l.b16 %v569
    %v1889 = vunpack.c.h.b16 %v569
    %v1890 = vunpack.c.l.b16 %v570
    %v1891 = vunpack.c.h.b16 %v570
    %v1892 = vunpack.c.l.b16 %v571
    %v1893 = vunpack.c.h.b16 %v571
    %v1894 = vunpack.c.l.b16 %v572
    %v1895 = vunpack.c.h.b16 %v572
    %v1896 = vunpack.c.l.b16 %v573
    %v1897 = vunpack.c.h.b16 %v573
    %v1898 = vunpack.c.l.b16 %v574
    %v1899 = vunpack.c.h.b16 %v574
    %v1900 = vunpack.c.l.b16 %v575
    %v1901 = vunpack.c.h.b16 %v575
    %v1902 = vunpack.c.l.b16 %v576
    %v1903 = vunpack.c.h.b16 %v576
    %v1904 = vunpack.c.l.b16 %v577
    %v1905 = vunpack.c.h.b16 %v577
    %v1906 = vunpack.c.l.b16 %v578
    %v1907 = vunpack.c.h.b16 %v578
    %v1908 = vunpack.c.l.b16 %v579
    %v1909 = vunpack.c.h.b16 %v579
    %v1910 = vunpack.c.l.b16 %v580
    %v1911 = vunpack.c.h.b16 %v580
    %v1912 = vunpack.c.l.b16 %v581
    %v1913 = vunpack.c.h.b16 %v581
    %v1914 = vunpack.c.l.b16 %v582
    %v1915 = vunpack.c.h.b16 %v582
    %v1916 = vunpack.c.l.b16 %v583
    %v1917 = vunpack.c.h.b16 %v583
    %v1918 = vunpack.c.l.b16 %v584
    %v1919 = vunpack.c.h.b16 %v584
    %v1920 = vunpack.c.l.b16 %v585
    %v1921 = vunpack.c.h.b16 %v585
    %v1922 = vunpack.c.l.b16 %v586
    %v1923 = vunpack.c.h.b16 %v586
    %v1924 = vunpack.c.l.b16 %v587
    %v1925 = vunpack.c.h.b16 %v587
    %v1926 = vunpack.c.l.b16 %v588
    %v1927 = vunpack.c.h.b16 %v588
    %v1928 = vunpack.c.l.b16 %v589
    %v1929 = vunpack.c.h.b16 %v589
    %v1930 = vunpack.c.l.b16 %v590
    %v1931 = vunpack.c.h.b16 %v590
    %v1932 = vunpack.c.l.b16 %v591
    %v1933 = vunpack.c.h.b16 %v591
    %v1934 = vunpack.c.l.b16 %v592
    %v1935 = vunpack.c.h.b16 %v592
    %v1936 = vunpack.c.l.b16 %v593
    %v1937 = vunpack.c.h.b16 %v593
    %v1938 = vunpack.c.l.b16 %v594
    %v1939 = vunpack.c.h.b16 %v594
    %v1940 = vunpack.c.l.b16 %v595
    %v1941 = vunpack.c.h.b16 %v595
    %v1942 = vunpack.c.l.b16 %v596
    %v1943 = vunpack.c.h.b16 %v596
    %v1944 = vunpack.c.l.b16 %v597
    %v1945 = vunpack.c.h.b16 %v597
    %v1946 = vunpack.c.l.b16 %v598
    %v1947 = vunpack.c.h.b16 %v598
    %v1948 = vunpack.c.l.b16 %v599
    %v1949 = vunpack.c.h.b16 %v599
    %v1950 = vunpack.c.l.b16 %v600
    %v1951 = vunpack.c.h.b16 %v600
    %v1952 = vunpack.c.l.b16 %v601
    %v1953 = vunpack.c.h.b16 %v601
    %v1954 = vunpack.c.l.b16 %v602
    %v1955 = vunpack.c.h.b16 %v602
    %v1956 = vunpack.c.l.b16 %v603
    %v1957 = vunpack.c.h.b16 %v603
    %v1958 = vunpack.c.l.b16 %v604
    %v1959 = vunpack.c.h.b16 %v604
    %v1960 = vunpack.c.l.b16 %v605
    %v1961 = vunpack.c.h.b16 %v605
    %v1962 = vunpack.c.l.b16 %v606
    %v1963 = vunpack.c.h.b16 %v606
    %v1964 = vunpack.c.l.b16 %v607
    %v1965 = vunpack.c.h.b16 %v607
    %v1966 = vunpack.c.l.b16 %v608
    %v1967 = vunpack.c.h.b16 %v608
    %v1968 = vunpack.c.l.b16 %v609
    %v1969 = vunpack.c.h.b16 %v609
    %v1970 = vunpack.c.l.b16 %v610
    %v1971 = vunpack.c.h.b16 %v610
    %v1972 = vunpack.c.l.b16 %v611
    %v1973 = vunpack.c.h.b16 %v611
    %v1974 = vunpack.c.l.b16 %v612
    %v1975 = vunpack.c.h.b16 %v612
    %v1976 = vunpack.c.l.b16 %v613
    %v1977 = vunpack.c.h.b16 %v613
    %v1978 = vunpack.c.l.b16 %v614
    %v1979 = vunpack.c.h.b16 %v614
    %v1980 = vunpack.c.l.b16 %v615
    %v1981 = vunpack.c.h.b16 %v615
    %v1982 = vunpack.c.l.b16 %v616
    %v1983 = vunpack.c.h.b16 %v616
    %v1984 = vunpack.c.l.b16 %v617
    %v1985 = vunpack.c.h.b16 %v617
    %v1986 = vunpack.c.l.b16 %v618
    %v1987 = vunpack.c.h.b16 %v618
    %v1988 = vunpack.c.l.b16 %v619
    %v1989 = vunpack.c.h.b16 %v619
    %v1990 = vunpack.c.l.b16 %v620
    %v1991 = vunpack.c.h.b16 %v620
    %v1992 = vunpack.c.l.b16 %v621
    %v1993 = vunpack.c.h.b16 %v621
    %v1994 = vunpack.c.l.b16 %v622
    %v1995 = vunpack.c.h.b16 %v622
    %v1996 = vunpack.c.l.b16 %v623
    %v1997 = vunpack.c.h.b16 %v623
    %v1998 = vunpack.c.l.b16 %v624
    %v1999 = vunpack.c.h.b16 %v624
    %v2000 = vunpack.c.l.b16 %v625
    %v2001 = vunpack.c.h.b16 %v625
    %v2002 = vunpack.c.l.b16 %v626
    %v2003 = vunpack.c.h.b16 %v626
    %v2004 = vunpack.c.l.b16 %v627
    %v2005 = vunpack.c.h.b16 %v627
    %v2006 = vunpack.c.l.b16 %v628
    %v2007 = vunpack.c.h.b16 %v628
    %v2008 = vunpack.c.l.b16 %v629
    %v2009 = vunpack.c.h.b16 %v629
    %v2010 = vunpack.c.l.b16 %v630
    %v2011 = vunpack.c.h.b16 %v630
    %v2012 = vunpack.c.l.b16 %v631
    %v2013 = vunpack.c.h.b16 %v631
    %v2014 = vunpack.c.l.b16 %v632
    %v2015 = vunpack.c.h.b16 %v632
    %v2016 = vunpack.c.l.b16 %v633
    %v2017 = vunpack.c.h.b16 %v633
    %v2018 = vunpack.c.l.b16 %v634
    %v2019 = vunpack.c.h.b16 %v634
    %v2020 = vunpack.c.l.b16 %v635
    %v2021 = vunpack.c.h.b16 %v635
    %v2022 = vunpack.c.l.b16 %v636
    %v2023 = vunpack.c.h.b16 %v636
    %v2024 = vunpack.c.l.b16 %v637
    %v2025 = vunpack.c.h.b16 %v637
    %v2026 = vunpack.c.l.b16 %v638
    %v2027 = vunpack.c.h.b16 %v638
    %v2028 = vunpack.c.l.b16 %v639
    %v2029 = vunpack.c.h.b16 %v639
    %v2030 = vunpack.c.l.b16 %v640
    %v2031 = vunpack.c.h.b16 %v640
    %v2032 = vunpack.c.l.b16 %v641
    %v2033 = vunpack.c.h.b16 %v641
    %v2034 = vunpack.c.l.b16 %v642
    %v2035 = vunpack.c.h.b16 %v642
    %v2036 = vunpack.c.l.b16 %v643
    %v2037 = vunpack.c.h.b16 %v643
    %v2038 = vunpack.c.l.b16 %v644
    %v2039 = vunpack.c.h.b16 %v644
    %v2040 = vunpack.c.l.b16 %v645
    %v2041 = vunpack.c.h.b16 %v645
    %v2042 = vunpack.c.l.b16 %v646
    %v2043 = vunpack.c.h.b16 %v646
    %v2044 = vunpack.c.l.b16 %v647
    %v2045 = vunpack.c.h.b16 %v647
    %v2046 = vunpack.c.l.b16 %v648
    %v2047 = vunpack.c.h.b16 %v648
    %v2048 = vunpack.c.l.b16 %v649
    %v2049 = vunpack.c.h.b16 %v649
    %v2050 = vunpack.c.l.b16 %v650
    %v2051 = vunpack.c.h.b16 %v650
    %v2052 = vunpack.c.l.b16 %v651
    %v2053 = vunpack.c.h.b16 %v651
    %v2054 = vunpack.c.l.b16 %v652
    %v2055 = vunpack.c.h.b16 %v652
    %v2056 = vunpack.c.l.b16 %v653
    %v2057 = vunpack.c.h.b16 %v653
    %v2058 = vunpack.c.l.b16 %v654
    %v2059 = vunpack.c.h.b16 %v654
    %v2060 = vunpack.c.l.b16 %v655
    %v2061 = vunpack.c.h.b16 %v655
    %v2062 = vunpack.c.l.b16 %v656
    %v2063 = vunpack.c.h.b16 %v656
    %v2064 = vunpack.c.l.b16 %v657
    %v2065 = vunpack.c.h.b16 %v657
    %v2066 = vunpack.c.l.b16 %v658
    %v2067 = vunpack.c.h.b16 %v658
    %v2068 = vunpack.c.l.b16 %v659
    %v2069 = vunpack.c.h.b16 %v659
    %v2070 = vunpack.c.l.b16 %v660
    %v2071 = vunpack.c.h.b16 %v660
    %v2072 = vunpack.c.l.b16 %v661
    %v2073 = vunpack.c.h.b16 %v661
    %v2074 = vunpack.c.l.b16 %v662
    %v2075 = vunpack.c.h.b16 %v662
    %v2076 = vunpack.c.l.b16 %v663
    %v2077 = vunpack.c.h.b16 %v663
    %v2078 = vunpack.c.l.b16 %v664
    %v2079 = vunpack.c.h.b16 %v664
    %v2080 = vunpack.c.l.b16 %v665
    %v2081 = vunpack.c.h.b16 %v665
    %v2082 = vunpack.c.l.b16 %v666
    %v2083 = vunpack.c.h.b16 %v666
    %v2084 = vunpack.c.l.b16 %v667
    %v2085 = vunpack.c.h.b16 %v667
    %v2086 = vunpack.c.l.b16 %v668
    %v2087 = vunpack.c.h.b16 %v668
    %v2088 = vunpack.c.l.b16 %v669
    %v2089 = vunpack.c.h.b16 %v669
    %v2090 = vunpack.c.l.b16 %v670
    %v2091 = vunpack.c.h.b16 %v670
    %v2092 = vunpack.c.l.b16 %v671
    %v2093 = vunpack.c.h.b16 %v671
    %v2094 = vunpack.c.l.b16 %v672
    %v2095 = vunpack.c.h.b16 %v672
    %v2096 = vunpack.c.l.b16 %v673
    %v2097 = vunpack.c.h.b16 %v673
    %v2098 = vunpack.c.l.b16 %v674
    %v2099 = vunpack.c.h.b16 %v674
    %v2100 = vunpack.c.l.b16 %v675
    %v2101 = vunpack.c.h.b16 %v675
    %v2102 = vunpack.c.l.b16 %v676
    %v2103 = vunpack.c.h.b16 %v676
    %v2104 = vunpack.c.l.b16 %v677
    %v2105 = vunpack.c.h.b16 %v677
    %v2106 = vunpack.c.l.b16 %v678
    %v2107 = vunpack.c.h.b16 %v678
    %v2108 = vunpack.c.l.b16 %v679
    %v2109 = vunpack.c.h.b16 %v679
    %v2110 = vunpack.c.l.b16 %v680
    %v2111 = vunpack.c.h.b16 %v680
    %v2112 = vunpack.c.l.b16 %v681
    %v2113 = vunpack.c.h.b16 %v681
    %v2114 = vunpack.c.l.b16 %v682
    %v2115 = vunpack.c.h.b16 %v682
    %v2116 = vunpack.c.l.b16 %v683
    %v2117 = vunpack.c.h.b16 %v683
    %v2118 = vunpack.c.l.b16 %v684
    %v2119 = vunpack.c.h.b16 %v684
    %v2120 = vunpack.c.l.b16 %v685
    %v2121 = vunpack.c.h.b16 %v685
    %v2122 = vunpack.c.l.b16 %v686
    %v2123 = vunpack.c.h.b16 %v686
    %v2124 = vunpack.c.l.b16 %v687
    %v2125 = vunpack.c.h.b16 %v687
    %v2126 = vunpack.c.l.b16 %v688
    %v2127 = vunpack.c.h.b16 %v688
    %v2128 = vunpack.c.l.b16 %v689
    %v2129 = vunpack.c.h.b16 %v689
    %v2130 = vunpack.c.l.b16 %v690
    %v2131 = vunpack.c.h.b16 %v690
    %v2132 = vunpack.c.l.b16 %v691
    %v2133 = vunpack.c.h.b16 %v691
    %v2134 = vunpack.c.l.b16 %v692
    %v2135 = vunpack.c.h.b16 %v692
    %v2136 = vunpack.c.l.b16 %v693
    %v2137 = vunpack.c.h.b16 %v693
    %v2138 = vunpack.c.l.b16 %v694
    %v2139 = vunpack.c.h.b16 %v694
    %v2140 = vunpack.c.l.b16 %v695
    %v2141 = vunpack.c.h.b16 %v695
    %v2142 = vunpack.c.l.b16 %v696
    %v2143 = vunpack.c.h.b16 %v696
    %v2144 = vunpack.c.l.b16 %v697
    %v2145 = vunpack.c.h.b16 %v697
    %v2146 = vunpack.c.l.b16 %v698
    %v2147 = vunpack.c.h.b16 %v698
    %v2148 = vunpack.c.l.b16 %v699
    %v2149 = vunpack.c.h.b16 %v699
    %v2150 = vunpack.c.l.b16 %v700
    %v2151 = vunpack.c.h.b16 %v700
    %v2152 = vunpack.c.l.b16 %v701
    %v2153 = vunpack.c.h.b16 %v701
    %v2154 = vunpack.c.l.b16 %v702
    %v2155 = vunpack.c.h.b16 %v702
    %v2156 = vunpack.c.l.b16 %v703
    %v2157 = vunpack.c.h.b16 %v703
    %v2158 = vunpack.c.l.b16 %v704
    %v2159 = vunpack.c.h.b16 %v704
    %v2160 = vunpack.c.l.b16 %v705
    %v2161 = vunpack.c.h.b16 %v705
    %v2162 = vunpack.c.l.b16 %v706
    %v2163 = vunpack.c.h.b16 %v706
    %v2164 = vunpack.c.l.b16 %v707
    %v2165 = vunpack.c.h.b16 %v707
    %v2166 = vunpack.c.l.b16 %v708
    %v2167 = vunpack.c.h.b16 %v708
    %v2168 = vunpack.c.l.b16 %v709
    %v2169 = vunpack.c.h.b16 %v709
    %v2170 = vunpack.c.l.b16 %v710
    %v2171 = vunpack.c.h.b16 %v710
    %v2172 = vunpack.c.l.b16 %v711
    %v2173 = vunpack.c.h.b16 %v711
    %v2174 = vunpack.c.l.b16 %v712
    %v2175 = vunpack.c.h.b16 %v712
    %v2176 = vunpack.c.l.b16 %v713
    %v2177 = vunpack.c.h.b16 %v713
    %v2178 = vunpack.c.l.b16 %v714
    %v2179 = vunpack.c.h.b16 %v714
    %v2180 = vunpack.c.l.b16 %v715
    %v2181 = vunpack.c.h.b16 %v715
    %v2182 = vunpack.c.l.b16 %v716
    %v2183 = vunpack.c.h.b16 %v716
    %v2184 = vunpack.c.l.b16 %v717
    %v2185 = vunpack.c.h.b16 %v717
    %v2186 = vunpack.c.l.b16 %v718
    %v2187 = vunpack.c.h.b16 %v718
    %v2188 = vunpack.c.l.b16 %v719
    %v2189 = vunpack.c.h.b16 %v719
    %v2190 = vunpack.c.l.b16 %v720
    %v2191 = vunpack.c.h.b16 %v720
    %v2192 = vunpack.c.l.b16 %v721
    %v2193 = vunpack.c.h.b16 %v721
    %v2194 = vunpack.c.l.b16 %v722
    %v2195 = vunpack.c.h.b16 %v722
    %v2196 = vunpack.c.l.b16 %v723
    %v2197 = vunpack.c.h.b16 %v723
    %v2198 = vunpack.c.l.b16 %v724
    %v2199 = vunpack.c.h.b16 %v724
    %v2200 = vunpack.c.l.b16 %v725
    %v2201 = vunpack.c.h.b16 %v725
    %v2202 = vunpack.c.l.b16 %v726
    %v2203 = vunpack.c.h.b16 %v726
    %v2204 = vunpack.c.l.b16 %v727
    %v2205 = vunpack.c.h.b16 %v727
    %v2206 = vunpack.c.l.b16 %v728
    %v2207 = vunpack.c.h.b16 %v728
    %v2208 = vunpack.c.l.b16 %v729
    %v2209 = vunpack.c.h.b16 %v729
    %v2210 = vunpack.c.l.b16 %v730
    %v2211 = vunpack.c.h.b16 %v730
    %v2212 = vunpack.c.l.b16 %v731
    %v2213 = vunpack.c.h.b16 %v731
    %v2214 = vunpack.c.l.b16 %v732
    %v2215 = vunpack.c.h.b16 %v732
    %v2216 = vunpack.c.l.b16 %v733
    %v2217 = vunpack.c.h.b16 %v733
    %v2218 = vunpack.c.l.b16 %v734
    %v2219 = vunpack.c.h.b16 %v734
    %v2220 = vunpack.c.l.b16 %v735
    %v2221 = vunpack.c.h.b16 %v735
    %v2222 = vunpack.c.l.b16 %v736
    %v2223 = vunpack.c.h.b16 %v736
    %v2224 = vunpack.c.l.b16 %v737
    %v2225 = vunpack.c.h.b16 %v737
    %v2226 = vunpack.c.l.b16 %v738
    %v2227 = vunpack.c.h.b16 %v738
    %v2228 = vunpack.c.l.b16 %v739
    %v2229 = vunpack.c.h.b16 %v739
    %v2230 = vunpack.c.l.b16 %v740
    %v2231 = vunpack.c.h.b16 %v740
    %v2232 = vunpack.c.l.b16 %v741
    %v2233 = vunpack.c.h.b16 %v741
    %v2234 = vunpack.c.l.b16 %v742
    %v2235 = vunpack.c.h.b16 %v742
    %v2236 = vunpack.c.l.b16 %v743
    %v2237 = vunpack.c.h.b16 %v743
    %v2238 = vunpack.c.l.b16 %v744
    %v2239 = vunpack.c.h.b16 %v744
    %v2240 = vunpack.c.l.b16 %v745
    %v2241 = vunpack.c.h.b16 %v745
    %v2242 = vunpack.c.l.b16 %v746
    %v2243 = vunpack.c.h.b16 %v746
    %v2244 = vunpack.c.l.b16 %v747
    %v2245 = vunpack.c.h.b16 %v747
    %v2246 = vunpack.c.l.b16 %v748
    %v2247 = vunpack.c.h.b16 %v748
    %v2248 = vunpack.c.l.b16 %v749
    %v2249 = vunpack.c.h.b16 %v749
    %v2250 = vunpack.c.l.b16 %v750
    %v2251 = vunpack.c.h.b16 %v750
    %v2252 = vunpack.c.l.b16 %v751
    %v2253 = vunpack.c.h.b16 %v751
    %v2254 = vunpack.c.l.b16 %v752
    %v2255 = vunpack.c.h.b16 %v752
    %v2256 = vunpack.c.l.b16 %v753
    %v2257 = vunpack.c.h.b16 %v753
    %v2258 = vunpack.c.l.b16 %v754
    %v2259 = vunpack.c.h.b16 %v754
    %v2260 = vunpack.c.l.b16 %v755
    %v2261 = vunpack.c.h.b16 %v755
    %v2262 = vunpack.c.l.b16 %v756
    %v2263 = vunpack.c.h.b16 %v756
    %v2264 = vunpack.c.l.b16 %v757
    %v2265 = vunpack.c.h.b16 %v757
    %v2266 = vunpack.c.l.b16 %v758
    %v2267 = vunpack.c.h.b16 %v758
    %v2268 = vunpack.c.l.b16 %v759
    %v2269 = vunpack.c.h.b16 %v759
    %v2270 = vunpack.c.l.b16 %v760
    %v2271 = vunpack.c.h.b16 %v760
    %v2272 = vunpack.c.l.b16 %v761
    %v2273 = vunpack.c.h.b16 %v761
    %v2274 = vunpack.c.l.b16 %v762
    %v2275 = vunpack.c.h.b16 %v762
    %v2276 = vunpack.c.l.b16 %v763
    %v2277 = vunpack.c.h.b16 %v763
    %v2278 = vunpack.c.l.b16 %v764
    %v2279 = vunpack.c.h.b16 %v764
    %v2280 = vunpack.c.l.b16 %v765
    %v2281 = vunpack.c.h.b16 %v765
    %v2282 = vunpack.c.l.b16 %v766
    %v2283 = vunpack.c.h.b16 %v766
    %v2284 = vunpack.c.l.b16 %v767
    %v2285 = vunpack.c.h.b16 %v767
    %v2286 = vunpack.c.l.b16 %v768
    %v2287 = vunpack.c.h.b16 %v768
    %v2288 = vunpack.c.l.b16 %v769
    %v2289 = vunpack.c.h.b16 %v769
    %v2290 = vunpack.c.l.b16 %v770
    %v2291 = vunpack.c.h.b16 %v770
    %v2292 = vunpack.c.l.b16 %v771
    %v2293 = vunpack.c.h.b16 %v771
    %v2294 = vunpack.c.l.b16 %v772
    %v2295 = vunpack.c.h.b16 %v772
    %v2296 = vunpack.c.l.b16 %v773
    %v2297 = vunpack.c.h.b16 %v773
    %v2298 = vunpack.c.l.b16 %v774
    %v2299 = vunpack.c.h.b16 %v774
    %v2300 = vunpack.c.l.b16 %v775
    %v2301 = vunpack.c.h.b16 %v775
    %v2302 = vunpack.c.l.b16 %v776
    %v2303 = vunpack.c.h.b16 %v776
    %v2304 = vunpack.c.l.b16 %v777
    %v2305 = vunpack.c.h.b16 %v777
    %v2306 = vunpack.c.l.b16 %v778
    %v2307 = vunpack.c.h.b16 %v778
    %v2308 = vunpack.c.l.b16 %v779
    %v2309 = vunpack.c.h.b16 %v779
    %v2310 = vunpack.c.l.b16 %v780
    %v2311 = vunpack.c.h.b16 %v780
    %v2312 = vunpack.c.l.b16 %v781
    %v2313 = vunpack.c.h.b16 %v781
    %v2314 = vunpack.c.l.b16 %v782
    %v2315 = vunpack.c.h.b16 %v782
    %v2316 = vunpack.c.l.b16 %v783
    %v2317 = vunpack.c.h.b16 %v783
    %v2318 = vunpack.c.l.b16 %v784
    %v2319 = vunpack.c.h.b16 %v784
    %v2320 = vunpack.c.l.b16 %v785
    %v2321 = vunpack.c.h.b16 %v785
    %v2322 = vunpack.c.l.b16 %v786
    %v2323 = vunpack.c.h.b16 %v786
    %v2324 = vunpack.c.l.b16 %v787
    %v2325 = vunpack.c.h.b16 %v787
    %v2326 = vunpack.c.l.b16 %v788
    %v2327 = vunpack.c.h.b16 %v788
    %v2328 = vunpack.c.l.b16 %v789
    %v2329 = vunpack.c.h.b16 %v789
    %v2330 = vunpack.c.l.b16 %v790
    %v2331 = vunpack.c.h.b16 %v790
    %v2332 = vunpack.c.l.b16 %v791
    %v2333 = vunpack.c.h.b16 %v791
    %v2334 = vunpack.c.l.b16 %v792
    %v2335 = vunpack.c.h.b16 %v792
    %v2336 = vunpack.c.l.b16 %v793
    %v2337 = vunpack.c.h.b16 %v793
    %v2338 = vunpack.c.l.b16 %v794
    %v2339 = vunpack.c.h.b16 %v794
    %v2340 = vunpack.c.l.b16 %v795
    %v2341 = vunpack.c.h.b16 %v795
    %v2342 = vunpack.c.l.b16 %v796
    %v2343 = vunpack.c.h.b16 %v796
    %v2344 = vunpack.c.l.b16 %v797
    %v2345 = vunpack.c.h.b16 %v797
    %v2346 = vunpack.c.l.b16 %v798
    %v2347 = vunpack.c.h.b16 %v798
    %v2348 = vunpack.c.l.b16 %v799
    %v2349 = vunpack.c.h.b16 %v799
    %v2350 = vunpack.c.l.b16 %v800
    %v2351 = vunpack.c.h.b16 %v800
    %v2352 = vunpack.c.l.b16 %v801
    %v2353 = vunpack.c.h.b16 %v801
    %v2354 = vunpack.c.l.b16 %v802
    %v2355 = vunpack.c.h.b16 %v802
    %v2356 = vunpack.c.l.b16 %v803
    %v2357 = vunpack.c.h.b16 %v803
    %v2358 = vunpack.c.l.b16 %v804
    %v2359 = vunpack.c.h.b16 %v804
    %v2360 = vunpack.c.l.b16 %v805
    %v2361 = vunpack.c.h.b16 %v805
    %v2362 = vunpack.c.l.b16 %v806
    %v2363 = vunpack.c.h.b16 %v806
    %v2364 = vunpack.c.l.b16 %v807
    %v2365 = vunpack.c.h.b16 %v807
    %v2366 = vunpack.c.l.b16 %v808
    %v2367 = vunpack.c.h.b16 %v808
    %v2368 = vunpack.c.l.b16 %v809
    %v2369 = vunpack.c.h.b16 %v809
    %v2370 = vunpack.c.l.b16 %v810
    %v2371 = vunpack.c.h.b16 %v810
    %v2372 = vunpack.c.l.b16 %v811
    %v2373 = vunpack.c.h.b16 %v811
    %v2374 = vunpack.c.l.b16 %v812
    %v2375 = vunpack.c.h.b16 %v812
    %v2376 = vunpack.c.l.b16 %v813
    %v2377 = vunpack.c.h.b16 %v813
    %v2378 = vunpack.c.l.b16 %v814
    %v2379 = vunpack.c.h.b16 %v814
    %v2380 = vunpack.c.l.b16 %v815
    %v2381 = vunpack.c.h.b16 %v815
    %v2382 = vunpack.c.l.b16 %v816
    %v2383 = vunpack.c.h.b16 %v816
    %v2384 = vunpack.c.l.b16 %v817
    %v2385 = vunpack.c.h.b16 %v817
    %v2386 = vunpack.c.l.b16 %v818
    %v2387 = vunpack.c.h.b16 %v818
    %v2388 = vunpack.c.l.b16 %v819
    %v2389 = vunpack.c.h.b16 %v819
    %v2390 = vunpack.c.l.b16 %v820
    %v2391 = vunpack.c.h.b16 %v820
    %v2392 = vunpack.c.l.b16 %v821
    %v2393 = vunpack.c.h.b16 %v821
    %v2394 = vunpack.c.l.b16 %v822
    %v2395 = vunpack.c.h.b16 %v822
    %v2396 = vunpack.c.l.b16 %v823
    %v2397 = vunpack.c.h.b16 %v823
    %v2398 = vunpack.c.l.b16 %v824
    %v2399 = vunpack.c.h.b16 %v824
    %v2400 = vunpack.c.l.b16 %v825
    %v2401 = vunpack.c.h.b16 %v825
    %v2402 = vunpack.c.l.b16 %v826
    %v2403 = vunpack.c.h.b16 %v826
    %v2404 = vunpack.c.l.b16 %v827
    %v2405 = vunpack.c.h.b16 %v827
    %v2406 = vpack.c.b16 %v1390, %v1382
    %v2407 = vpack.c.b16 %v1391, %v1383
    %v2408 = vpack.c.b16 %v1392, %v1384
    %v2409 = vpack.c.b16 %v1393, %v1385
    %v2410 = vpack.c.b16 %v1394, %v1386
    %v2411 = vpack.c.b16 %v1395, %v1387
    %v2412 = vpack.c.b16 %v1396, %v1388
    %v2413 = vpack.c.b16 %v1397, %v1389
    %v2414 = vpack.c.b16 %v1406, %v1398
    %v2415 = vpack.c.b16 %v1407, %v1399
    %v2416 = vpack.c.b16 %v1408, %v1400
    %v2417 = vpack.c.b16 %v1409, %v1401
    %v2418 = vpack.c.b16 %v1410, %v1402
    %v2419 = vpack.c.b16 %v1411, %v1403
    %v2420 = vpack.c.b16 %v1412, %v1404
    %v2421 = vpack.c.b16 %v1413, %v1405
    %v2422 = vpack.c.b16 %v1422, %v1414
    %v2423 = vpack.c.b16 %v1423, %v1415
    %v2424 = vpack.c.b16 %v1424, %v1416
    %v2425 = vpack.c.b16 %v1425, %v1417
    %v2426 = vpack.c.b16 %v1426, %v1418
    %v2427 = vpack.c.b16 %v1427, %v1419
    %v2428 = vpack.c.b16 %v1428, %v1420
    %v2429 = vpack.c.b16 %v1429, %v1421
    %v2430 = vpack.c.b16 %v1438, %v1430
    %v2431 = vpack.c.b16 %v1439, %v1431
    %v2432 = vpack.c.b16 %v1440, %v1432
    %v2433 = vpack.c.b16 %v1441, %v1433
    %v2434 = vpack.c.b16 %v1442, %v1434
    %v2435 = vpack.c.b16 %v1443, %v1435
    %v2436 = vpack.c.b16 %v1444, %v1436
    %v2437 = vpack.c.b16 %v1445, %v1437
    %v2438 = vpack.c.b16 %v1454, %v1446
    %v2439 = vpack.c.b16 %v1455, %v1447
    %v2440 = vpack.c.b16 %v1456, %v1448
    %v2441 = vpack.c.b16 %v1457, %v1449
    %v2442 = vpack.c.b16 %v1458, %v1450
    %v2443 = vpack.c.b16 %v1459, %v1451
    %v2444 = vpack.c.b16 %v1460, %v1452
    %v2445 = vpack.c.b16 %v1461, %v1453
    %v2446 = vpack.c.b16 %v1470, %v1462
    %v2447 = vpack.c.b16 %v1471, %v1463
    %v2448 = vpack.c.b16 %v1472, %v1464
    %v2449 = vpack.c.b16 %v1473, %v1465
    %v2450 = vpack.c.b16 %v1474, %v1466
    %v2451 = vpack.c.b16 %v1475, %v1467
    %v2452 = vpack.c.b16 %v1476, %v1468
    %v2453 = vpack.c.b16 %v1477, %v1469
    %v2454 = vpack.c.b16 %v1486, %v1478
    %v2455 = vpack.c.b16 %v1487, %v1479
    %v2456 = vpack.c.b16 %v1488, %v1480
    %v2457 = vpack.c.b16 %v1489, %v1481
    %v2458 = vpack.c.b16 %v1490, %v1482
    %v2459 = vpack.c.b16 %v1491, %v1483
    %v2460 = vpack.c.b16 %v1492, %v1484
    %v2461 = vpack.c.b16 %v1493, %v1485
    %v2462 = vpack.c.b16 %v1502, %v1494
    %v2463 = vpack.c.b16 %v1503, %v1495
    %v2464 = vpack.c.b16 %v1504, %v1496
    %v2465 = vpack.c.b16 %v1505, %v1497
    %v2466 = vpack.c.b16 %v1506, %v1498
    %v2467 = vpack.c.b16 %v1507, %v1499
    %v2468 = vpack.c.b16 %v1508, %v1500
    %v2469 = vpack.c.b16 %v1509, %v1501
    %v2470 = vpack.c.b16 %v1518, %v1510
    %v2471 = vpack.c.b16 %v1519, %v1511
    %v2472 = vpack.c.b16 %v1520, %v1512
    %v2473 = vpack.c.b16 %v1521, %v1513
    %v2474 = vpack.c.b16 %v1522, %v1514
    %v2475 = vpack.c.b16 %v1523, %v1515
    %v2476 = vpack.c.b16 %v1524, %v1516
    %v2477 = vpack.c.b16 %v1525, %v1517
    %v2478 = vpack.c.b16 %v1534, %v1526
    %v2479 = vpack.c.b16 %v1535, %v1527
    %v2480 = vpack.c.b16 %v1536, %v1528
    %v2481 = vpack.c.b16 %v1537, %v1529
    %v2482 = vpack.c.b16 %v1538, %v1530
    %v2483 = vpack.c.b16 %v1539, %v1531
    %v2484 = vpack.c.b16 %v1540, %v1532
    %v2485 = vpack.c.b16 %v1541, %v1533
    %v2486 = vpack.c.b16 %v1550, %v1542
    %v2487 = vpack.c.b16 %v1551, %v1543
    %v2488 = vpack.c.b16 %v1552, %v1544
    %v2489 = vpack.c.b16 %v1553, %v1545
    %v2490 = vpack.c.b16 %v1554, %v1546
    %v2491 = vpack.c.b16 %v1555, %v1547
    %v2492 = vpack.c.b16 %v1556, %v1548
    %v2493 = vpack.c.b16 %v1557, %v1549
    %v2494 = vpack.c.b16 %v1566, %v1558
    %v2495 = vpack.c.b16 %v1567, %v1559
    %v2496 = vpack.c.b16 %v1568, %v1560
    %v2497 = vpack.c.b16 %v1569, %v1561
    %v2498 = vpack.c.b16 %v1570, %v1562
    %v2499 = vpack.c.b16 %v1571, %v1563
    %v2500 = vpack.c.b16 %v1572, %v1564
    %v2501 = vpack.c.b16 %v1573, %v1565
    %v2502 = vpack.c.b16 %v1582, %v1574
    %v2503 = vpack.c.b16 %v1583, %v1575
    %v2504 = vpack.c.b16 %v1584, %v1576
    %v2505 = vpack.c.b16 %v1585, %v1577
    %v2506 = vpack.c.b16 %v1586, %v1578
    %v2507 = vpack.c.b16 %v1587, %v1579
    %v2508 = vpack.c.b16 %v1588, %v1580
    %v2509 = vpack.c.b16 %v1589, %v1581
    %v2510 = vpack.c.b16 %v1598, %v1590
    %v2511 = vpack.c.b16 %v1599, %v1591
    %v2512 = vpack.c.b16 %v1600, %v1592
    %v2513 = vpack.c.b16 %v1601, %v1593
    %v2514 = vpack.c.b16 %v1602, %v1594
    %v2515 = vpack.c.b16 %v1603, %v1595
    %v2516 = vpack.c.b16 %v1604, %v1596
    %v2517 = vpack.c.b16 %v1605, %v1597
    %v2518 = vpack.c.b16 %v1614, %v1606
    %v2519 = vpack.c.b16 %v1615, %v1607
    %v2520 = vpack.c.b16 %v1616, %v1608
    %v2521 = vpack.c.b16 %v1617, %v1609
    %v2522 = vpack.c.b16 %v1618, %v1610
    %v2523 = vpack.c.b16 %v1619, %v1611
    %v2524 = vpack.c.b16 %v1620, %v1612
    %v2525 = vpack.c.b16 %v1621, %v1613
    %v2526 = vpack.c.b16 %v1630, %v1622
    %v2527 = vpack.c.b16 %v1631, %v1623
    %v2528 = vpack.c.b16 %v1632, %v1624
    %v2529 = vpack.c.b16 %v1633, %v1625
    %v2530 = vpack.c.b16 %v1634, %v1626
    %v2531 = vpack.c.b16 %v1635, %v1627
    %v2532 = vpack.c.b16 %v1636, %v1628
    %v2533 = vpack.c.b16 %v1637, %v1629
    %v2534 = vpack.c.b16 %v1646, %v1638
    %v2535 = vpack.c.b16 %v1647, %v1639
    %v2536 = vpack.c.b16 %v1648, %v1640
    %v2537 = vpack.c.b16 %v1649, %v1641
    %v2538 = vpack.c.b16 %v1650, %v1642
    %v2539 = vpack.c.b16 %v1651, %v1643
    %v2540 = vpack.c.b16 %v1652, %v1644
    %v2541 = vpack.c.b16 %v1653, %v1645
    %v2542 = vpack.c.b16 %v1662, %v1654
    %v2543 = vpack.c.b16 %v1663, %v1655
    %v2544 = vpack.c.b16 %v1664, %v1656
    %v2545 = vpack.c.b16 %v1665, %v1657
    %v2546 = vpack.c.b16 %v1666, %v1658
    %v2547 = vpack.c.b16 %v1667, %v1659
    %v2548 = vpack.c.b16 %v1668, %v1660
    %v2549 = vpack.c.b16 %v1669, %v1661
    %v2550 = vpack.c.b16 %v1678, %v1670
    %v2551 = vpack.c.b16 %v1679, %v1671
    %v2552 = vpack.c.b16 %v1680, %v1672
    %v2553 = vpack.c.b16 %v1681, %v1673
    %v2554 = vpack.c.b16 %v1682, %v1674
    %v2555 = vpack.c.b16 %v1683, %v1675
    %v2556 = vpack.c.b16 %v1684, %v1676
    %v2557 = vpack.c.b16 %v1685, %v1677
    %v2558 = vpack.c.b16 %v1694, %v1686
    %v2559 = vpack.c.b16 %v1695, %v1687
    %v2560 = vpack.c.b16 %v1696, %v1688
    %v2561 = vpack.c.b16 %v1697, %v1689
    %v2562 = vpack.c.b16 %v1698, %v1690
    %v2563 = vpack.c.b16 %v1699, %v1691
    %v2564 = vpack.c.b16 %v1700, %v1692
    %v2565 = vpack.c.b16 %v1701, %v1693
    %v2566 = vpack.c.b16 %v1710, %v1702
    %v2567 = vpack.c.b16 %v1711, %v1703
    %v2568 = vpack.c.b16 %v1712, %v1704
    %v2569 = vpack.c.b16 %v1713, %v1705
    %v2570 = vpack.c.b16 %v1714, %v1706
    %v2571 = vpack.c.b16 %v1715, %v1707
    %v2572 = vpack.c.b16 %v1716, %v1708
    %v2573 = vpack.c.b16 %v1717, %v1709
    %v2574 = vpack.c.b16 %v1726, %v1718
    %v2575 = vpack.c.b16 %v1727, %v1719
    %v2576 = vpack.c.b16 %v1728, %v1720
    %v2577 = vpack.c.b16 %v1729, %v1721
    %v2578 = vpack.c.b16 %v1730, %v1722
    %v2579 = vpack.c.b16 %v1731, %v1723
    %v2580 = vpack.c.b16 %v1732, %v1724
    %v2581 = vpack.c.b16 %v1733, %v1725
    %v2582 = vpack.c.b16 %v1742, %v1734
    %v2583 = vpack.c.b16 %v1743, %v1735
    %v2584 = vpack.c.b16 %v1744, %v1736
    %v2585 = vpack.c.b16 %v1745, %v1737
    %v2586 = vpack.c.b16 %v1746, %v1738
    %v2587 = vpack.c.b16 %v1747, %v1739
    %v2588 = vpack.c.b16 %v1748, %v1740
    %v2589 = vpack.c.b16 %v1749, %v1741
    %v2590 = vpack.c.b16 %v1758, %v1750
    %v2591 = vpack.c.b16 %v1759, %v1751
    %v2592 = vpack.c.b16 %v1760, %v1752
    %v2593 = vpack.c.b16 %v1761, %v1753
    %v2594 = vpack.c.b16 %v1762, %v1754
    %v2595 = vpack.c.b16 %v1763, %v1755
    %v2596 = vpack.c.b16 %v1764, %v1756
    %v2597 = vpack.c.b16 %v1765, %v1757
    %v2598 = vpack.c.b16 %v1774, %v1766
    %v2599 = vpack.c.b16 %v1775, %v1767
    %v2600 = vpack.c.b16 %v1776, %v1768
    %v2601 = vpack.c.b16 %v1777, %v1769
    %v2602 = vpack.c.b16 %v1778, %v1770
    %v2603 = vpack.c.b16 %v1779, %v1771
    %v2604 = vpack.c.b16 %v1780, %v1772
    %v2605 = vpack.c.b16 %v1781, %v1773
    %v2606 = vpack.c.b16 %v1790, %v1782
    %v2607 = vpack.c.b16 %v1791, %v1783
    %v2608 = vpack.c.b16 %v1792, %v1784
    %v2609 = vpack.c.b16 %v1793, %v1785
    %v2610 = vpack.c.b16 %v1794, %v1786
    %v2611 = vpack.c.b16 %v1795, %v1787
    %v2612 = vpack.c.b16 %v1796, %v1788
    %v2613 = vpack.c.b16 %v1797, %v1789
    %v2614 = vpack.c.b16 %v1806, %v1798
    %v2615 = vpack.c.b16 %v1807, %v1799
    %v2616 = vpack.c.b16 %v1808, %v1800
    %v2617 = vpack.c.b16 %v1809, %v1801
    %v2618 = vpack.c.b16 %v1810, %v1802
    %v2619 = vpack.c.b16 %v1811, %v1803
    %v2620 = vpack.c.b16 %v1812, %v1804
    %v2621 = vpack.c.b16 %v1813, %v1805
    %v2622 = vpack.c.b16 %v1822, %v1814
    %v2623 = vpack.c.b16 %v1823, %v1815
    %v2624 = vpack.c.b16 %v1824, %v1816
    %v2625 = vpack.c.b16 %v1825, %v1817
    %v2626 = vpack.c.b16 %v1826, %v1818
    %v2627 = vpack.c.b16 %v1827, %v1819
    %v2628 = vpack.c.b16 %v1828, %v1820
    %v2629 = vpack.c.b16 %v1829, %v1821
    %v2630 = vpack.c.b16 %v1838, %v1830
    %v2631 = vpack.c.b16 %v1839, %v1831
    %v2632 = vpack.c.b16 %v1840, %v1832
    %v2633 = vpack.c.b16 %v1841, %v1833
    %v2634 = vpack.c.b16 %v1842, %v1834
    %v2635 = vpack.c.b16 %v1843, %v1835
    %v2636 = vpack.c.b16 %v1844, %v1836
    %v2637 = vpack.c.b16 %v1845, %v1837
    %v2638 = vpack.c.b16 %v1854, %v1846
    %v2639 = vpack.c.b16 %v1855, %v1847
    %v2640 = vpack.c.b16 %v1856, %v1848
    %v2641 = vpack.c.b16 %v1857, %v1849
    %v2642 = vpack.c.b16 %v1858, %v1850
    %v2643 = vpack.c.b16 %v1859, %v1851
    %v2644 = vpack.c.b16 %v1860, %v1852
    %v2645 = vpack.c.b16 %v1861, %v1853
    %v2646 = vpack.c.b16 %v1870, %v1862
    %v2647 = vpack.c.b16 %v1871, %v1863
    %v2648 = vpack.c.b16 %v1872, %v1864
    %v2649 = vpack.c.b16 %v1873, %v1865
    %v2650 = vpack.c.b16 %v1874, %v1866
    %v2651 = vpack.c.b16 %v1875, %v1867
    %v2652 = vpack.c.b16 %v1876, %v1868
    %v2653 = vpack.c.b16 %v1877, %v1869
    %v2654 = vpack.c.b16 %v1886, %v1878
    %v2655 = vpack.c.b16 %v1887, %v1879
    %v2656 = vpack.c.b16 %v1888, %v1880
    %v2657 = vpack.c.b16 %v1889, %v1881
    %v2658 = vpack.c.b16 %v1890, %v1882
    %v2659 = vpack.c.b16 %v1891, %v1883
    %v2660 = vpack.c.b16 %v1892, %v1884
    %v2661 = vpack.c.b16 %v1893, %v1885
    %v2662 = vpack.c.b16 %v1902, %v1894
    %v2663 = vpack.c.b16 %v1903, %v1895
    %v2664 = vpack.c.b16 %v1904, %v1896
    %v2665 = vpack.c.b16 %v1905, %v1897
    %v2666 = vpack.c.b16 %v1906, %v1898
    %v2667 = vpack.c.b16 %v1907, %v1899
    %v2668 = vpack.c.b16 %v1908, %v1900
    %v2669 = vpack.c.b16 %v1909, %v1901
    %v2670 = vpack.c.b16 %v1918, %v1910
    %v2671 = vpack.c.b16 %v1919, %v1911
    %v2672 = vpack.c.b16 %v1920, %v1912
    %v2673 = vpack.c.b16 %v1921, %v1913
    %v2674 = vpack.c.b16 %v1922, %v1914
    %v2675 = vpack.c.b16 %v1923, %v1915
    %v2676 = vpack.c.b16 %v1924, %v1916
    %v2677 = vpack.c.b16 %v1925, %v1917
    %v2678 = vpack.c.b16 %v1934, %v1926
    %v2679 = vpack.c.b16 %v1935, %v1927
    %v2680 = vpack.c.b16 %v1936, %v1928
    %v2681 = vpack.c.b16 %v1937, %v1929
    %v2682 = vpack.c.b16 %v1938, %v1930
    %v2683 = vpack.c.b16 %v1939, %v1931
    %v2684 = vpack.c.b16 %v1940, %v1932
    %v2685 = vpack.c.b16 %v1941, %v1933
    %v2686 = vpack.c.b16 %v1950, %v1942
    %v2687 = vpack.c.b16 %v1951, %v1943
    %v2688 = vpack.c.b16 %v1952, %v1944
    %v2689 = vpack.c.b16 %v1953, %v1945
    %v2690 = vpack.c.b16 %v1954, %v1946
    %v2691 = vpack.c.b16 %v1955, %v1947
    %v2692 = vpack.c.b16 %v1956, %v1948
    %v2693 = vpack.c.b16 %v1957, %v1949
    %v2694 = vpack.c.b16 %v1966, %v1958
    %v2695 = vpack.c.b16 %v1967, %v1959
    %v2696 = vpack.c.b16 %v1968, %v1960
    %v2697 = vpack.c.b16 %v1969, %v1961
    %v2698 = vpack.c.b16 %v1970, %v1962
    %v2699 = vpack.c.b16 %v1971, %v1963
    %v2700 = vpack.c.b16 %v1972, %v1964
    %v2701 = vpack.c.b16 %v1973, %v1965
    %v2702 = vpack.c.b16 %v1982, %v1974
    %v2703 = vpack.c.b16 %v1983, %v1975
    %v2704 = vpack.c.b16 %v1984, %v1976
    %v2705 = vpack.c.b16 %v1985, %v1977
    %v2706 = vpack.c.b16 %v1986, %v1978
    %v2707 = vpack.c.b16 %v1987, %v1979
    %v2708 = vpack.c.b16 %v1988, %v1980
    %v2709 = vpack.c.b16 %v1989, %v1981
    %v2710 = vpack.c.b16 %v1998, %v1990
    %v2711 = vpack.c.b16 %v1999, %v1991
    %v2712 = vpack.c.b16 %v2000, %v1992
    %v2713 = vpack.c.b16 %v2001, %v1993
    %v2714 = vpack.c.b16 %v2002, %v1994
    %v2715 = vpack.c.b16 %v2003, %v1995
    %v2716 = vpack.c.b16 %v2004, %v1996
    %v2717 = vpack.c.b16 %v2005, %v1997
    %v2718 = vpack.c.b16 %v2014, %v2006
    %v2719 = vpack.c.b16 %v2015, %v2007
    %v2720 = vpack.c.b16 %v2016, %v2008
    %v2721 = vpack.c.b16 %v2017, %v2009
    %v2722 = vpack.c.b16 %v2018, %v2010
    %v2723 = vpack.c.b16 %v2019, %v2011
    %v2724 = vpack.c.b16 %v2020, %v2012
    %v2725 = vpack.c.b16 %v2021, %v2013
    %v2726 = vpack.c.b16 %v2030, %v2022
    %v2727 = vpack.c.b16 %v2031, %v2023
    %v2728 = vpack.c.b16 %v2032, %v2024
    %v2729 = vpack.c.b16 %v2033, %v2025
    %v2730 = vpack.c.b16 %v2034, %v2026
    %v2731 = vpack.c.b16 %v2035, %v2027
    %v2732 = vpack.c.b16 %v2036, %v2028
    %v2733 = vpack.c.b16 %v2037, %v2029
    %v2734 = vpack.c.b16 %v2046, %v2038
    %v2735 = vpack.c.b16 %v2047, %v2039
    %v2736 = vpack.c.b16 %v2048, %v2040
    %v2737 = vpack.c.b16 %v2049, %v2041
    %v2738 = vpack.c.b16 %v2050, %v2042
    %v2739 = vpack.c.b16 %v2051, %v2043
    %v2740 = vpack.c.b16 %v2052, %v2044
    %v2741 = vpack.c.b16 %v2053, %v2045
    %v2742 = vpack.c.b16 %v2062, %v2054
    %v2743 = vpack.c.b16 %v2063, %v2055
    %v2744 = vpack.c.b16 %v2064, %v2056
    %v2745 = vpack.c.b16 %v2065, %v2057
    %v2746 = vpack.c.b16 %v2066, %v2058
    %v2747 = vpack.c.b16 %v2067, %v2059
    %v2748 = vpack.c.b16 %v2068, %v2060
    %v2749 = vpack.c.b16 %v2069, %v2061
    %v2750 = vpack.c.b16 %v2078, %v2070
    %v2751 = vpack.c.b16 %v2079, %v2071
    %v2752 = vpack.c.b16 %v2080, %v2072
    %v2753 = vpack.c.b16 %v2081, %v2073
    %v2754 = vpack.c.b16 %v2082, %v2074
    %v2755 = vpack.c.b16 %v2083, %v2075
    %v2756 = vpack.c.b16 %v2084, %v2076
    %v2757 = vpack.c.b16 %v2085, %v2077
    %v2758 = vpack.c.b16 %v2094, %v2086
    %v2759 = vpack.c.b16 %v2095, %v2087
    %v2760 = vpack.c.b16 %v2096, %v2088
    %v2761 = vpack.c.b16 %v2097, %v2089
    %v2762 = vpack.c.b16 %v2098, %v2090
    %v2763 = vpack.c.b16 %v2099, %v2091
    %v2764 = vpack.c.b16 %v2100, %v2092
    %v2765 = vpack.c.b16 %v2101, %v2093
    %v2766 = vpack.c.b16 %v2110, %v2102
    %v2767 = vpack.c.b16 %v2111, %v2103
    %v2768 = vpack.c.b16 %v2112, %v2104
    %v2769 = vpack.c.b16 %v2113, %v2105
    %v2770 = vpack.c.b16 %v2114, %v2106
    %v2771 = vpack.c.b16 %v2115, %v2107
    %v2772 = vpack.c.b16 %v2116, %v2108
    %v2773 = vpack.c.b16 %v2117, %v2109
    %v2774 = vpack.c.b16 %v2126, %v2118
    %v2775 = vpack.c.b16 %v2127, %v2119
    %v2776 = vpack.c.b16 %v2128, %v2120
    %v2777 = vpack.c.b16 %v2129, %v2121
    %v2778 = vpack.c.b16 %v2130, %v2122
    %v2779 = vpack.c.b16 %v2131, %v2123
    %v2780 = vpack.c.b16 %v2132, %v2124
    %v2781 = vpack.c.b16 %v2133, %v2125
    %v2782 = vpack.c.b16 %v2142, %v2134
    %v2783 = vpack.c.b16 %v2143, %v2135
    %v2784 = vpack.c.b16 %v2144, %v2136
    %v2785 = vpack.c.b16 %v2145, %v2137
    %v2786 = vpack.c.b16 %v2146, %v2138
    %v2787 = vpack.c.b16 %v2147, %v2139
    %v2788 = vpack.c.b16 %v2148, %v2140
    %v2789 = vpack.c.b16 %v2149, %v2141
    %v2790 = vpack.c.b16 %v2158, %v2150
    %v2791 = vpack.c.b16 %v2159, %v2151
    %v2792 = vpack.c.b16 %v2160, %v2152
    %v2793 = vpack.c.b16 %v2161, %v2153
    %v2794 = vpack.c.b16 %v2162, %v2154
    %v2795 = vpack.c.b16 %v2163, %v2155
    %v2796 = vpack.c.b16 %v2164, %v2156
    %v2797 = vpack.c.b16 %v2165, %v2157
    %v2798 = vpack.c.b16 %v2174, %v2166
    %v2799 = vpack.c.b16 %v2175, %v2167
    %v2800 = vpack.c.b16 %v2176, %v2168
    %v2801 = vpack.c.b16 %v2177, %v2169
    %v2802 = vpack.c.b16 %v2178, %v2170
    %v2803 = vpack.c.b16 %v2179, %v2171
    %v2804 = vpack.c.b16 %v2180, %v2172
    %v2805 = vpack.c.b16 %v2181, %v2173
    %v2806 = vpack.c.b16 %v2190, %v2182
    %v2807 = vpack.c.b16 %v2191, %v2183
    %v2808 = vpack.c.b16 %v2192, %v2184
    %v2809 = vpack.c.b16 %v2193, %v2185
    %v2810 = vpack.c.b16 %v2194, %v2186
    %v2811 = vpack.c.b16 %v2195, %v2187
    %v2812 = vpack.c.b16 %v2196, %v2188
    %v2813 = vpack.c.b16 %v2197, %v2189
    %v2814 = vpack.c.b16 %v2206, %v2198
    %v2815 = vpack.c.b16 %v2207, %v2199
    %v2816 = vpack.c.b16 %v2208, %v2200
    %v2817 = vpack.c.b16 %v2209, %v2201
    %v2818 = vpack.c.b16 %v2210, %v2202
    %v2819 = vpack.c.b16 %v2211, %v2203
    %v2820 = vpack.c.b16 %v2212, %v2204
    %v2821 = vpack.c.b16 %v2213, %v2205
    %v2822 = vpack.c.b16 %v2222, %v2214
    %v2823 = vpack.c.b16 %v2223, %v2215
    %v2824 = vpack.c.b16 %v2224, %v2216
    %v2825 = vpack.c.b16 %v2225, %v2217
    %v2826 = vpack.c.b16 %v2226, %v2218
    %v2827 = vpack.c.b16 %v2227, %v2219
    %v2828 = vpack.c.b16 %v2228, %v2220
    %v2829 = vpack.c.b16 %v2229, %v2221
    %v2830 = vpack.c.b16 %v2238, %v2230
    %v2831 = vpack.c.b16 %v2239, %v2231
    %v2832 = vpack.c.b16 %v2240, %v2232
    %v2833 = vpack.c.b16 %v2241, %v2233
    %v2834 = vpack.c.b16 %v2242, %v2234
    %v2835 = vpack.c.b16 %v2243, %v2235
    %v2836 = vpack.c.b16 %v2244, %v2236
    %v2837 = vpack.c.b16 %v2245, %v2237
    %v2838 = vpack.c.b16 %v2254, %v2246
    %v2839 = vpack.c.b16 %v2255, %v2247
    %v2840 = vpack.c.b16 %v2256, %v2248
    %v2841 = vpack.c.b16 %v2257, %v2249
    %v2842 = vpack.c.b16 %v2258, %v2250
    %v2843 = vpack.c.b16 %v2259, %v2251
    %v2844 = vpack.c.b16 %v2260, %v2252
    %v2845 = vpack.c.b16 %v2261, %v2253
    %v2846 = vpack.c.b16 %v2270, %v2262
    %v2847 = vpack.c.b16 %v2271, %v2263
    %v2848 = vpack.c.b16 %v2272, %v2264
    %v2849 = vpack.c.b16 %v2273, %v2265
    %v2850 = vpack.c.b16 %v2274, %v2266
    %v2851 = vpack.c.b16 %v2275, %v2267
    %v2852 = vpack.c.b16 %v2276, %v2268
    %v2853 = vpack.c.b16 %v2277, %v2269
    %v2854 = vpack.c.b16 %v2286, %v2278
    %v2855 = vpack.c.b16 %v2287, %v2279
    %v2856 = vpack.c.b16 %v2288, %v2280
    %v2857 = vpack.c.b16 %v2289, %v2281
    %v2858 = vpack.c.b16 %v2290, %v2282
    %v2859 = vpack.c.b16 %v2291, %v2283
    %v2860 = vpack.c.b16 %v2292, %v2284
    %v2861 = vpack.c.b16 %v2293, %v2285
    %v2862 = vpack.c.b16 %v2302, %v2294
    %v2863 = vpack.c.b16 %v2303, %v2295
    %v2864 = vpack.c.b16 %v2304, %v2296
    %v2865 = vpack.c.b16 %v2305, %v2297
    %v2866 = vpack.c.b16 %v2306, %v2298
    %v2867 = vpack.c.b16 %v2307, %v2299
    %v2868 = vpack.c.b16 %v2308, %v2300
    %v2869 = vpack.c.b16 %v2309, %v2301
    %v2870 = vpack.c.b16 %v2318, %v2310
    %v2871 = vpack.c.b16 %v2319, %v2311
    %v2872 = vpack.c.b16 %v2320, %v2312
    %v2873 = vpack.c.b16 %v2321, %v2313
    %v2874 = vpack.c.b16 %v2322, %v2314
    %v2875 = vpack.c.b16 %v2323, %v2315
    %v2876 = vpack.c.b16 %v2324, %v2316
    %v2877 = vpack.c.b16 %v2325, %v2317
    %v2878 = vpack.c.b16 %v2334, %v2326
    %v2879 = vpack.c.b16 %v2335, %v2327
    %v2880 = vpack.c.b16 %v2336, %v2328
    %v2881 = vpack.c.b16 %v2337, %v2329
    %v2882 = vpack.c.b16 %v2338, %v2330
    %v2883 = vpack.c.b16 %v2339, %v2331
    %v2884 = vpack.c.b16 %v2340, %v2332
    %v2885 = vpack.c.b16 %v2341, %v2333
    %v2886 = vpack.c.b16 %v2350, %v2342
    %v2887 = vpack.c.b16 %v2351, %v2343
    %v2888 = vpack.c.b16 %v2352, %v2344
    %v2889 = vpack.c.b16 %v2353, %v2345
    %v2890 = vpack.c.b16 %v2354, %v2346
    %v2891 = vpack.c.b16 %v2355, %v2347
    %v2892 = vpack.c.b16 %v2356, %v2348
    %v2893 = vpack.c.b16 %v2357, %v2349
    %v2894 = vpack.c.b16 %v2366, %v2358
    %v2895 = vpack.c.b16 %v2367, %v2359
    %v2896 = vpack.c.b16 %v2368, %v2360
    %v2897 = vpack.c.b16 %v2369, %v2361
    %v2898 = vpack.c.b16 %v2370, %v2362
    %v2899 = vpack.c.b16 %v2371, %v2363
    %v2900 = vpack.c.b16 %v2372, %v2364
    %v2901 = vpack.c.b16 %v2373, %v2365
    %v2902 = vpack.c.b16 %v2382, %v2374
    %v2903 = vpack.c.b16 %v2383, %v2375
    %v2904 = vpack.c.b16 %v2384, %v2376
    %v2905 = vpack.c.b16 %v2385, %v2377
    %v2906 = vpack.c.b16 %v2386, %v2378
    %v2907 = vpack.c.b16 %v2387, %v2379
    %v2908 = vpack.c.b16 %v2388, %v2380
    %v2909 = vpack.c.b16 %v2389, %v2381
    %v2910 = vpack.c.b16 %v2398, %v2390
    %v2911 = vpack.c.b16 %v2399, %v2391
    %v2912 = vpack.c.b16 %v2400, %v2392
    %v2913 = vpack.c.b16 %v2401, %v2393
    %v2914 = vpack.c.b16 %v2402, %v2394
    %v2915 = vpack.c.b16 %v2403, %v2395
    %v2916 = vpack.c.b16 %v2404, %v2396
    %v2917 = vpack.c.b16 %v2405, %v2397
    %3430 = vmatprep.subr.bf16.mxu0 %v2407
    %3431 = vmatpush1.bf16.xpose.msra.mxu0 %v2406
    %3432 = vmatprep.subr.bf16.mxu0 %v2415
    %3433 = vmatpush1.bf16.xpose.msra.mxu0 %v2414
    %3434 = vmatprep.subr.bf16.mxu0 %v2423
    %3435 = vmatpush1.bf16.xpose.msra.mxu0 %v2422
    %3436 = vmatprep.subr.bf16.mxu0 %v2431
    %3437 = vmatpush1.bf16.xpose.msra.mxu0 %v2430
    %3438 = vmatprep.subr.bf16.mxu0 %v2439
    %3439 = vmatpush1.bf16.xpose.msra.mxu0 %v2438
    %3440 = vmatprep.subr.bf16.mxu0 %v2447
    %3441 = vmatpush1.bf16.xpose.msra.mxu0 %v2446
    %3442 = vmatprep.subr.bf16.mxu0 %v2455
    %3443 = vmatpush1.bf16.xpose.msra.mxu0 %v2454
    %3444 = vmatprep.subr.bf16.mxu0 %v2463
    %3445 = vmatpush1.bf16.xpose.msra.mxu0 %v2462
    %3446 = vmatprep.subr.bf16.mxu0 %v2471
    %3447 = vmatpush1.bf16.xpose.msra.mxu0 %v2470
    %3448 = vmatprep.subr.bf16.mxu0 %v2479
    %3449 = vmatpush1.bf16.xpose.msra.mxu0 %v2478
    %3450 = vmatprep.subr.bf16.mxu0 %v2487
    %3451 = vmatpush1.bf16.xpose.msra.mxu0 %v2486
    %3452 = vmatprep.subr.bf16.mxu0 %v2495
    %3453 = vmatpush1.bf16.xpose.msra.mxu0 %v2494
    %3454 = vmatprep.subr.bf16.mxu0 %v2503
    %3455 = vmatpush1.bf16.xpose.msra.mxu0 %v2502
    %3456 = vmatprep.subr.bf16.mxu0 %v2511
    %3457 = vmatpush1.bf16.xpose.msra.mxu0 %v2510
    %3458 = vmatprep.subr.bf16.mxu0 %v2519
    %3459 = vmatpush1.bf16.xpose.msra.mxu0 %v2518
    %3460 = vmatprep.subr.bf16.mxu0 %v2527
    %3461 = vmatpush1.bf16.xpose.msra.mxu0 %v2526
    %3462 = vmatprep.mubr.bf16.mxu0 %v309
    %3463 = vmatmul.mubr.bf16.gmra.mrb[0].mxu0 %v308
    %v3464 = vpop.f32.mrb[0].mxu0
    %v3465 = vadd.f32 %v833, %v3464
    %v3466 = vpop.f32.mrb[0].mxu0
    %v3467 = vadd.f32 %v837, %v3466
    %v3468 = vpop.f32.mrb[0].mxu0
    %v3469 = vadd.f32 %v833, %v3468
    %v3470 = vpop.f32.mrb[0].mxu0
    %v3471 = vadd.f32 %v837, %v3470
    %3472 = vdwg.mxu0
    %3473 = vmatprep.subr.bf16.mxu0 %v2409
    %3474 = vmatpush1.bf16.xpose.msra.mxu0 %v2408
    %3475 = vmatprep.subr.bf16.mxu0 %v2417
    %3476 = vmatpush1.bf16.xpose.msra.mxu0 %v2416
    %3477 = vmatprep.subr.bf16.mxu0 %v2425
    %3478 = vmatpush1.bf16.xpose.msra.mxu0 %v2424
    %3479 = vmatprep.subr.bf16.mxu0 %v2433
    %3480 = vmatpush1.bf16.xpose.msra.mxu0 %v2432
    %3481 = vmatprep.subr.bf16.mxu0 %v2441
    %3482 = vmatpush1.bf16.xpose.msra.mxu0 %v2440
    %3483 = vmatprep.subr.bf16.mxu0 %v2449
    %3484 = vmatpush1.bf16.xpose.msra.mxu0 %v2448
    %3485 = vmatprep.subr.bf16.mxu0 %v2457
    %3486 = vmatpush1.bf16.xpose.msra.mxu0 %v2456
    %3487 = vmatprep.subr.bf16.mxu0 %v2465
    %3488 = vmatpush1.bf16.xpose.msra.mxu0 %v2464
    %3489 = vmatprep.subr.bf16.mxu0 %v2473
    %3490 = vmatpush1.bf16.xpose.msra.mxu0 %v2472
    %3491 = vmatprep.subr.bf16.mxu0 %v2481
    %3492 = vmatpush1.bf16.xpose.msra.mxu0 %v2480
    %3493 = vmatprep.subr.bf16.mxu0 %v2489
    %3494 = vmatpush1.bf16.xpose.msra.mxu0 %v2488
    %3495 = vmatprep.subr.bf16.mxu0 %v2497
    %3496 = vmatpush1.bf16.xpose.msra.mxu0 %v2496
    %3497 = vmatprep.subr.bf16.mxu0 %v2505
    %3498 = vmatpush1.bf16.xpose.msra.mxu0 %v2504
    %3499 = vmatprep.subr.bf16.mxu0 %v2513
    %3500 = vmatpush1.bf16.xpose.msra.mxu0 %v2512
    %3501 = vmatprep.subr.bf16.mxu0 %v2521
    %3502 = vmatpush1.bf16.xpose.msra.mxu0 %v2520
    %3503 = vmatprep.subr.bf16.mxu0 %v2529
    %3504 = vmatpush1.bf16.xpose.msra.mxu0 %v2528
    %3505 = vmatprep.mubr.bf16.mxu0 %v311
    %3506 = vmatmul.mubr.bf16.gmra.mrb[0].mxu0 %v310
    %v3507 = vpop.f32.mrb[0].mxu0
    %v3508 = vadd.f32 %v3465, %v3507
    %v3509 = vpop.f32.mrb[0].mxu0
    %v3510 = vadd.f32 %v3467, %v3509
    %v3511 = vpop.f32.mrb[0].mxu0
    %v3512 = vadd.f32 %v3469, %v3511
    %v3513 = vpop.f32.mrb[0].mxu0
    %v3514 = vadd.f32 %v3471, %v3513
    %3515 = vdwg.mxu0
    %3516 = vmatprep.subr.bf16.mxu0 %v2411
    %3517 = vmatpush1.bf16.xpose.msra.mxu0 %v2410
    %3518 = vmatprep.subr.bf16.mxu0 %v2419
    %3519 = vmatpush1.bf16.xpose.msra.mxu0 %v2418
    %3520 = vmatprep.subr.bf16.mxu0 %v2427
    %3521 = vmatpush1.bf16.xpose.msra.mxu0 %v2426
    %3522 = vmatprep.subr.bf16.mxu0 %v2435
    %3523 = vmatpush1.bf16.xpose.msra.mxu0 %v2434
    %3524 = vmatprep.subr.bf16.mxu0 %v2443
    %3525 = vmatpush1.bf16.xpose.msra.mxu0 %v2442
    %3526 = vmatprep.subr.bf16.mxu0 %v2451
    %3527 = vmatpush1.bf16.xpose.msra.mxu0 %v2450
    %3528 = vmatprep.subr.bf16.mxu0 %v2459
    %3529 = vmatpush1.bf16.xpose.msra.mxu0 %v2458
    %3530 = vmatprep.subr.bf16.mxu0 %v2467
    %3531 = vmatpush1.bf16.xpose.msra.mxu0 %v2466
    %3532 = vmatprep.subr.bf16.mxu0 %v2475
    %3533 = vmatpush1.bf16.xpose.msra.mxu0 %v2474
    %3534 = vmatprep.subr.bf16.mxu0 %v2483
    %3535 = vmatpush1.bf16.xpose.msra.mxu0 %v2482
    %3536 = vmatprep.subr.bf16.mxu0 %v2491
    %3537 = vmatpush1.bf16.xpose.msra.mxu0 %v2490
    %3538 = vmatprep.subr.bf16.mxu0 %v2499
    %3539 = vmatpush1.bf16.xpose.msra.mxu0 %v2498
    %3540 = vmatprep.subr.bf16.mxu0 %v2507
    %3541 = vmatpush1.bf16.xpose.msra.mxu0 %v2506
    %3542 = vmatprep.subr.bf16.mxu0 %v2515
    %3543 = vmatpush1.bf16.xpose.msra.mxu0 %v2514
    %3544 = vmatprep.subr.bf16.mxu0 %v2523
    %3545 = vmatpush1.bf16.xpose.msra.mxu0 %v2522
    %3546 = vmatprep.subr.bf16.mxu0 %v2531
    %3547 = vmatpush1.bf16.xpose.msra.mxu0 %v2530
    %3548 = vmatprep.mubr.bf16.mxu0 %v313
    %3549 = vmatmul.mubr.bf16.gmra.mrb[0].mxu0 %v312
    %v3550 = vpop.f32.mrb[0].mxu0
    %v3551 = vadd.f32 %v3508, %v3550
    %v3552 = vpop.f32.mrb[0].mxu0
    %v3553 = vadd.f32 %v3510, %v3552
    %v3554 = vpop.f32.mrb[0].mxu0
    %v3555 = vadd.f32 %v3512, %v3554
    %v3556 = vpop.f32.mrb[0].mxu0
    %v3557 = vadd.f32 %v3514, %v3556
    %3558 = vdwg.mxu0
    %3559 = vmatprep.subr.bf16.mxu0 %v2413
    %3560 = vmatpush1.bf16.xpose.msra.mxu0 %v2412
    %3561 = vmatprep.subr.bf16.mxu0 %v2421
    %3562 = vmatpush1.bf16.xpose.msra.mxu0 %v2420
    %3563 = vmatprep.subr.bf16.mxu0 %v2429
    %3564 = vmatpush1.bf16.xpose.msra.mxu0 %v2428
    %3565 = vmatprep.subr.bf16.mxu0 %v2437
    %3566 = vmatpush1.bf16.xpose.msra.mxu0 %v2436
    %3567 = vmatprep.subr.bf16.mxu0 %v2445
    %3568 = vmatpush1.bf16.xpose.msra.mxu0 %v2444
    %3569 = vmatprep.subr.bf16.mxu0 %v2453
    %3570 = vmatpush1.bf16.xpose.msra.mxu0 %v2452
    %3571 = vmatprep.subr.bf16.mxu0 %v2461
    %3572 = vmatpush1.bf16.xpose.msra.mxu0 %v2460
    %3573 = vmatprep.subr.bf16.mxu0 %v2469
    %3574 = vmatpush1.bf16.xpose.msra.mxu0 %v2468
    %3575 = vmatprep.subr.bf16.mxu0 %v2477
    %3576 = vmatpush1.bf16.xpose.msra.mxu0 %v2476
    %3577 = vmatprep.subr.bf16.mxu0 %v2485
    %3578 = vmatpush1.bf16.xpose.msra.mxu0 %v2484
    %3579 = vmatprep.subr.bf16.mxu0 %v2493
    %3580 = vmatpush1.bf16.xpose.msra.mxu0 %v2492
    %3581 = vmatprep.subr.bf16.mxu0 %v2501
    %3582 = vmatpush1.bf16.xpose.msra.mxu0 %v2500
    %3583 = vmatprep.subr.bf16.mxu0 %v2509
    %3584 = vmatpush1.bf16.xpose.msra.mxu0 %v2508
    %3585 = vmatprep.subr.bf16.mxu0 %v2517
    %3586 = vmatpush1.bf16.xpose.msra.mxu0 %v2516
    %3587 = vmatprep.subr.bf16.mxu0 %v2525
    %3588 = vmatpush1.bf16.xpose.msra.mxu0 %v2524
    %3589 = vmatprep.subr.bf16.mxu0 %v2533
    %3590 = vmatpush1.bf16.xpose.msra.mxu0 %v2532
    %3591 = vmatprep.mubr.bf16.mxu0 %v315
    %3592 = vmatmul.mubr.bf16.gmra.mrb[0].mxu0 %v314
    %v3593 = vpop.f32.mrb[0].mxu0
    %v3594 = vadd.f32 %v3551, %v3593
    %v3595 = vpop.f32.mrb[0].mxu0
    %v3596 = vadd.f32 %v3553, %v3595
    %v3597 = vpop.f32.mrb[0].mxu0
    %v3598 = vadd.f32 %v3555, %v3597
    %v3599 = vpop.f32.mrb[0].mxu0
    %v3600 = vadd.f32 %v3557, %v3599
    %3601 = vdwg.mxu0
    %3602 = vmatprep.subr.bf16.mxu0 %v2535
    %3603 = vmatpush1.bf16.xpose.msra.mxu0 %v2534
    %3604 = vmatprep.subr.bf16.mxu0 %v2543
    %3605 = vmatpush1.bf16.xpose.msra.mxu0 %v2542
    %3606 = vmatprep.subr.bf16.mxu0 %v2551
    %3607 = vmatpush1.bf16.xpose.msra.mxu0 %v2550
    %3608 = vmatprep.subr.bf16.mxu0 %v2559
    %3609 = vmatpush1.bf16.xpose.msra.mxu0 %v2558
    %3610 = vmatprep.subr.bf16.mxu0 %v2567
    %3611 = vmatpush1.bf16.xpose.msra.mxu0 %v2566
    %3612 = vmatprep.subr.bf16.mxu0 %v2575
    %3613 = vmatpush1.bf16.xpose.msra.mxu0 %v2574
    %3614 = vmatprep.subr.bf16.mxu0 %v2583
    %3615 = vmatpush1.bf16.xpose.msra.mxu0 %v2582
    %3616 = vmatprep.subr.bf16.mxu0 %v2591
    %3617 = vmatpush1.bf16.xpose.msra.mxu0 %v2590
    %3618 = vmatprep.subr.bf16.mxu0 %v2599
    %3619 = vmatpush1.bf16.xpose.msra.mxu0 %v2598
    %3620 = vmatprep.subr.bf16.mxu0 %v2607
    %3621 = vmatpush1.bf16.xpose.msra.mxu0 %v2606
    %3622 = vmatprep.subr.bf16.mxu0 %v2615
    %3623 = vmatpush1.bf16.xpose.msra.mxu0 %v2614
    %3624 = vmatprep.subr.bf16.mxu0 %v2623
    %3625 = vmatpush1.bf16.xpose.msra.mxu0 %v2622
    %3626 = vmatprep.subr.bf16.mxu0 %v2631
    %3627 = vmatpush1.bf16.xpose.msra.mxu0 %v2630
    %3628 = vmatprep.subr.bf16.mxu0 %v2639
    %3629 = vmatpush1.bf16.xpose.msra.mxu0 %v2638
    %3630 = vmatprep.subr.bf16.mxu0 %v2647
    %3631 = vmatpush1.bf16.xpose.msra.mxu0 %v2646
    %3632 = vmatprep.subr.bf16.mxu0 %v2655
    %3633 = vmatpush1.bf16.xpose.msra.mxu0 %v2654
    %3634 = vmatprep.mubr.bf16.mxu0 %v309
    %3635 = vmatmul.mubr.bf16.gmra.mrb[0].mxu0 %v308
    %v3636 = vpop.f32.mrb[0].mxu0
    %v3637 = vadd.f32 %v841, %v3636
    %v3638 = vpop.f32.mrb[0].mxu0
    %v3639 = vadd.f32 %v845, %v3638
    %v3640 = vpop.f32.mrb[0].mxu0
    %v3641 = vadd.f32 %v841, %v3640
    %v3642 = vpop.f32.mrb[0].mxu0
    %v3643 = vadd.f32 %v845, %v3642
    %3644 = vdwg.mxu0
    %3645 = vmatprep.subr.bf16.mxu0 %v2537
    %3646 = vmatpush1.bf16.xpose.msra.mxu0 %v2536
    %3647 = vmatprep.subr.bf16.mxu0 %v2545
    %3648 = vmatpush1.bf16.xpose.msra.mxu0 %v2544
    %3649 = vmatprep.subr.bf16.mxu0 %v2553
    %3650 = vmatpush1.bf16.xpose.msra.mxu0 %v2552
    %3651 = vmatprep.subr.bf16.mxu0 %v2561
    %3652 = vmatpush1.bf16.xpose.msra.mxu0 %v2560
    %3653 = vmatprep.subr.bf16.mxu0 %v2569
    %3654 = vmatpush1.bf16.xpose.msra.mxu0 %v2568
    %3655 = vmatprep.subr.bf16.mxu0 %v2577
    %3656 = vmatpush1.bf16.xpose.msra.mxu0 %v2576
    %3657 = vmatprep.subr.bf16.mxu0 %v2585
    %3658 = vmatpush1.bf16.xpose.msra.mxu0 %v2584
    %3659 = vmatprep.subr.bf16.mxu0 %v2593
    %3660 = vmatpush1.bf16.xpose.msra.mxu0 %v2592
    %3661 = vmatprep.subr.bf16.mxu0 %v2601
    %3662 = vmatpush1.bf16.xpose.msra.mxu0 %v2600
    %3663 = vmatprep.subr.bf16.mxu0 %v2609
    %3664 = vmatpush1.bf16.xpose.msra.mxu0 %v2608
    %3665 = vmatprep.subr.bf16.mxu0 %v2617
    %3666 = vmatpush1.bf16.xpose.msra.mxu0 %v2616
    %3667 = vmatprep.subr.bf16.mxu0 %v2625
    %3668 = vmatpush1.bf16.xpose.msra.mxu0 %v2624
    %3669 = vmatprep.subr.bf16.mxu0 %v2633
    %3670 = vmatpush1.bf16.xpose.msra.mxu0 %v2632
    %3671 = vmatprep.subr.bf16.mxu0 %v2641
    %3672 = vmatpush1.bf16.xpose.msra.mxu0 %v2640
    %3673 = vmatprep.subr.bf16.mxu0 %v2649
    %3674 = vmatpush1.bf16.xpose.msra.mxu0 %v2648
    %3675 = vmatprep.subr.bf16.mxu0 %v2657
    %3676 = vmatpush1.bf16.xpose.msra.mxu0 %v2656
    %3677 = vmatprep.mubr.bf16.mxu0 %v311
    %3678 = vmatmul.mubr.bf16.gmra.mrb[0].mxu0 %v310
    %v3679 = vpop.f32.mrb[0].mxu0
    %v3680 = vadd.f32 %v3637, %v3679
    %v3681 = vpop.f32.mrb[0].mxu0
    %v3682 = vadd.f32 %v3639, %v3681
    %v3683 = vpop.f32.mrb[0].mxu0
    %v3684 = vadd.f32 %v3641, %v3683
    %v3685 = vpop.f32.mrb[0].mxu0
    %v3686 = vadd.f32 %v3643, %v3685
    %3687 = vdwg.mxu0
    %3688 = vmatprep.subr.bf16.mxu0 %v2539
    %3689 = vmatpush1.bf16.xpose.msra.mxu0 %v2538
    %3690 = vmatprep.subr.bf16.mxu0 %v2547
    %3691 = vmatpush1.bf16.xpose.msra.mxu0 %v2546
    %3692 = vmatprep.subr.bf16.mxu0 %v2555
    %3693 = vmatpush1.bf16.xpose.msra.mxu0 %v2554
    %3694 = vmatprep.subr.bf16.mxu0 %v2563
    %3695 = vmatpush1.bf16.xpose.msra.mxu0 %v2562
    %3696 = vmatprep.subr.bf16.mxu0 %v2571
    %3697 = vmatpush1.bf16.xpose.msra.mxu0 %v2570
    %3698 = vmatprep.subr.bf16.mxu0 %v2579
    %3699 = vmatpush1.bf16.xpose.msra.mxu0 %v2578
    %3700 = vmatprep.subr.bf16.mxu0 %v2587
    %3701 = vmatpush1.bf16.xpose.msra.mxu0 %v2586
    %3702 = vmatprep.subr.bf16.mxu0 %v2595
    %3703 = vmatpush1.bf16.xpose.msra.mxu0 %v2594
    %3704 = vmatprep.subr.bf16.mxu0 %v2603
    %3705 = vmatpush1.bf16.xpose.msra.mxu0 %v2602
    %3706 = vmatprep.subr.bf16.mxu0 %v2611
    %3707 = vmatpush1.bf16.xpose.msra.mxu0 %v2610
    %3708 = vmatprep.subr.bf16.mxu0 %v2619
    %3709 = vmatpush1.bf16.xpose.msra.mxu0 %v2618
    %3710 = vmatprep.subr.bf16.mxu0 %v2627
    %3711 = vmatpush1.bf16.xpose.msra.mxu0 %v2626
    %3712 = vmatprep.subr.bf16.mxu0 %v2635
    %3713 = vmatpush1.bf16.xpose.msra.mxu0 %v2634
    %3714 = vmatprep.subr.bf16.mxu0 %v2643
    %3715 = vmatpush1.bf16.xpose.msra.mxu0 %v2642
    %3716 = vmatprep.subr.bf16.mxu0 %v2651
    %3717 = vmatpush1.bf16.xpose.msra.mxu0 %v2650
    %3718 = vmatprep.subr.bf16.mxu0 %v2659
    %3719 = vmatpush1.bf16.xpose.msra.mxu0 %v2658
    %3720 = vmatprep.mubr.bf16.mxu0 %v313
    %3721 = vmatmul.mubr.bf16.gmra.mrb[0].mxu0 %v312
    %v3722 = vpop.f32.mrb[0].mxu0
    %v3723 = vadd.f32 %v3680, %v3722
    %v3724 = vpop.f32.mrb[0].mxu0
    %v3725 = vadd.f32 %v3682, %v3724
    %v3726 = vpop.f32.mrb[0].mxu0
    %v3727 = vadd.f32 %v3684, %v3726
    %v3728 = vpop.f32.mrb[0].mxu0
    %v3729 = vadd.f32 %v3686, %v3728
    %3730 = vdwg.mxu0
    %3731 = vmatprep.subr.bf16.mxu0 %v2541
    %3732 = vmatpush1.bf16.xpose.msra.mxu0 %v2540
    %3733 = vmatprep.subr.bf16.mxu0 %v2549
    %3734 = vmatpush1.bf16.xpose.msra.mxu0 %v2548
    %3735 = vmatprep.subr.bf16.mxu0 %v2557
    %3736 = vmatpush1.bf16.xpose.msra.mxu0 %v2556
    %3737 = vmatprep.subr.bf16.mxu0 %v2565
    %3738 = vmatpush1.bf16.xpose.msra.mxu0 %v2564
    %3739 = vmatprep.subr.bf16.mxu0 %v2573
    %3740 = vmatpush1.bf16.xpose.msra.mxu0 %v2572
    %3741 = vmatprep.subr.bf16.mxu0 %v2581
    %3742 = vmatpush1.bf16.xpose.msra.mxu0 %v2580
    %3743 = vmatprep.subr.bf16.mxu0 %v2589
    %3744 = vmatpush1.bf16.xpose.msra.mxu0 %v2588
    %3745 = vmatprep.subr.bf16.mxu0 %v2597
    %3746 = vmatpush1.bf16.xpose.msra.mxu0 %v2596
    %3747 = vmatprep.subr.bf16.mxu0 %v2605
    %3748 = vmatpush1.bf16.xpose.msra.mxu0 %v2604
    %3749 = vmatprep.subr.bf16.mxu0 %v2613
    %3750 = vmatpush1.bf16.xpose.msra.mxu0 %v2612
    %3751 = vmatprep.subr.bf16.mxu0 %v2621
    %3752 = vmatpush1.bf16.xpose.msra.mxu0 %v2620
    %3753 = vmatprep.subr.bf16.mxu0 %v2629
    %3754 = vmatpush1.bf16.xpose.msra.mxu0 %v2628
    %3755 = vmatprep.subr.bf16.mxu0 %v2637
    %3756 = vmatpush1.bf16.xpose.msra.mxu0 %v2636
    %3757 = vmatprep.subr.bf16.mxu0 %v2645
    %3758 = vmatpush1.bf16.xpose.msra.mxu0 %v2644
    %3759 = vmatprep.subr.bf16.mxu0 %v2653
    %3760 = vmatpush1.bf16.xpose.msra.mxu0 %v2652
    %3761 = vmatprep.subr.bf16.mxu0 %v2661
    %3762 = vmatpush1.bf16.xpose.msra.mxu0 %v2660
    %3763 = vmatprep.mubr.bf16.mxu0 %v315
    %3764 = vmatmul.mubr.bf16.gmra.mrb[0].mxu0 %v314
    %v3765 = vpop.f32.mrb[0].mxu0
    %v3766 = vadd.f32 %v3723, %v3765
    %v3767 = vpop.f32.mrb[0].mxu0
    %v3768 = vadd.f32 %v3725, %v3767
    %v3769 = vpop.f32.mrb[0].mxu0
    %v3770 = vadd.f32 %v3727, %v3769
    %v3771 = vpop.f32.mrb[0].mxu0
    %v3772 = vadd.f32 %v3729, %v3771
    %3773 = vdwg.mxu0
    %3774 = vmatprep.subr.bf16.mxu0 %v2663
    %3775 = vmatpush1.bf16.xpose.msra.mxu0 %v2662
    %3776 = vmatprep.subr.bf16.mxu0 %v2671
    %3777 = vmatpush1.bf16.xpose.msra.mxu0 %v2670
    %3778 = vmatprep.subr.bf16.mxu0 %v2679
    %3779 = vmatpush1.bf16.xpose.msra.mxu0 %v2678
    %3780 = vmatprep.subr.bf16.mxu0 %v2687
    %3781 = vmatpush1.bf16.xpose.msra.mxu0 %v2686
    %3782 = vmatprep.subr.bf16.mxu0 %v2695
    %3783 = vmatpush1.bf16.xpose.msra.mxu0 %v2694
    %3784 = vmatprep.subr.bf16.mxu0 %v2703
    %3785 = vmatpush1.bf16.xpose.msra.mxu0 %v2702
    %3786 = vmatprep.subr.bf16.mxu0 %v2711
    %3787 = vmatpush1.bf16.xpose.msra.mxu0 %v2710
    %3788 = vmatprep.subr.bf16.mxu0 %v2719
    %3789 = vmatpush1.bf16.xpose.msra.mxu0 %v2718
    %3790 = vmatprep.subr.bf16.mxu0 %v2727
    %3791 = vmatpush1.bf16.xpose.msra.mxu0 %v2726
    %3792 = vmatprep.subr.bf16.mxu0 %v2735
    %3793 = vmatpush1.bf16.xpose.msra.mxu0 %v2734
    %3794 = vmatprep.subr.bf16.mxu0 %v2743
    %3795 = vmatpush1.bf16.xpose.msra.mxu0 %v2742
    %3796 = vmatprep.subr.bf16.mxu0 %v2751
    %3797 = vmatpush1.bf16.xpose.msra.mxu0 %v2750
    %3798 = vmatprep.subr.bf16.mxu0 %v2759
    %3799 = vmatpush1.bf16.xpose.msra.mxu0 %v2758
    %3800 = vmatprep.subr.bf16.mxu0 %v2767
    %3801 = vmatpush1.bf16.xpose.msra.mxu0 %v2766
    %3802 = vmatprep.subr.bf16.mxu0 %v2775
    %3803 = vmatpush1.bf16.xpose.msra.mxu0 %v2774
    %3804 = vmatprep.subr.bf16.mxu0 %v2783
    %3805 = vmatpush1.bf16.xpose.msra.mxu0 %v2782
    %3806 = vmatprep.mubr.bf16.mxu0 %v309
    %3807 = vmatmul.mubr.bf16.gmra.mrb[0].mxu0 %v308
    %v3808 = vpop.f32.mrb[0].mxu0
    %v3809 = vadd.f32 %v849, %v3808
    %v3810 = vpop.f32.mrb[0].mxu0
    %v3811 = vadd.f32 %v853, %v3810
    %v3812 = vpop.f32.mrb[0].mxu0
    %v3813 = vadd.f32 %v849, %v3812
    %v3814 = vpop.f32.mrb[0].mxu0
    %v3815 = vadd.f32 %v853, %v3814
    %3816 = vdwg.mxu0
    %3817 = vmatprep.subr.bf16.mxu0 %v2665
    %3818 = vmatpush1.bf16.xpose.msra.mxu0 %v2664
    %3819 = vmatprep.subr.bf16.mxu0 %v2673
    %3820 = vmatpush1.bf16.xpose.msra.mxu0 %v2672
    %3821 = vmatprep.subr.bf16.mxu0 %v2681
    %3822 = vmatpush1.bf16.xpose.msra.mxu0 %v2680
    %3823 = vmatprep.subr.bf16.mxu0 %v2689
    %3824 = vmatpush1.bf16.xpose.msra.mxu0 %v2688
    %3825 = vmatprep.subr.bf16.mxu0 %v2697
    %3826 = vmatpush1.bf16.xpose.msra.mxu0 %v2696
    %3827 = vmatprep.subr.bf16.mxu0 %v2705
    %3828 = vmatpush1.bf16.xpose.msra.mxu0 %v2704
    %3829 = vmatprep.subr.bf16.mxu0 %v2713
    %3830 = vmatpush1.bf16.xpose.msra.mxu0 %v2712
    %3831 = vmatprep.subr.bf16.mxu0 %v2721
    %3832 = vmatpush1.bf16.xpose.msra.mxu0 %v2720
    %3833 = vmatprep.subr.bf16.mxu0 %v2729
    %3834 = vmatpush1.bf16.xpose.msra.mxu0 %v2728
    %3835 = vmatprep.subr.bf16.mxu0 %v2737
    %3836 = vmatpush1.bf16.xpose.msra.mxu0 %v2736
    %3837 = vmatprep.subr.bf16.mxu0 %v2745
    %3838 = vmatpush1.bf16.xpose.msra.mxu0 %v2744
    %3839 = vmatprep.subr.bf16.mxu0 %v2753
    %3840 = vmatpush1.bf16.xpose.msra.mxu0 %v2752
    %3841 = vmatprep.subr.bf16.mxu0 %v2761
    %3842 = vmatpush1.bf16.xpose.msra.mxu0 %v2760
    %3843 = vmatprep.subr.bf16.mxu0 %v2769
    %3844 = vmatpush1.bf16.xpose.msra.mxu0 %v2768
    %3845 = vmatprep.subr.bf16.mxu0 %v2777
    %3846 = vmatpush1.bf16.xpose.msra.mxu0 %v2776
    %3847 = vmatprep.subr.bf16.mxu0 %v2785
    %3848 = vmatpush1.bf16.xpose.msra.mxu0 %v2784
    %3849 = vmatprep.mubr.bf16.mxu0 %v311
    %3850 = vmatmul.mubr.bf16.gmra.mrb[0].mxu0 %v310
    %v3851 = vpop.f32.mrb[0].mxu0
    %v3852 = vadd.f32 %v3809, %v3851
    %v3853 = vpop.f32.mrb[0].mxu0
    %v3854 = vadd.f32 %v3811, %v3853
    %v3855 = vpop.f32.mrb[0].mxu0
    %v3856 = vadd.f32 %v3813, %v3855
    %v3857 = vpop.f32.mrb[0].mxu0
    %v3858 = vadd.f32 %v3815, %v3857
    %3859 = vdwg.mxu0
    %3860 = vmatprep.subr.bf16.mxu0 %v2667
    %3861 = vmatpush1.bf16.xpose.msra.mxu0 %v2666
    %3862 = vmatprep.subr.bf16.mxu0 %v2675
    %3863 = vmatpush1.bf16.xpose.msra.mxu0 %v2674
    %3864 = vmatprep.subr.bf16.mxu0 %v2683
    %3865 = vmatpush1.bf16.xpose.msra.mxu0 %v2682
    %3866 = vmatprep.subr.bf16.mxu0 %v2691
    %3867 = vmatpush1.bf16.xpose.msra.mxu0 %v2690
    %3868 = vmatprep.subr.bf16.mxu0 %v2699
    %3869 = vmatpush1.bf16.xpose.msra.mxu0 %v2698
    %3870 = vmatprep.subr.bf16.mxu0 %v2707
    %3871 = vmatpush1.bf16.xpose.msra.mxu0 %v2706
    %3872 = vmatprep.subr.bf16.mxu0 %v2715
    %3873 = vmatpush1.bf16.xpose.msra.mxu0 %v2714
    %3874 = vmatprep.subr.bf16.mxu0 %v2723
    %3875 = vmatpush1.bf16.xpose.msra.mxu0 %v2722
    %3876 = vmatprep.subr.bf16.mxu0 %v2731
    %3877 = vmatpush1.bf16.xpose.msra.mxu0 %v2730
    %3878 = vmatprep.subr.bf16.mxu0 %v2739
    %3879 = vmatpush1.bf16.xpose.msra.mxu0 %v2738
    %3880 = vmatprep.subr.bf16.mxu0 %v2747
    %3881 = vmatpush1.bf16.xpose.msra.mxu0 %v2746
    %3882 = vmatprep.subr.bf16.mxu0 %v2755
    %3883 = vmatpush1.bf16.xpose.msra.mxu0 %v2754
    %3884 = vmatprep.subr.bf16.mxu0 %v2763
    %3885 = vmatpush1.bf16.xpose.msra.mxu0 %v2762
    %3886 = vmatprep.subr.bf16.mxu0 %v2771
    %3887 = vmatpush1.bf16.xpose.msra.mxu0 %v2770
    %3888 = vmatprep.subr.bf16.mxu0 %v2779
    %3889 = vmatpush1.bf16.xpose.msra.mxu0 %v2778
    %3890 = vmatprep.subr.bf16.mxu0 %v2787
    %3891 = vmatpush1.bf16.xpose.msra.mxu0 %v2786
    %3892 = vmatprep.mubr.bf16.mxu0 %v313
    %3893 = vmatmul.mubr.bf16.gmra.mrb[0].mxu0 %v312
    %v3894 = vpop.f32.mrb[0].mxu0
    %v3895 = vadd.f32 %v3852, %v3894
    %v3896 = vpop.f32.mrb[0].mxu0
    %v3897 = vadd.f32 %v3854, %v3896
    %v3898 = vpop.f32.mrb[0].mxu0
    %v3899 = vadd.f32 %v3856, %v3898
    %v3900 = vpop.f32.mrb[0].mxu0
    %v3901 = vadd.f32 %v3858, %v3900
    %3902 = vdwg.mxu0
    %3903 = vmatprep.subr.bf16.mxu0 %v2669
    %3904 = vmatpush1.bf16.xpose.msra.mxu0 %v2668
    %3905 = vmatprep.subr.bf16.mxu0 %v2677
    %3906 = vmatpush1.bf16.xpose.msra.mxu0 %v2676
    %3907 = vmatprep.subr.bf16.mxu0 %v2685
    %3908 = vmatpush1.bf16.xpose.msra.mxu0 %v2684
    %3909 = vmatprep.subr.bf16.mxu0 %v2693
    %3910 = vmatpush1.bf16.xpose.msra.mxu0 %v2692
    %3911 = vmatprep.subr.bf16.mxu0 %v2701
    %3912 = vmatpush1.bf16.xpose.msra.mxu0 %v2700
    %3913 = vmatprep.subr.bf16.mxu0 %v2709
    %3914 = vmatpush1.bf16.xpose.msra.mxu0 %v2708
    %3915 = vmatprep.subr.bf16.mxu0 %v2717
    %3916 = vmatpush1.bf16.xpose.msra.mxu0 %v2716
    %3917 = vmatprep.subr.bf16.mxu0 %v2725
    %3918 = vmatpush1.bf16.xpose.msra.mxu0 %v2724
    %3919 = vmatprep.subr.bf16.mxu0 %v2733
    %3920 = vmatpush1.bf16.xpose.msra.mxu0 %v2732
    %3921 = vmatprep.subr.bf16.mxu0 %v2741
    %3922 = vmatpush1.bf16.xpose.msra.mxu0 %v2740
    %3923 = vmatprep.subr.bf16.mxu0 %v2749
    %3924 = vmatpush1.bf16.xpose.msra.mxu0 %v2748
    %3925 = vmatprep.subr.bf16.mxu0 %v2757
    %3926 = vmatpush1.bf16.xpose.msra.mxu0 %v2756
    %3927 = vmatprep.subr.bf16.mxu0 %v2765
    %3928 = vmatpush1.bf16.xpose.msra.mxu0 %v2764
    %3929 = vmatprep.subr.bf16.mxu0 %v2773
    %3930 = vmatpush1.bf16.xpose.msra.mxu0 %v2772
    %3931 = vmatprep.subr.bf16.mxu0 %v2781
    %3932 = vmatpush1.bf16.xpose.msra.mxu0 %v2780
    %3933 = vmatprep.subr.bf16.mxu0 %v2789
    %3934 = vmatpush1.bf16.xpose.msra.mxu0 %v2788
    %3935 = vmatprep.mubr.bf16.mxu0 %v315
    %3936 = vmatmul.mubr.bf16.gmra.mrb[0].mxu0 %v314
    %v3937 = vpop.f32.mrb[0].mxu0
    %v3938 = vadd.f32 %v3895, %v3937
    %v3939 = vpop.f32.mrb[0].mxu0
    %v3940 = vadd.f32 %v3897, %v3939
    %v3941 = vpop.f32.mrb[0].mxu0
    %v3942 = vadd.f32 %v3899, %v3941
    %v3943 = vpop.f32.mrb[0].mxu0
    %v3944 = vadd.f32 %v3901, %v3943
    %3945 = vdwg.mxu0
    %3946 = vmatprep.subr.bf16.mxu0 %v2791
    %3947 = vmatpush1.bf16.xpose.msra.mxu0 %v2790
    %3948 = vmatprep.subr.bf16.mxu0 %v2799
    %3949 = vmatpush1.bf16.xpose.msra.mxu0 %v2798
    %3950 = vmatprep.subr.bf16.mxu0 %v2807
    %3951 = vmatpush1.bf16.xpose.msra.mxu0 %v2806
    %3952 = vmatprep.subr.bf16.mxu0 %v2815
    %3953 = vmatpush1.bf16.xpose.msra.mxu0 %v2814
    %3954 = vmatprep.subr.bf16.mxu0 %v2823
    %3955 = vmatpush1.bf16.xpose.msra.mxu0 %v2822
    %3956 = vmatprep.subr.bf16.mxu0 %v2831
    %3957 = vmatpush1.bf16.xpose.msra.mxu0 %v2830
    %3958 = vmatprep.subr.bf16.mxu0 %v2839
    %3959 = vmatpush1.bf16.xpose.msra.mxu0 %v2838
    %3960 = vmatprep.subr.bf16.mxu0 %v2847
    %3961 = vmatpush1.bf16.xpose.msra.mxu0 %v2846
    %3962 = vmatprep.subr.bf16.mxu0 %v2855
    %3963 = vmatpush1.bf16.xpose.msra.mxu0 %v2854
    %3964 = vmatprep.subr.bf16.mxu0 %v2863
    %3965 = vmatpush1.bf16.xpose.msra.mxu0 %v2862
    %3966 = vmatprep.subr.bf16.mxu0 %v2871
    %3967 = vmatpush1.bf16.xpose.msra.mxu0 %v2870
    %3968 = vmatprep.subr.bf16.mxu0 %v2879
    %3969 = vmatpush1.bf16.xpose.msra.mxu0 %v2878
    %3970 = vmatprep.subr.bf16.mxu0 %v2887
    %3971 = vmatpush1.bf16.xpose.msra.mxu0 %v2886
    %3972 = vmatprep.subr.bf16.mxu0 %v2895
    %3973 = vmatpush1.bf16.xpose.msra.mxu0 %v2894
    %3974 = vmatprep.subr.bf16.mxu0 %v2903
    %3975 = vmatpush1.bf16.xpose.msra.mxu0 %v2902
    %3976 = vmatprep.subr.bf16.mxu0 %v2911
    %3977 = vmatpush1.bf16.xpose.msra.mxu0 %v2910
    %3978 = vmatprep.mubr.bf16.mxu0 %v309
    %3979 = vmatmul.mubr.bf16.gmra.mrb[0].mxu0 %v308
    %v3980 = vpop.f32.mrb[0].mxu0
    %v3981 = vadd.f32 %v857, %v3980
    %v3982 = vpop.f32.mrb[0].mxu0
    %v3983 = vadd.f32 %v861, %v3982
    %v3984 = vpop.f32.mrb[0].mxu0
    %v3985 = vadd.f32 %v857, %v3984
    %v3986 = vpop.f32.mrb[0].mxu0
    %v3987 = vadd.f32 %v861, %v3986
    %3988 = vdwg.mxu0
    %3989 = vmatprep.subr.bf16.mxu0 %v2793
    %3990 = vmatpush1.bf16.xpose.msra.mxu0 %v2792
    %3991 = vmatprep.subr.bf16.mxu0 %v2801
    %3992 = vmatpush1.bf16.xpose.msra.mxu0 %v2800
    %3993 = vmatprep.subr.bf16.mxu0 %v2809
    %3994 = vmatpush1.bf16.xpose.msra.mxu0 %v2808
    %3995 = vmatprep.subr.bf16.mxu0 %v2817
    %3996 = vmatpush1.bf16.xpose.msra.mxu0 %v2816
    %3997 = vmatprep.subr.bf16.mxu0 %v2825
    %3998 = vmatpush1.bf16.xpose.msra.mxu0 %v2824
    %3999 = vmatprep.subr.bf16.mxu0 %v2833
    %4000 = vmatpush1.bf16.xpose.msra.mxu0 %v2832
    %4001 = vmatprep.subr.bf16.mxu0 %v2841
    %4002 = vmatpush1.bf16.xpose.msra.mxu0 %v2840
    %4003 = vmatprep.subr.bf16.mxu0 %v2849
    %4004 = vmatpush1.bf16.xpose.msra.mxu0 %v2848
    %4005 = vmatprep.subr.bf16.mxu0 %v2857
    %4006 = vmatpush1.bf16.xpose.msra.mxu0 %v2856
    %4007 = vmatprep.subr.bf16.mxu0 %v2865
    %4008 = vmatpush1.bf16.xpose.msra.mxu0 %v2864
    %4009 = vmatprep.subr.bf16.mxu0 %v2873
    %4010 = vmatpush1.bf16.xpose.msra.mxu0 %v2872
    %4011 = vmatprep.subr.bf16.mxu0 %v2881
    %4012 = vmatpush1.bf16.xpose.msra.mxu0 %v2880
    %4013 = vmatprep.subr.bf16.mxu0 %v2889
    %4014 = vmatpush1.bf16.xpose.msra.mxu0 %v2888
    %4015 = vmatprep.subr.bf16.mxu0 %v2897
    %4016 = vmatpush1.bf16.xpose.msra.mxu0 %v2896
    %4017 = vmatprep.subr.bf16.mxu0 %v2905
    %4018 = vmatpush1.bf16.xpose.msra.mxu0 %v2904
    %4019 = vmatprep.subr.bf16.mxu0 %v2913
    %4020 = vmatpush1.bf16.xpose.msra.mxu0 %v2912
    %4021 = vmatprep.mubr.bf16.mxu0 %v311
    %4022 = vmatmul.mubr.bf16.gmra.mrb[0].mxu0 %v310
    %v4023 = vpop.f32.mrb[0].mxu0
    %v4024 = vadd.f32 %v3981, %v4023
    %v4025 = vpop.f32.mrb[0].mxu0
    %v4026 = vadd.f32 %v3983, %v4025
    %v4027 = vpop.f32.mrb[0].mxu0
    %v4028 = vadd.f32 %v3985, %v4027
    %v4029 = vpop.f32.mrb[0].mxu0
    %v4030 = vadd.f32 %v3987, %v4029
    %4031 = vdwg.mxu0
    %4032 = vmatprep.subr.bf16.mxu0 %v2795
    %4033 = vmatpush1.bf16.xpose.msra.mxu0 %v2794
    %4034 = vmatprep.subr.bf16.mxu0 %v2803
    %4035 = vmatpush1.bf16.xpose.msra.mxu0 %v2802
    %4036 = vmatprep.subr.bf16.mxu0 %v2811
    %4037 = vmatpush1.bf16.xpose.msra.mxu0 %v2810
    %4038 = vmatprep.subr.bf16.mxu0 %v2819
    %4039 = vmatpush1.bf16.xpose.msra.mxu0 %v2818
    %4040 = vmatprep.subr.bf16.mxu0 %v2827
    %4041 = vmatpush1.bf16.xpose.msra.mxu0 %v2826
    %4042 = vmatprep.subr.bf16.mxu0 %v2835
    %4043 = vmatpush1.bf16.xpose.msra.mxu0 %v2834
    %4044 = vmatprep.subr.bf16.mxu0 %v2843
    %4045 = vmatpush1.bf16.xpose.msra.mxu0 %v2842
    %4046 = vmatprep.subr.bf16.mxu0 %v2851
    %4047 = vmatpush1.bf16.xpose.msra.mxu0 %v2850
    %4048 = vmatprep.subr.bf16.mxu0 %v2859
    %4049 = vmatpush1.bf16.xpose.msra.mxu0 %v2858
    %4050 = vmatprep.subr.bf16.mxu0 %v2867
    %4051 = vmatpush1.bf16.xpose.msra.mxu0 %v2866
    %4052 = vmatprep.subr.bf16.mxu0 %v2875
    %4053 = vmatpush1.bf16.xpose.msra.mxu0 %v2874
    %4054 = vmatprep.subr.bf16.mxu0 %v2883
    %4055 = vmatpush1.bf16.xpose.msra.mxu0 %v2882
    %4056 = vmatprep.subr.bf16.mxu0 %v2891
    %4057 = vmatpush1.bf16.xpose.msra.mxu0 %v2890
    %4058 = vmatprep.subr.bf16.mxu0 %v2899
    %4059 = vmatpush1.bf16.xpose.msra.mxu0 %v2898
    %4060 = vmatprep.subr.bf16.mxu0 %v2907
    %4061 = vmatpush1.bf16.xpose.msra.mxu0 %v2906
    %4062 = vmatprep.subr.bf16.mxu0 %v2915
    %4063 = vmatpush1.bf16.xpose.msra.mxu0 %v2914
    %4064 = vmatprep.mubr.bf16.mxu0 %v313
    %4065 = vmatmul.mubr.bf16.gmra.mrb[0].mxu0 %v312
    %v4066 = vpop.f32.mrb[0].mxu0
    %v4067 = vadd.f32 %v4024, %v4066
    %v4068 = vpop.f32.mrb[0].mxu0
    %v4069 = vadd.f32 %v4026, %v4068
    %v4070 = vpop.f32.mrb[0].mxu0
    %v4071 = vadd.f32 %v4028, %v4070
    %v4072 = vpop.f32.mrb[0].mxu0
    %v4073 = vadd.f32 %v4030, %v4072
    %4074 = vdwg.mxu0
    %4075 = vmatprep.subr.bf16.mxu0 %v2797
    %4076 = vmatpush1.bf16.xpose.msra.mxu0 %v2796
    %4077 = vmatprep.subr.bf16.mxu0 %v2805
    %4078 = vmatpush1.bf16.xpose.msra.mxu0 %v2804
    %4079 = vmatprep.subr.bf16.mxu0 %v2813
    %4080 = vmatpush1.bf16.xpose.msra.mxu0 %v2812
    %4081 = vmatprep.subr.bf16.mxu0 %v2821
    %4082 = vmatpush1.bf16.xpose.msra.mxu0 %v2820
    %4083 = vmatprep.subr.bf16.mxu0 %v2829
    %4084 = vmatpush1.bf16.xpose.msra.mxu0 %v2828
    %4085 = vmatprep.subr.bf16.mxu0 %v2837
    %4086 = vmatpush1.bf16.xpose.msra.mxu0 %v2836
    %4087 = vmatprep.subr.bf16.mxu0 %v2845
    %4088 = vmatpush1.bf16.xpose.msra.mxu0 %v2844
    %4089 = vmatprep.subr.bf16.mxu0 %v2853
    %4090 = vmatpush1.bf16.xpose.msra.mxu0 %v2852
    %4091 = vmatprep.subr.bf16.mxu0 %v2861
    %4092 = vmatpush1.bf16.xpose.msra.mxu0 %v2860
    %4093 = vmatprep.subr.bf16.mxu0 %v2869
    %4094 = vmatpush1.bf16.xpose.msra.mxu0 %v2868
    %4095 = vmatprep.subr.bf16.mxu0 %v2877
    %4096 = vmatpush1.bf16.xpose.msra.mxu0 %v2876
    %4097 = vmatprep.subr.bf16.mxu0 %v2885
    %4098 = vmatpush1.bf16.xpose.msra.mxu0 %v2884
    %4099 = vmatprep.subr.bf16.mxu0 %v2893
    %4100 = vmatpush1.bf16.xpose.msra.mxu0 %v2892
    %4101 = vmatprep.subr.bf16.mxu0 %v2901
    %4102 = vmatpush1.bf16.xpose.msra.mxu0 %v2900
    %4103 = vmatprep.subr.bf16.mxu0 %v2909
    %4104 = vmatpush1.bf16.xpose.msra.mxu0 %v2908
    %4105 = vmatprep.subr.bf16.mxu0 %v2917
    %4106 = vmatpush1.bf16.xpose.msra.mxu0 %v2916
    %4107 = vmatprep.mubr.bf16.mxu0 %v315
    %4108 = vmatmul.mubr.bf16.gmra.mrb[0].mxu0 %v314
    %v4109 = vpop.f32.mrb[0].mxu0
    %v4110 = vadd.f32 %v4067, %v4109
    %v4111 = vpop.f32.mrb[0].mxu0
    %v4112 = vadd.f32 %v4069, %v4111
    %v4113 = vpop.f32.mrb[0].mxu0
    %v4114 = vadd.f32 %v4071, %v4113
    %v4115 = vpop.f32.mrb[0].mxu0
    %v4116 = vadd.f32 %v4073, %v4115
    %4117 = vdwg.mxu0
    %v4118 = vmax.f32 %v3594, 0.0
    %v4119 = vmax.f32 %v3596, 0.0
    %v4120 = vmax.f32 %v3766, 0.0
    %v4121 = vmax.f32 %v3768, 0.0
    %v4122 = vmax.f32 %v3938, 0.0
    %v4123 = vmax.f32 %v3940, 0.0
    %v4124 = vmax.f32 %v4110, 0.0
    %v4125 = vmax.f32 %v4112, 0.0
    %v4126 = vmax.f32 %v3598, 0.0
    %v4127 = vmax.f32 %v3600, 0.0
    %v4128 = vmax.f32 %v3770, 0.0
    %v4129 = vmax.f32 %v3772, 0.0
    %v4130 = vmax.f32 %v3942, 0.0
    %v4131 = vmax.f32 %v3944, 0.0
    %v4132 = vmax.f32 %v4114, 0.0
    %v4133 = vmax.f32 %v4116, 0.0
    %4134 = vst [vmem:[#allocation11] sm:$0xff] %v4118
    %4135 = vst [vmem:[#allocation11 + $0x8] sm:$0xff] %v4119
    %4136 = vst [vmem:[#allocation11 + $0x10] sm:$0xff] %v4120
    %4137 = vst [vmem:[#allocation11 + $0x18] sm:$0xff] %v4121
    %4138 = vst [vmem:[#allocation11 + $0x20] sm:$0xff] %v4122
    %4139 = vst [vmem:[#allocation11 + $0x28] sm:$0xff] %v4123
    %4140 = vst [vmem:[#allocation11 + $0x30] sm:$0xff] %v4124
    %4141 = vst [vmem:[#allocation11 + $0x38] sm:$0xff] %v4125
    %4142 = vst [vmem:[#allocation11 + $0x40] sm:$0xff] %v4126
    %4143 = vst [vmem:[#allocation11 + $0x48] sm:$0xff] %v4127
    %4144 = vst [vmem:[#allocation11 + $0x50] sm:$0xff] %v4128
    %4145 = vst [vmem:[#allocation11 + $0x58] sm:$0xff] %v4129
    %4146 = vst [vmem:[#allocation11 + $0x60] sm:$0xff] %v4130
    %4147 = vst [vmem:[#allocation11 + $0x68] sm:$0xff] %v4131
    %4148 = vst [vmem:[#allocation11 + $0x70] sm:$0xff] %v4132
    %4149 = vst [vmem:[#allocation11 + $0x78] sm:$0xff] %v4133
    // Predicated region
    $region42: #{tpu_custom_call.1} parent=1 // pred_check
      _
    $region43: #{tpu_custom_call.1} parent=1 // pred_check_branch
      %4151 = sbr.rel (0) target = $region45
    $region44: #{tpu_custom_call.1} parent=1 // pred_region
      %s4153 = ssub.s32 2048, 2048
      %4154 = vsyncadd [#allocation4], %s4153
      %s4155 = sshll.u32 [#allocation11], 4
      %s4156 = int_to_ptr.vmem [resolvable:$true] %s4155
      %4161 = dma.vmem_to_hbm [thread:$0]  %s4156, 2048, %s5, [#allocation4], 1024, 1024, 64
    $region45: #{tpu_custom_call.1} parent=1 // pred_fallthru
      _
    // Predicated region
    $region46: #{tpu_custom_call.1} parent=1 // pred_check
      _
    $region47: #{tpu_custom_call.1} parent=1 // pred_check_branch
      %4163 = sbr.rel (0) target = $region49
    $region48: #{tpu_custom_call.1} parent=1 // pred_region
      %4164 = dma.done [#allocation4], 2048
    $region49: #{tpu_custom_call.1} parent=1 // pred_fallthru
      _
    %4165 = vsyncpa [#allocation3], 1
    %4166 = vsyncpa [#allocation6], 1
    %4167 = vsyncpa [#allocation9], 1
    %4168 = vsyncpa [#allocation4], 1

</llo_original>
